<compile_context>
chip_gen: v5e
topology: v5e:2x2
jax: 0.10.0
libtpu: 0.0.40
codegen_flags: <defaults>
</compile_context>

<pallas_src>
import functools

import jax
import jax.numpy as jnp
from jax import lax
from jax.experimental import pallas as pl
from jax.experimental.pallas import tpu as pltpu

EPS = 1e-5          # nn.BatchNorm3d default eps
NEG_SLOPE = 0.01    # F.leaky_relu default negative_slope


def _round_up(x, m):
    return (x + m - 1) // m * m


def _pick_tile_d(nd, h, target_rows=512):
    """Largest divisor tD of nd with tD*h <= target_rows (prefer >=2 tiles)."""
    divs = [t for t in range(1, nd + 1) if nd % t == 0]
    ok = [t for t in divs if t * h <= target_rows]
    if not ok:
        return 1
    multi = [t for t in ok if nd // t >= 2]
    return max(multi) if multi else max(ok)


# ---------------------------------------------------------------------------
# Pass 1: conv (3 accumulated matmuls per depth plane) + partial BN stats
# ---------------------------------------------------------------------------
def _conv_stats_kernel(x_ref, w_ref, y_ref, st_ref):
    """x_ref: (tD, H+2, 3*K8) bf16 (the 3 depth taps concatenated on lanes)
       w_ref: (3, 3*K8, Cout*W) bf16 (one banded slab per kh tap)
       y_ref: (tD, H, Cout*W) f32 un-normalized conv output
       st_ref: (1, 2, Cout*W) f32 per-tile partial sum / sum-of-squares."""
    td, h, cw = y_ref.shape

    # Weight slabs are VMEM-resident (constant index map); hoist the loads.
    w0 = w_ref[0]
    w1 = w_ref[1]
    w2 = w_ref[2]

    def body(d, carry):
        s0, s1 = carry
        plane = x_ref[d]                               # (H+2, 3*K8) bf16
        acc = jnp.dot(plane[0:h, :], w0, preferred_element_type=jnp.float32)
        acc = acc + jnp.dot(plane[1:h + 1, :], w1,
                            preferred_element_type=jnp.float32)
        acc = acc + jnp.dot(plane[2:h + 2, :], w2,
                            preferred_element_type=jnp.float32)
        y_ref[d] = acc                                 # un-normalized output
        s0 = s0 + jnp.sum(acc, axis=0, keepdims=True)
        s1 = s1 + jnp.sum(acc * acc, axis=0, keepdims=True)
        return s0, s1

    s0, s1 = lax.fori_loop(
        0, td, body,
        (jnp.zeros((1, cw), jnp.float32), jnp.zeros((1, cw), jnp.float32)),
        unroll=(td <= 32))
    st_ref[0] = jnp.concatenate([s0, s1], axis=0)      # (2, Cout*W)


# ---------------------------------------------------------------------------
# Pass 2: BatchNorm normalize + leaky_relu (+ residual)
# ---------------------------------------------------------------------------
def _bn_act_kernel(*refs, has_residual):
    if has_residual:
        y_ref, scale_ref, shift_ref, res_ref, o_ref = refs
    else:
        y_ref, scale_ref, shift_ref, o_ref = refs
        res_ref = None
    z = y_ref[...] * scale_ref[...] + shift_ref[...]
    a = jnp.where(z > 0, z, NEG_SLOPE * z)
    if has_residual:
        a = res_ref[...] + a
    o_ref[...] = a.astype(o_ref.dtype)


def conv_bn_lrelu(x5, weight, gamma, beta, residual=None):
    """One layer on the canonical activation layout.

    x5:       (N, D, H, C_in, W) float32
    weight:   (C_out, C_in, 3, 3, 3)   (PyTorch Conv3d layout)
    gamma/beta: (C_out,)               BatchNorm affine params
    residual: optional (N, D, H, C_out, W) float32
    returns   (N, D, H, C_out, W) float32
    """
    N, D, H, Cin, W = x5.shape
    Cout = weight.shape[0]
    CW = Cout * W
    K = Cin * (W + 2)
    K8 = _round_up(K, 8)             # pad contraction segment to sublane mult
    KC = 3 * K8                      # 3 depth taps concatenated
    ND = N * D
    tD = _pick_tile_d(ND, H)
    nT = ND // tD

    # ---- glue: pad (D,H,W) once, build ONE concatenated bf16 plane stack ----
    xp = jnp.pad(x5, ((0, 0), (1, 1), (1, 1), (0, 0), (1, 1)))
    planes = []
    for kd in range(3):
        xk = xp[:, kd:kd + D].reshape(ND, H + 2, K)
        if K8 > K:
            xk = jnp.pad(xk, ((0, 0), (0, 0), (0, K8 - K)))
        planes.append(xk)
    xcat = jnp.concatenate(planes, axis=-1).astype(jnp.bfloat16)  # (ND,H+2,KC)

    # ---- glue: conv weights -> 3 banded (KC, Cout*W) matmul operands -------
    # slab_kh[(kd*K8 + ci*(W+2) + w_in), (co*W + w_out)]
    #   = weight[co, ci, kd, kh, w_in - w_out]   (nonzero for w_in-w_out in 0..2)
    eye = jnp.stack(
        [jnp.eye(W + 2, W, k=-kw, dtype=jnp.float32) for kw in range(3)])
    slabs = []
    for kh in range(3):
        blocks = []
        for kd in range(3):
            wk = weight[:, :, kd, kh, :].astype(jnp.float32)   # (Cout, Cin, 3)
            m = jnp.einsum('ock,kiw->ciow', wk, eye)           # (Cin,W+2,Cout,W)
            m = m.reshape(K, CW)
            if K8 > K:
                m = jnp.pad(m, ((0, K8 - K), (0, 0)))
            blocks.append(m)
        slabs.append(jnp.concatenate(blocks, axis=0))          # (KC, CW)
    wstack = jnp.stack(slabs, axis=0).astype(jnp.bfloat16)     # (3, KC, CW)

    # ---- pass 1: conv + per-column partial stats (tiled, pipelined) --------
    y, stats = pl.pallas_call(
        _conv_stats_kernel,
        out_shape=(jax.ShapeDtypeStruct((ND, H, CW), jnp.float32),
                   jax.ShapeDtypeStruct((nT, 2, CW), jnp.float32)),
        grid=(nT,),
        in_specs=[pl.BlockSpec((tD, H + 2, KC), lambda i: (i, 0, 0)),
                  pl.BlockSpec((3, KC, CW), lambda i: (0, 0, 0))],
        out_specs=(pl.BlockSpec((tD, H, CW), lambda i: (i, 0, 0)),
                   pl.BlockSpec((1, 2, CW), lambda i: (i, 0, 0))),
        compiler_params=pltpu.CompilerParams(
            dimension_semantics=("parallel",)),
    )(xcat, wstack)

    # ---- glue: finalize BatchNorm batch statistics (training mode) ---------
    sums = jnp.sum(stats, axis=0)                       # (2, CW)
    cnt = float(N * D * H * W)
    sum_c = jnp.sum(sums[0].reshape(Cout, W), axis=1)
    sq_c = jnp.sum(sums[1].reshape(Cout, W), axis=1)
    mean_c = sum_c / cnt
    # NOTE: E[y^2] - mean^2 in f32; activations here are ~unit scale so
    # cancellation is benign.
    var_c = jnp.maximum(sq_c / cnt - mean_c * mean_c, 0.0)     # biased var
    inv_c = gamma.astype(jnp.float32) * lax.rsqrt(var_c + EPS)
    scale_col = jnp.broadcast_to(inv_c[:, None], (Cout, W)).reshape(1, 1, CW)
    shift_col = jnp.broadcast_to(
        (beta.astype(jnp.float32) - mean_c * inv_c)[:, None],
        (Cout, W)).reshape(1, 1, CW)

    # ---- pass 2: normalize + leaky_relu (+ residual), tiled ----------------
    has_res = residual is not None
    inputs = [y, scale_col, shift_col]
    in_specs = [pl.BlockSpec((tD, H, CW), lambda i: (i, 0, 0)),
                pl.BlockSpec((1, 1, CW), lambda i: (0, 0, 0)),
                pl.BlockSpec((1, 1, CW), lambda i: (0, 0, 0))]
    if has_res:
        inputs.append(residual.reshape(ND, H, CW))
        in_specs.append(pl.BlockSpec((tD, H, CW), lambda i: (i, 0, 0)))

    out = pl.pallas_call(
        functools.partial(_bn_act_kernel, has_residual=has_res),
        out_shape=jax.ShapeDtypeStruct((ND, H, CW), jnp.float32),
        grid=(nT,),
        in_specs=in_specs,
        out_specs=pl.BlockSpec((tD, H, CW), lambda i: (i, 0, 0)),
        compiler_params=pltpu.CompilerParams(
            dimension_semantics=("parallel",)),
    )(*inputs)

    return out.reshape(N, D, H, Cout, W)


def match_predictor_forward(x, params):
    """x: (N, C, D, H, W) float32 (NCDHW like PyTorch).  Returns NCDHW."""
    x5 = jnp.transpose(x, (0, 2, 3, 1, 4))              # (N, D, H, C, W)

    w0, _, g0, b0 = params[0]   # conv bias ignored: cancelled by BN mean-sub
    a0 = conv_bn_lrelu(x5, w0, g0, b0)                  # lrelu(bn0(conv0(x)))
    w1, _, g1, b1 = params[1]
    a1 = conv_bn_lrelu(a0, w1, g1, b1, residual=a0)     # x + lrelu(bn1(conv1))
    w2, _, g2, b2 = params[2]
    a2 = conv_bn_lrelu(a1, w2, g2, b2, residual=a1)
    w3, _, g3, b3 = params[3]
    a3 = conv_bn_lrelu(a2, w3, g3, b3, residual=a2)
    w4, _, g4, b4 = params[4]
    a4 = conv_bn_lrelu(a3, w4, g4, b4)                  # lrelu(bn4(conv4(x)))

    return jnp.transpose(a4, (0, 3, 1, 2, 4))           # (N, C_out, D, H, W)


def init_params(key, n_rotations):
    """Deterministic synthetic params matching MatchPredictor.__init__ shapes."""
    c_in = [n_rotations] + [n_rotations + 1] * 4
    c_out = n_rotations + 1
    params = []
    for layer in range(5):
        key, kw, kb = jax.random.split(key, 3)
        w = 0.1 * jax.random.normal(kw, (c_out, c_in[layer], 3, 3, 3), jnp.float32)
        b = 0.1 * jax.random.normal(kb, (c_out,), jnp.float32)
        gamma = jnp.ones((c_out,), jnp.float32)
        beta = jnp.zeros((c_out,), jnp.float32)
        params.append((w, b, gamma, beta))
    return params


def _reference_forward(x, params):
    """Pure-JAX f32 reference (includes the conv bias; BN cancels it)."""
    def layer(h, p):
        w, b, gamma, beta = p
        y = lax.conv_general_dilated(
            h, w, (1, 1, 1), 'SAME',
            dimension_numbers=('NCDHW', 'OIDHW', 'NCDHW'))
        y = y + b[None, :, None, None, None]
        mean = jnp.mean(y, axis=(0, 2, 3, 4), keepdims=True)
        var = jnp.mean((y - mean) ** 2, axis=(0, 2, 3, 4), keepdims=True)
        z = (y - mean) * lax.rsqrt(var + EPS) * gamma[None, :, None, None, None] \
            + beta[None, :, None, None, None]
        return jnp.where(z > 0, z, NEG_SLOPE * z)

    h0 = layer(x, params[0])
    h1 = h0 + layer(h0, params[1])
    h2 = h1 + layer(h1, params[2])
    h3 = h2 + layer(h2, params[3])
    return layer(h3, params[4])


if __name__ == "__main__":
    n_rotations = 4
    N, D, H, W = 2, 8, 8, 8
    key = jax.random.PRNGKey(0)
    key, kx = jax.random.split(key)
    x = jax.random.normal(kx, (N, n_rotations, D, H, W), jnp.float32)

    params = init_params(key, n_rotations)

    out = jax.jit(match_predictor_forward)(x, params)
    out = jax.block_until_ready(out)

    assert out.shape == (N, n_rotations + 1, D, H, W), out.shape
    assert bool(jnp.all(jnp.isfinite(out)))

    # Loose sanity check against a pure-JAX f32 reference (kernel uses bf16
    # matmul operands, so allow a generous tolerance).
    ref = _reference_forward(x, params)
    err = float(jnp.max(jnp.abs(out - ref)))
    tol = 0.1 * (float(jnp.max(jnp.abs(ref))) + 1.0)
    assert err < tol, (err, tol)

    print("KERNEL_OK")
</pallas_src>

<mosaic_0001>
module attributes {stable_mosaic.version = 11 : i64} {
  func.func @_conv_stats_kernel(%arg0: i32, %arg1: memref<8x10x120xbf16, #tpu.memory_space<vmem>>, %arg2: memref<3x120x40xbf16, #tpu.memory_space<vmem>>, %arg3: memref<8x8x40xf32, #tpu.memory_space<vmem>>, %arg4: memref<1x2x40xf32, #tpu.memory_space<vmem>>) attributes {dimension_semantics = [#tpu.dimension_semantics<parallel>], iteration_bounds = array<i64: 2>, scalar_prefetch = 0 : i64, scratch_operands = 0 : i64, tpu.core_type = #tpu.core_type<tc>, window_params = [{transform_indices = @transform_0, window_bounds = array<i64: 8, 10, 120>}, {pipeline_mode = #tpu.pipeline_mode<synchronous>, transform_indices = @transform_1, window_bounds = array<i64: 3, 120, 40>}, {transform_indices = @transform_2, window_bounds = array<i64: 8, 8, 40>}, {transform_indices = @transform_3, window_bounds = array<i64: 1, 2, 40>}]} {
    %c0 = arith.constant 0 : index
    %c0_0 = arith.constant 0 : index
    %c0_1 = arith.constant 0 : index
    %0 = vector.load %arg2[%c0, %c0_0, %c0_1] : memref<3x120x40xbf16, #tpu.memory_space<vmem>>, vector<1x120x40xbf16>
    %1 = vector.shape_cast %0 : vector<1x120x40xbf16> to vector<120x40xbf16>
    %c1 = arith.constant 1 : index
    %c0_2 = arith.constant 0 : index
    %c0_3 = arith.constant 0 : index
    %2 = vector.load %arg2[%c1, %c0_2, %c0_3] : memref<3x120x40xbf16, #tpu.memory_space<vmem>>, vector<1x120x40xbf16>
    %3 = vector.shape_cast %2 : vector<1x120x40xbf16> to vector<120x40xbf16>
    %c2 = arith.constant 2 : index
    %c0_4 = arith.constant 0 : index
    %c0_5 = arith.constant 0 : index
    %4 = vector.load %arg2[%c2, %c0_4, %c0_5] : memref<3x120x40xbf16, #tpu.memory_space<vmem>>, vector<1x120x40xbf16>
    %5 = vector.shape_cast %4 : vector<1x120x40xbf16> to vector<120x40xbf16>
    %cst = arith.constant 0.000000e+00 : f32
    %6 = vector.broadcast %cst : f32 to vector<1x40xf32>
    %cst_6 = arith.constant 0.000000e+00 : f32
    %7 = vector.broadcast %cst_6 : f32 to vector<1x40xf32>
    %c0_i32 = arith.constant 0 : i32
    %8 = arith.index_cast %c0_i32 : i32 to index
    %c0_7 = arith.constant 0 : index
    %c0_8 = arith.constant 0 : index
    %9 = vector.load %arg1[%8, %c0_7, %c0_8] : memref<8x10x120xbf16, #tpu.memory_space<vmem>>, vector<1x10x120xbf16>
    %10 = vector.shape_cast %9 : vector<1x10x120xbf16> to vector<10x120xbf16>
    %11 = vector.extract_strided_slice %10 {offsets = [0, 0], sizes = [8, 120], strides = [1, 1]} : vector<10x120xbf16> to vector<8x120xbf16>
    %cst_9 = arith.constant dense<0.000000e+00> : vector<8x40xf32>
    %12 = tpu.matmul %11, %1, %cst_9 {dimension_numbers = #tpu.dot_dimension_numbers<[1], [0], [0], [1], [0, 0, 1, 1], [], []>} : vector<8x120xbf16>, vector<120x40xbf16>, vector<8x40xf32> -> vector<8x40xf32>
    %13 = vector.extract_strided_slice %10 {offsets = [1, 0], sizes = [8, 120], strides = [1, 1]} : vector<10x120xbf16> to vector<8x120xbf16>
    %cst_10 = arith.constant dense<0.000000e+00> : vector<8x40xf32>
    %14 = tpu.matmul %13, %3, %cst_10 {dimension_numbers = #tpu.dot_dimension_numbers<[1], [0], [0], [1], [0, 0, 1, 1], [], []>} : vector<8x120xbf16>, vector<120x40xbf16>, vector<8x40xf32> -> vector<8x40xf32>
    %15 = arith.addf %12, %14 : vector<8x40xf32>
    %16 = vector.extract_strided_slice %10 {offsets = [2, 0], sizes = [8, 120], strides = [1, 1]} : vector<10x120xbf16> to vector<8x120xbf16>
    %cst_11 = arith.constant dense<0.000000e+00> : vector<8x40xf32>
    %17 = tpu.matmul %16, %5, %cst_11 {dimension_numbers = #tpu.dot_dimension_numbers<[1], [0], [0], [1], [0, 0, 1, 1], [], []>} : vector<8x120xbf16>, vector<120x40xbf16>, vector<8x40xf32> -> vector<8x40xf32>
    %18 = arith.addf %15, %17 : vector<8x40xf32>
    %19 = arith.index_cast %c0_i32 : i32 to index
    %c0_12 = arith.constant 0 : index
    %c0_13 = arith.constant 0 : index
    %20 = vector.load %arg3[%19, %c0_12, %c0_13] : memref<8x8x40xf32, #tpu.memory_space<vmem>>, vector<1x8x40xf32>
    %21 = vector.shape_cast %20 : vector<1x8x40xf32> to vector<8x40xf32>
    %22 = vector.shape_cast %18 : vector<8x40xf32> to vector<1x8x40xf32>
    tpu.vector_store %arg3[%19, %c0_12, %c0_13], %22 {strides = array<i32>} : memref<8x8x40xf32, #tpu.memory_space<vmem>>, vector<1x8x40xf32>,
    %cst_14 = arith.constant dense<0.000000e+00> : vector<40xf32>
    %23 = vector.multi_reduction <add>, %18, %cst_14 [0] : vector<8x40xf32> to vector<40xf32>
    %24 = vector.shape_cast %23 : vector<40xf32> to vector<1x40xf32>
    %25 = arith.addf %6, %24 : vector<1x40xf32>
    %26 = arith.mulf %18, %18 : vector<8x40xf32>
    %cst_15 = arith.constant dense<0.000000e+00> : vector<40xf32>
    %27 = vector.multi_reduction <add>, %26, %cst_15 [0] : vector<8x40xf32> to vector<40xf32>
    %28 = vector.shape_cast %27 : vector<40xf32> to vector<1x40xf32>
    %29 = arith.addf %7, %28 : vector<1x40xf32>
    %c1_i32 = arith.constant 1 : i32
    %30 = arith.index_cast %c1_i32 : i32 to index
    %c0_16 = arith.constant 0 : index
    %c0_17 = arith.constant 0 : index
    %31 = vector.load %arg1[%30, %c0_16, %c0_17] : memref<8x10x120xbf16, #tpu.memory_space<vmem>>, vector<1x10x120xbf16>
    %32 = vector.shape_cast %31 : vector<1x10x120xbf16> to vector<10x120xbf16>
    %33 = vector.extract_strided_slice %32 {offsets = [0, 0], sizes = [8, 120], strides = [1, 1]} : vector<10x120xbf16> to vector<8x120xbf16>
    %cst_18 = arith.constant dense<0.000000e+00> : vector<8x40xf32>
    %34 = tpu.matmul %33, %1, %cst_18 {dimension_numbers = #tpu.dot_dimension_numbers<[1], [0], [0], [1], [0, 0, 1, 1], [], []>} : vector<8x120xbf16>, vector<120x40xbf16>, vector<8x40xf32> -> vector<8x40xf32>
    %35 = vector.extract_strided_slice %32 {offsets = [1, 0], sizes = [8, 120], strides = [1, 1]} : vector<10x120xbf16> to vector<8x120xbf16>
    %cst_19 = arith.constant dense<0.000000e+00> : vector<8x40xf32>
    %36 = tpu.matmul %35, %3, %cst_19 {dimension_numbers = #tpu.dot_dimension_numbers<[1], [0], [0], [1], [0, 0, 1, 1], [], []>} : vector<8x120xbf16>, vector<120x40xbf16>, vector<8x40xf32> -> vector<8x40xf32>
    %37 = arith.addf %34, %36 : vector<8x40xf32>
    %38 = vector.extract_strided_slice %32 {offsets = [2, 0], sizes = [8, 120], strides = [1, 1]} : vector<10x120xbf16> to vector<8x120xbf16>
    %cst_20 = arith.constant dense<0.000000e+00> : vector<8x40xf32>
    %39 = tpu.matmul %38, %5, %cst_20 {dimension_numbers = #tpu.dot_dimension_numbers<[1], [0], [0], [1], [0, 0, 1, 1], [], []>} : vector<8x120xbf16>, vector<120x40xbf16>, vector<8x40xf32> -> vector<8x40xf32>
    %40 = arith.addf %37, %39 : vector<8x40xf32>
    %41 = arith.index_cast %c1_i32 : i32 to index
    %c0_21 = arith.constant 0 : index
    %c0_22 = arith.constant 0 : index
    %42 = vector.load %arg3[%41, %c0_21, %c0_22] : memref<8x8x40xf32, #tpu.memory_space<vmem>>, vector<1x8x40xf32>
    %43 = vector.shape_cast %42 : vector<1x8x40xf32> to vector<8x40xf32>
    %44 = vector.shape_cast %40 : vector<8x40xf32> to vector<1x8x40xf32>
    tpu.vector_store %arg3[%41, %c0_21, %c0_22], %44 {strides = array<i32>} : memref<8x8x40xf32, #tpu.memory_space<vmem>>, vector<1x8x40xf32>,
    %cst_23 = arith.constant dense<0.000000e+00> : vector<40xf32>
    %45 = vector.multi_reduction <add>, %40, %cst_23 [0] : vector<8x40xf32> to vector<40xf32>
    %46 = vector.shape_cast %45 : vector<40xf32> to vector<1x40xf32>
    %47 = arith.addf %25, %46 : vector<1x40xf32>
    %48 = arith.mulf %40, %40 : vector<8x40xf32>
    %cst_24 = arith.constant dense<0.000000e+00> : vector<40xf32>
    %49 = vector.multi_reduction <add>, %48, %cst_24 [0] : vector<8x40xf32> to vector<40xf32>
    %50 = vector.shape_cast %49 : vector<40xf32> to vector<1x40xf32>
    %51 = arith.addf %29, %50 : vector<1x40xf32>
    %c2_i32 = arith.constant 2 : i32
    %52 = arith.index_cast %c2_i32 : i32 to index
    %c0_25 = arith.constant 0 : index
    %c0_26 = arith.constant 0 : index
    %53 = vector.load %arg1[%52, %c0_25, %c0_26] : memref<8x10x120xbf16, #tpu.memory_space<vmem>>, vector<1x10x120xbf16>
    %54 = vector.shape_cast %53 : vector<1x10x120xbf16> to vector<10x120xbf16>
    %55 = vector.extract_strided_slice %54 {offsets = [0, 0], sizes = [8, 120], strides = [1, 1]} : vector<10x120xbf16> to vector<8x120xbf16>
    %cst_27 = arith.constant dense<0.000000e+00> : vector<8x40xf32>
    %56 = tpu.matmul %55, %1, %cst_27 {dimension_numbers = #tpu.dot_dimension_numbers<[1], [0], [0], [1], [0, 0, 1, 1], [], []>} : vector<8x120xbf16>, vector<120x40xbf16>, vector<8x40xf32> -> vector<8x40xf32>
    %57 = vector.extract_strided_slice %54 {offsets = [1, 0], sizes = [8, 120], strides = [1, 1]} : vector<10x120xbf16> to vector<8x120xbf16>
    %cst_28 = arith.constant dense<0.000000e+00> : vector<8x40xf32>
    %58 = tpu.matmul %57, %3, %cst_28 {dimension_numbers = #tpu.dot_dimension_numbers<[1], [0], [0], [1], [0, 0, 1, 1], [], []>} : vector<8x120xbf16>, vector<120x40xbf16>, vector<8x40xf32> -> vector<8x40xf32>
    %59 = arith.addf %56, %58 : vector<8x40xf32>
    %60 = vector.extract_strided_slice %54 {offsets = [2, 0], sizes = [8, 120], strides = [1, 1]} : vector<10x120xbf16> to vector<8x120xbf16>
    %cst_29 = arith.constant dense<0.000000e+00> : vector<8x40xf32>
    %61 = tpu.matmul %60, %5, %cst_29 {dimension_numbers = #tpu.dot_dimension_numbers<[1], [0], [0], [1], [0, 0, 1, 1], [], []>} : vector<8x120xbf16>, vector<120x40xbf16>, vector<8x40xf32> -> vector<8x40xf32>
    %62 = arith.addf %59, %61 : vector<8x40xf32>
    %63 = arith.index_cast %c2_i32 : i32 to index
    %c0_30 = arith.constant 0 : index
    %c0_31 = arith.constant 0 : index
    %64 = vector.load %arg3[%63, %c0_30, %c0_31] : memref<8x8x40xf32, #tpu.memory_space<vmem>>, vector<1x8x40xf32>
    %65 = vector.shape_cast %64 : vector<1x8x40xf32> to vector<8x40xf32>
    %66 = vector.shape_cast %62 : vector<8x40xf32> to vector<1x8x40xf32>
    tpu.vector_store %arg3[%63, %c0_30, %c0_31], %66 {strides = array<i32>} : memref<8x8x40xf32, #tpu.memory_space<vmem>>, vector<1x8x40xf32>,
    %cst_32 = arith.constant dense<0.000000e+00> : vector<40xf32>
    %67 = vector.multi_reduction <add>, %62, %cst_32 [0] : vector<8x40xf32> to vector<40xf32>
    %68 = vector.shape_cast %67 : vector<40xf32> to vector<1x40xf32>
    %69 = arith.addf %47, %68 : vector<1x40xf32>
    %70 = arith.mulf %62, %62 : vector<8x40xf32>
    %cst_33 = arith.constant dense<0.000000e+00> : vector<40xf32>
    %71 = vector.multi_reduction <add>, %70, %cst_33 [0] : vector<8x40xf32> to vector<40xf32>
    %72 = vector.shape_cast %71 : vector<40xf32> to vector<1x40xf32>
    %73 = arith.addf %51, %72 : vector<1x40xf32>
    %c3_i32 = arith.constant 3 : i32
    %74 = arith.index_cast %c3_i32 : i32 to index
    %c0_34 = arith.constant 0 : index
    %c0_35 = arith.constant 0 : index
    %75 = vector.load %arg1[%74, %c0_34, %c0_35] : memref<8x10x120xbf16, #tpu.memory_space<vmem>>, vector<1x10x120xbf16>
    %76 = vector.shape_cast %75 : vector<1x10x120xbf16> to vector<10x120xbf16>
    %77 = vector.extract_strided_slice %76 {offsets = [0, 0], sizes = [8, 120], strides = [1, 1]} : vector<10x120xbf16> to vector<8x120xbf16>
    %cst_36 = arith.constant dense<0.000000e+00> : vector<8x40xf32>
    %78 = tpu.matmul %77, %1, %cst_36 {dimension_numbers = #tpu.dot_dimension_numbers<[1], [0], [0], [1], [0, 0, 1, 1], [], []>} : vector<8x120xbf16>, vector<120x40xbf16>, vector<8x40xf32> -> vector<8x40xf32>
    %79 = vector.extract_strided_slice %76 {offsets = [1, 0], sizes = [8, 120], strides = [1, 1]} : vector<10x120xbf16> to vector<8x120xbf16>
    %cst_37 = arith.constant dense<0.000000e+00> : vector<8x40xf32>
    %80 = tpu.matmul %79, %3, %cst_37 {dimension_numbers = #tpu.dot_dimension_numbers<[1], [0], [0], [1], [0, 0, 1, 1], [], []>} : vector<8x120xbf16>, vector<120x40xbf16>, vector<8x40xf32> -> vector<8x40xf32>
    %81 = arith.addf %78, %80 : vector<8x40xf32>
    %82 = vector.extract_strided_slice %76 {offsets = [2, 0], sizes = [8, 120], strides = [1, 1]} : vector<10x120xbf16> to vector<8x120xbf16>
    %cst_38 = arith.constant dense<0.000000e+00> : vector<8x40xf32>
    %83 = tpu.matmul %82, %5, %cst_38 {dimension_numbers = #tpu.dot_dimension_numbers<[1], [0], [0], [1], [0, 0, 1, 1], [], []>} : vector<8x120xbf16>, vector<120x40xbf16>, vector<8x40xf32> -> vector<8x40xf32>
    %84 = arith.addf %81, %83 : vector<8x40xf32>
    %85 = arith.index_cast %c3_i32 : i32 to index
    %c0_39 = arith.constant 0 : index
    %c0_40 = arith.constant 0 : index
    %86 = vector.load %arg3[%85, %c0_39, %c0_40] : memref<8x8x40xf32, #tpu.memory_space<vmem>>, vector<1x8x40xf32>
    %87 = vector.shape_cast %86 : vector<1x8x40xf32> to vector<8x40xf32>
    %88 = vector.shape_cast %84 : vector<8x40xf32> to vector<1x8x40xf32>
    tpu.vector_store %arg3[%85, %c0_39, %c0_40], %88 {strides = array<i32>} : memref<8x8x40xf32, #tpu.memory_space<vmem>>, vector<1x8x40xf32>,
    %cst_41 = arith.constant dense<0.000000e+00> : vector<40xf32>
    %89 = vector.multi_reduction <add>, %84, %cst_41 [0] : vector<8x40xf32> to vector<40xf32>
    %90 = vector.shape_cast %89 : vector<40xf32> to vector<1x40xf32>
    %91 = arith.addf %69, %90 : vector<1x40xf32>
    %92 = arith.mulf %84, %84 : vector<8x40xf32>
    %cst_42 = arith.constant dense<0.000000e+00> : vector<40xf32>
    %93 = vector.multi_reduction <add>, %92, %cst_42 [0] : vector<8x40xf32> to vector<40xf32>
    %94 = vector.shape_cast %93 : vector<40xf32> to vector<1x40xf32>
    %95 = arith.addf %73, %94 : vector<1x40xf32>
    %c4_i32 = arith.constant 4 : i32
    %96 = arith.index_cast %c4_i32 : i32 to index
    %c0_43 = arith.constant 0 : index
    %c0_44 = arith.constant 0 : index
    %97 = vector.load %arg1[%96, %c0_43, %c0_44] : memref<8x10x120xbf16, #tpu.memory_space<vmem>>, vector<1x10x120xbf16>
    %98 = vector.shape_cast %97 : vector<1x10x120xbf16> to vector<10x120xbf16>
    %99 = vector.extract_strided_slice %98 {offsets = [0, 0], sizes = [8, 120], strides = [1, 1]} : vector<10x120xbf16> to vector<8x120xbf16>
    %cst_45 = arith.constant dense<0.000000e+00> : vector<8x40xf32>
    %100 = tpu.matmul %99, %1, %cst_45 {dimension_numbers = #tpu.dot_dimension_numbers<[1], [0], [0], [1], [0, 0, 1, 1], [], []>} : vector<8x120xbf16>, vector<120x40xbf16>, vector<8x40xf32> -> vector<8x40xf32>
    %101 = vector.extract_strided_slice %98 {offsets = [1, 0], sizes = [8, 120], strides = [1, 1]} : vector<10x120xbf16> to vector<8x120xbf16>
    %cst_46 = arith.constant dense<0.000000e+00> : vector<8x40xf32>
    %102 = tpu.matmul %101, %3, %cst_46 {dimension_numbers = #tpu.dot_dimension_numbers<[1], [0], [0], [1], [0, 0, 1, 1], [], []>} : vector<8x120xbf16>, vector<120x40xbf16>, vector<8x40xf32> -> vector<8x40xf32>
    %103 = arith.addf %100, %102 : vector<8x40xf32>
    %104 = vector.extract_strided_slice %98 {offsets = [2, 0], sizes = [8, 120], strides = [1, 1]} : vector<10x120xbf16> to vector<8x120xbf16>
    %cst_47 = arith.constant dense<0.000000e+00> : vector<8x40xf32>
    %105 = tpu.matmul %104, %5, %cst_47 {dimension_numbers = #tpu.dot_dimension_numbers<[1], [0], [0], [1], [0, 0, 1, 1], [], []>} : vector<8x120xbf16>, vector<120x40xbf16>, vector<8x40xf32> -> vector<8x40xf32>
    %106 = arith.addf %103, %105 : vector<8x40xf32>
    %107 = arith.index_cast %c4_i32 : i32 to index
    %c0_48 = arith.constant 0 : index
    %c0_49 = arith.constant 0 : index
    %108 = vector.load %arg3[%107, %c0_48, %c0_49] : memref<8x8x40xf32, #tpu.memory_space<vmem>>, vector<1x8x40xf32>
    %109 = vector.shape_cast %108 : vector<1x8x40xf32> to vector<8x40xf32>
    %110 = vector.shape_cast %106 : vector<8x40xf32> to vector<1x8x40xf32>
    tpu.vector_store %arg3[%107, %c0_48, %c0_49], %110 {strides = array<i32>} : memref<8x8x40xf32, #tpu.memory_space<vmem>>, vector<1x8x40xf32>,
    %cst_50 = arith.constant dense<0.000000e+00> : vector<40xf32>
    %111 = vector.multi_reduction <add>, %106, %cst_50 [0] : vector<8x40xf32> to vector<40xf32>
    %112 = vector.shape_cast %111 : vector<40xf32> to vector<1x40xf32>
    %113 = arith.addf %91, %112 : vector<1x40xf32>
    %114 = arith.mulf %106, %106 : vector<8x40xf32>
    %cst_51 = arith.constant dense<0.000000e+00> : vector<40xf32>
    %115 = vector.multi_reduction <add>, %114, %cst_51 [0] : vector<8x40xf32> to vector<40xf32>
    %116 = vector.shape_cast %115 : vector<40xf32> to vector<1x40xf32>
    %117 = arith.addf %95, %116 : vector<1x40xf32>
    %c5_i32 = arith.constant 5 : i32
    %118 = arith.index_cast %c5_i32 : i32 to index
    %c0_52 = arith.constant 0 : index
    %c0_53 = arith.constant 0 : index
    %119 = vector.load %arg1[%118, %c0_52, %c0_53] : memref<8x10x120xbf16, #tpu.memory_space<vmem>>, vector<1x10x120xbf16>
    %120 = vector.shape_cast %119 : vector<1x10x120xbf16> to vector<10x120xbf16>
    %121 = vector.extract_strided_slice %120 {offsets = [0, 0], sizes = [8, 120], strides = [1, 1]} : vector<10x120xbf16> to vector<8x120xbf16>
    %cst_54 = arith.constant dense<0.000000e+00> : vector<8x40xf32>
    %122 = tpu.matmul %121, %1, %cst_54 {dimension_numbers = #tpu.dot_dimension_numbers<[1], [0], [0], [1], [0, 0, 1, 1], [], []>} : vector<8x120xbf16>, vector<120x40xbf16>, vector<8x40xf32> -> vector<8x40xf32>
    %123 = vector.extract_strided_slice %120 {offsets = [1, 0], sizes = [8, 120], strides = [1, 1]} : vector<10x120xbf16> to vector<8x120xbf16>
    %cst_55 = arith.constant dense<0.000000e+00> : vector<8x40xf32>
    %124 = tpu.matmul %123, %3, %cst_55 {dimension_numbers = #tpu.dot_dimension_numbers<[1], [0], [0], [1], [0, 0, 1, 1], [], []>} : vector<8x120xbf16>, vector<120x40xbf16>, vector<8x40xf32> -> vector<8x40xf32>
    %125 = arith.addf %122, %124 : vector<8x40xf32>
    %126 = vector.extract_strided_slice %120 {offsets = [2, 0], sizes = [8, 120], strides = [1, 1]} : vector<10x120xbf16> to vector<8x120xbf16>
    %cst_56 = arith.constant dense<0.000000e+00> : vector<8x40xf32>
    %127 = tpu.matmul %126, %5, %cst_56 {dimension_numbers = #tpu.dot_dimension_numbers<[1], [0], [0], [1], [0, 0, 1, 1], [], []>} : vector<8x120xbf16>, vector<120x40xbf16>, vector<8x40xf32> -> vector<8x40xf32>
    %128 = arith.addf %125, %127 : vector<8x40xf32>
    %129 = arith.index_cast %c5_i32 : i32 to index
    %c0_57 = arith.constant 0 : index
    %c0_58 = arith.constant 0 : index
    %130 = vector.load %arg3[%129, %c0_57, %c0_58] : memref<8x8x40xf32, #tpu.memory_space<vmem>>, vector<1x8x40xf32>
    %131 = vector.shape_cast %130 : vector<1x8x40xf32> to vector<8x40xf32>
    %132 = vector.shape_cast %128 : vector<8x40xf32> to vector<1x8x40xf32>
    tpu.vector_store %arg3[%129, %c0_57, %c0_58], %132 {strides = array<i32>} : memref<8x8x40xf32, #tpu.memory_space<vmem>>, vector<1x8x40xf32>,
    %cst_59 = arith.constant dense<0.000000e+00> : vector<40xf32>
    %133 = vector.multi_reduction <add>, %128, %cst_59 [0] : vector<8x40xf32> to vector<40xf32>
    %134 = vector.shape_cast %133 : vector<40xf32> to vector<1x40xf32>
    %135 = arith.addf %113, %134 : vector<1x40xf32>
    %136 = arith.mulf %128, %128 : vector<8x40xf32>
    %cst_60 = arith.constant dense<0.000000e+00> : vector<40xf32>
    %137 = vector.multi_reduction <add>, %136, %cst_60 [0] : vector<8x40xf32> to vector<40xf32>
    %138 = vector.shape_cast %137 : vector<40xf32> to vector<1x40xf32>
    %139 = arith.addf %117, %138 : vector<1x40xf32>
    %c6_i32 = arith.constant 6 : i32
    %140 = arith.index_cast %c6_i32 : i32 to index
    %c0_61 = arith.constant 0 : index
    %c0_62 = arith.constant 0 : index
    %141 = vector.load %arg1[%140, %c0_61, %c0_62] : memref<8x10x120xbf16, #tpu.memory_space<vmem>>, vector<1x10x120xbf16>
    %142 = vector.shape_cast %141 : vector<1x10x120xbf16> to vector<10x120xbf16>
    %143 = vector.extract_strided_slice %142 {offsets = [0, 0], sizes = [8, 120], strides = [1, 1]} : vector<10x120xbf16> to vector<8x120xbf16>
    %cst_63 = arith.constant dense<0.000000e+00> : vector<8x40xf32>
    %144 = tpu.matmul %143, %1, %cst_63 {dimension_numbers = #tpu.dot_dimension_numbers<[1], [0], [0], [1], [0, 0, 1, 1], [], []>} : vector<8x120xbf16>, vector<120x40xbf16>, vector<8x40xf32> -> vector<8x40xf32>
    %145 = vector.extract_strided_slice %142 {offsets = [1, 0], sizes = [8, 120], strides = [1, 1]} : vector<10x120xbf16> to vector<8x120xbf16>
    %cst_64 = arith.constant dense<0.000000e+00> : vector<8x40xf32>
    %146 = tpu.matmul %145, %3, %cst_64 {dimension_numbers = #tpu.dot_dimension_numbers<[1], [0], [0], [1], [0, 0, 1, 1], [], []>} : vector<8x120xbf16>, vector<120x40xbf16>, vector<8x40xf32> -> vector<8x40xf32>
    %147 = arith.addf %144, %146 : vector<8x40xf32>
    %148 = vector.extract_strided_slice %142 {offsets = [2, 0], sizes = [8, 120], strides = [1, 1]} : vector<10x120xbf16> to vector<8x120xbf16>
    %cst_65 = arith.constant dense<0.000000e+00> : vector<8x40xf32>
    %149 = tpu.matmul %148, %5, %cst_65 {dimension_numbers = #tpu.dot_dimension_numbers<[1], [0], [0], [1], [0, 0, 1, 1], [], []>} : vector<8x120xbf16>, vector<120x40xbf16>, vector<8x40xf32> -> vector<8x40xf32>
    %150 = arith.addf %147, %149 : vector<8x40xf32>
    %151 = arith.index_cast %c6_i32 : i32 to index
    %c0_66 = arith.constant 0 : index
    %c0_67 = arith.constant 0 : index
    %152 = vector.load %arg3[%151, %c0_66, %c0_67] : memref<8x8x40xf32, #tpu.memory_space<vmem>>, vector<1x8x40xf32>
    %153 = vector.shape_cast %152 : vector<1x8x40xf32> to vector<8x40xf32>
    %154 = vector.shape_cast %150 : vector<8x40xf32> to vector<1x8x40xf32>
    tpu.vector_store %arg3[%151, %c0_66, %c0_67], %154 {strides = array<i32>} : memref<8x8x40xf32, #tpu.memory_space<vmem>>, vector<1x8x40xf32>,
    %cst_68 = arith.constant dense<0.000000e+00> : vector<40xf32>
    %155 = vector.multi_reduction <add>, %150, %cst_68 [0] : vector<8x40xf32> to vector<40xf32>
    %156 = vector.shape_cast %155 : vector<40xf32> to vector<1x40xf32>
    %157 = arith.addf %135, %156 : vector<1x40xf32>
    %158 = arith.mulf %150, %150 : vector<8x40xf32>
    %cst_69 = arith.constant dense<0.000000e+00> : vector<40xf32>
    %159 = vector.multi_reduction <add>, %158, %cst_69 [0] : vector<8x40xf32> to vector<40xf32>
    %160 = vector.shape_cast %159 : vector<40xf32> to vector<1x40xf32>
    %161 = arith.addf %139, %160 : vector<1x40xf32>
    %c7_i32 = arith.constant 7 : i32
    %162 = arith.index_cast %c7_i32 : i32 to index
    %c0_70 = arith.constant 0 : index
    %c0_71 = arith.constant 0 : index
    %163 = vector.load %arg1[%162, %c0_70, %c0_71] : memref<8x10x120xbf16, #tpu.memory_space<vmem>>, vector<1x10x120xbf16>
    %164 = vector.shape_cast %163 : vector<1x10x120xbf16> to vector<10x120xbf16>
    %165 = vector.extract_strided_slice %164 {offsets = [0, 0], sizes = [8, 120], strides = [1, 1]} : vector<10x120xbf16> to vector<8x120xbf16>
    %cst_72 = arith.constant dense<0.000000e+00> : vector<8x40xf32>
    %166 = tpu.matmul %165, %1, %cst_72 {dimension_numbers = #tpu.dot_dimension_numbers<[1], [0], [0], [1], [0, 0, 1, 1], [], []>} : vector<8x120xbf16>, vector<120x40xbf16>, vector<8x40xf32> -> vector<8x40xf32>
    %167 = vector.extract_strided_slice %164 {offsets = [1, 0], sizes = [8, 120], strides = [1, 1]} : vector<10x120xbf16> to vector<8x120xbf16>
    %cst_73 = arith.constant dense<0.000000e+00> : vector<8x40xf32>
    %168 = tpu.matmul %167, %3, %cst_73 {dimension_numbers = #tpu.dot_dimension_numbers<[1], [0], [0], [1], [0, 0, 1, 1], [], []>} : vector<8x120xbf16>, vector<120x40xbf16>, vector<8x40xf32> -> vector<8x40xf32>
    %169 = arith.addf %166, %168 : vector<8x40xf32>
    %170 = vector.extract_strided_slice %164 {offsets = [2, 0], sizes = [8, 120], strides = [1, 1]} : vector<10x120xbf16> to vector<8x120xbf16>
    %cst_74 = arith.constant dense<0.000000e+00> : vector<8x40xf32>
    %171 = tpu.matmul %170, %5, %cst_74 {dimension_numbers = #tpu.dot_dimension_numbers<[1], [0], [0], [1], [0, 0, 1, 1], [], []>} : vector<8x120xbf16>, vector<120x40xbf16>, vector<8x40xf32> -> vector<8x40xf32>
    %172 = arith.addf %169, %171 : vector<8x40xf32>
    %173 = arith.index_cast %c7_i32 : i32 to index
    %c0_75 = arith.constant 0 : index
    %c0_76 = arith.constant 0 : index
    %174 = vector.load %arg3[%173, %c0_75, %c0_76] : memref<8x8x40xf32, #tpu.memory_space<vmem>>, vector<1x8x40xf32>
    %175 = vector.shape_cast %174 : vector<1x8x40xf32> to vector<8x40xf32>
    %176 = vector.shape_cast %172 : vector<8x40xf32> to vector<1x8x40xf32>
    tpu.vector_store %arg3[%173, %c0_75, %c0_76], %176 {strides = array<i32>} : memref<8x8x40xf32, #tpu.memory_space<vmem>>, vector<1x8x40xf32>,
    %cst_77 = arith.constant dense<0.000000e+00> : vector<40xf32>
    %177 = vector.multi_reduction <add>, %172, %cst_77 [0] : vector<8x40xf32> to vector<40xf32>
    %178 = vector.shape_cast %177 : vector<40xf32> to vector<1x40xf32>
    %179 = arith.addf %157, %178 : vector<1x40xf32>
    %180 = arith.mulf %172, %172 : vector<8x40xf32>
    %cst_78 = arith.constant dense<0.000000e+00> : vector<40xf32>
    %181 = vector.multi_reduction <add>, %180, %cst_78 [0] : vector<8x40xf32> to vector<40xf32>
    %182 = vector.shape_cast %181 : vector<40xf32> to vector<1x40xf32>
    %183 = arith.addf %161, %182 : vector<1x40xf32>
    %c8_i32 = arith.constant 8 : i32
    %184 = tpu.concatenate %179, %183 in 0 : vector<1x40xf32>, vector<1x40xf32> -> vector<2x40xf32>
    %c0_79 = arith.constant 0 : index
    %c0_80 = arith.constant 0 : index
    %c0_81 = arith.constant 0 : index
    %185 = vector.load %arg4[%c0_79, %c0_80, %c0_81] : memref<1x2x40xf32, #tpu.memory_space<vmem>>, vector<1x2x40xf32>
    %186 = vector.shape_cast %185 : vector<1x2x40xf32> to vector<2x40xf32>
    %187 = vector.shape_cast %184 : vector<2x40xf32> to vector<1x2x40xf32>
    tpu.vector_store %arg4[%c0_79, %c0_80, %c0_81], %187 {strides = array<i32>} : memref<1x2x40xf32, #tpu.memory_space<vmem>>, vector<1x2x40xf32>,
    return
  }
  func.func @transform_0(%arg0: i32) -> (i32, i32, i32) {
    %c0_i32 = arith.constant 0 : i32
    %c0_i32_0 = arith.constant 0 : i32
    %c0_i32_1 = arith.constant 0 : i32
    return %arg0, %c0_i32, %c0_i32_0 : i32, i32, i32
  }
  func.func @transform_1(%arg0: i32) -> (i32, i32, i32) {
    %c0_i32 = arith.constant 0 : i32
    %c0_i32_0 = arith.constant 0 : i32
    %c0_i32_1 = arith.constant 0 : i32
    %c0_i32_2 = arith.constant 0 : i32
    return %c0_i32, %c0_i32_0, %c0_i32_1 : i32, i32, i32
  }
  func.func @transform_2(%arg0: i32) -> (i32, i32, i32) {
    %c0_i32 = arith.constant 0 : i32
    %c0_i32_0 = arith.constant 0 : i32
    %c0_i32_1 = arith.constant 0 : i32
    return %arg0, %c0_i32, %c0_i32_0 : i32, i32, i32
  }
  func.func @transform_3(%arg0: i32) -> (i32, i32, i32) {
    %c0_i32 = arith.constant 0 : i32
    %c0_i32_0 = arith.constant 0 : i32
    %c0_i32_1 = arith.constant 0 : i32
    return %arg0, %c0_i32, %c0_i32_0 : i32, i32, i32
  }
}

module attributes {stable_mosaic.version = 11 : i64} {
  func.func @_bn_act_kernel(%arg0: i32, %arg1: memref<8x8x40xf32, #tpu.memory_space<vmem>>, %arg2: memref<1x1x40xf32, #tpu.memory_space<vmem>>, %arg3: memref<1x1x40xf32, #tpu.memory_space<vmem>>, %arg4: memref<8x8x40xf32, #tpu.memory_space<vmem>>) attributes {dimension_semantics = [#tpu.dimension_semantics<parallel>], iteration_bounds = array<i64: 2>, scalar_prefetch = 0 : i64, scratch_operands = 0 : i64, tpu.core_type = #tpu.core_type<tc>, window_params = [{transform_indices = @transform_0, window_bounds = array<i64: 8, 8, 40>}, {pipeline_mode = #tpu.pipeline_mode<synchronous>, transform_indices = @transform_1, window_bounds = array<i64: 1, 1, 40>}, {pipeline_mode = #tpu.pipeline_mode<synchronous>, transform_indices = @transform_2, window_bounds = array<i64: 1, 1, 40>}, {transform_indices = @transform_3, window_bounds = array<i64: 8, 8, 40>}]} {
    %c0 = arith.constant 0 : index
    %c0_0 = arith.constant 0 : index
    %c0_1 = arith.constant 0 : index
    %0 = vector.load %arg1[%c0, %c0_0, %c0_1] : memref<8x8x40xf32, #tpu.memory_space<vmem>>, vector<8x8x40xf32>
    %c0_2 = arith.constant 0 : index
    %c0_3 = arith.constant 0 : index
    %c0_4 = arith.constant 0 : index
    %1 = vector.load %arg2[%c0_2, %c0_3, %c0_4] : memref<1x1x40xf32, #tpu.memory_space<vmem>>, vector<1x1x40xf32>
    %2 = vector.broadcast %1 : vector<1x1x40xf32> to vector<8x8x40xf32>
    %3 = arith.mulf %0, %2 : vector<8x8x40xf32>
    %c0_5 = arith.constant 0 : index
    %c0_6 = arith.constant 0 : index
    %c0_7 = arith.constant 0 : index
    %4 = vector.load %arg3[%c0_5, %c0_6, %c0_7] : memref<1x1x40xf32, #tpu.memory_space<vmem>>, vector<1x1x40xf32>
    %5 = vector.broadcast %4 : vector<1x1x40xf32> to vector<8x8x40xf32>
    %6 = arith.addf %3, %5 : vector<8x8x40xf32>
    %cst = arith.constant 0.000000e+00 : f32
    %7 = vector.broadcast %cst : f32 to vector<8x8x40xf32>
    %8 = arith.cmpf ogt, %6, %7 : vector<8x8x40xf32>
    %cst_8 = arith.constant 0.00999999977 : f32
    %9 = vector.broadcast %cst_8 : f32 to vector<8x8x40xf32>
    %10 = arith.mulf %9, %6 : vector<8x8x40xf32>
    %11 = arith.select %8, %6, %10 : vector<8x8x40xi1>, vector<8x8x40xf32>
    %c0_9 = arith.constant 0 : index
    %c0_10 = arith.constant 0 : index
    %c0_11 = arith.constant 0 : index
    %12 = vector.load %arg4[%c0_9, %c0_10, %c0_11] : memref<8x8x40xf32, #tpu.memory_space<vmem>>, vector<8x8x40xf32>
    tpu.vector_store %arg4[%c0_9, %c0_10, %c0_11], %11 {strides = array<i32>} : memref<8x8x40xf32, #tpu.memory_space<vmem>>, vector<8x8x40xf32>,
    return
  }
  func.func @transform_0(%arg0: i32) -> (i32, i32, i32) {
    %c0_i32 = arith.constant 0 : i32
    %c0_i32_0 = arith.constant 0 : i32
    %c0_i32_1 = arith.constant 0 : i32
    return %arg0, %c0_i32, %c0_i32_0 : i32, i32, i32
  }
  func.func @transform_1(%arg0: i32) -> (i32, i32, i32) {
    %c0_i32 = arith.constant 0 : i32
    %c0_i32_0 = arith.constant 0 : i32
    %c0_i32_1 = arith.constant 0 : i32
    %c0_i32_2 = arith.constant 0 : i32
    return %c0_i32, %c0_i32_0, %c0_i32_1 : i32, i32, i32
  }
  func.func @transform_2(%arg0: i32) -> (i32, i32, i32) {
    %c0_i32 = arith.constant 0 : i32
    %c0_i32_0 = arith.constant 0 : i32
    %c0_i32_1 = arith.constant 0 : i32
    %c0_i32_2 = arith.constant 0 : i32
    return %c0_i32, %c0_i32_0, %c0_i32_1 : i32, i32, i32
  }
  func.func @transform_3(%arg0: i32) -> (i32, i32, i32) {
    %c0_i32 = arith.constant 0 : i32
    %c0_i32_0 = arith.constant 0 : i32
    %c0_i32_1 = arith.constant 0 : i32
    return %arg0, %c0_i32, %c0_i32_0 : i32, i32, i32
  }
}

module attributes {stable_mosaic.version = 11 : i64} {
  func.func @_bn_act_kernel(%arg0: i32, %arg1: memref<8x8x40xf32, #tpu.memory_space<vmem>>, %arg2: memref<1x1x40xf32, #tpu.memory_space<vmem>>, %arg3: memref<1x1x40xf32, #tpu.memory_space<vmem>>, %arg4: memref<8x8x40xf32, #tpu.memory_space<vmem>>, %arg5: memref<8x8x40xf32, #tpu.memory_space<vmem>>) attributes {dimension_semantics = [#tpu.dimension_semantics<parallel>], iteration_bounds = array<i64: 2>, scalar_prefetch = 0 : i64, scratch_operands = 0 : i64, tpu.core_type = #tpu.core_type<tc>, window_params = [{transform_indices = @transform_0, window_bounds = array<i64: 8, 8, 40>}, {pipeline_mode = #tpu.pipeline_mode<synchronous>, transform_indices = @transform_1, window_bounds = array<i64: 1, 1, 40>}, {pipeline_mode = #tpu.pipeline_mode<synchronous>, transform_indices = @transform_2, window_bounds = array<i64: 1, 1, 40>}, {transform_indices = @transform_3, window_bounds = array<i64: 8, 8, 40>}, {transform_indices = @transform_4, window_bounds = array<i64: 8, 8, 40>}]} {
    %c0 = arith.constant 0 : index
    %c0_0 = arith.constant 0 : index
    %c0_1 = arith.constant 0 : index
    %0 = vector.load %arg1[%c0, %c0_0, %c0_1] : memref<8x8x40xf32, #tpu.memory_space<vmem>>, vector<8x8x40xf32>
    %c0_2 = arith.constant 0 : index
    %c0_3 = arith.constant 0 : index
    %c0_4 = arith.constant 0 : index
    %1 = vector.load %arg2[%c0_2, %c0_3, %c0_4] : memref<1x1x40xf32, #tpu.memory_space<vmem>>, vector<1x1x40xf32>
    %2 = vector.broadcast %1 : vector<1x1x40xf32> to vector<8x8x40xf32>
    %3 = arith.mulf %0, %2 : vector<8x8x40xf32>
    %c0_5 = arith.constant 0 : index
    %c0_6 = arith.constant 0 : index
    %c0_7 = arith.constant 0 : index
    %4 = vector.load %arg3[%c0_5, %c0_6, %c0_7] : memref<1x1x40xf32, #tpu.memory_space<vmem>>, vector<1x1x40xf32>
    %5 = vector.broadcast %4 : vector<1x1x40xf32> to vector<8x8x40xf32>
    %6 = arith.addf %3, %5 : vector<8x8x40xf32>
    %cst = arith.constant 0.000000e+00 : f32
    %7 = vector.broadcast %cst : f32 to vector<8x8x40xf32>
    %8 = arith.cmpf ogt, %6, %7 : vector<8x8x40xf32>
    %cst_8 = arith.constant 0.00999999977 : f32
    %9 = vector.broadcast %cst_8 : f32 to vector<8x8x40xf32>
    %10 = arith.mulf %9, %6 : vector<8x8x40xf32>
    %11 = arith.select %8, %6, %10 : vector<8x8x40xi1>, vector<8x8x40xf32>
    %c0_9 = arith.constant 0 : index
    %c0_10 = arith.constant 0 : index
    %c0_11 = arith.constant 0 : index
    %12 = vector.load %arg4[%c0_9, %c0_10, %c0_11] : memref<8x8x40xf32, #tpu.memory_space<vmem>>, vector<8x8x40xf32>
    %13 = arith.addf %12, %11 : vector<8x8x40xf32>
    %c0_12 = arith.constant 0 : index
    %c0_13 = arith.constant 0 : index
    %c0_14 = arith.constant 0 : index
    %14 = vector.load %arg5[%c0_12, %c0_13, %c0_14] : memref<8x8x40xf32, #tpu.memory_space<vmem>>, vector<8x8x40xf32>
    tpu.vector_store %arg5[%c0_12, %c0_13, %c0_14], %13 {strides = array<i32>} : memref<8x8x40xf32, #tpu.memory_space<vmem>>, vector<8x8x40xf32>,
    return
  }
  func.func @transform_0(%arg0: i32) -> (i32, i32, i32) {
    %c0_i32 = arith.constant 0 : i32
    %c0_i32_0 = arith.constant 0 : i32
    %c0_i32_1 = arith.constant 0 : i32
    return %arg0, %c0_i32, %c0_i32_0 : i32, i32, i32
  }
  func.func @transform_1(%arg0: i32) -> (i32, i32, i32) {
    %c0_i32 = arith.constant 0 : i32
    %c0_i32_0 = arith.constant 0 : i32
    %c0_i32_1 = arith.constant 0 : i32
    %c0_i32_2 = arith.constant 0 : i32
    return %c0_i32, %c0_i32_0, %c0_i32_1 : i32, i32, i32
  }
  func.func @transform_2(%arg0: i32) -> (i32, i32, i32) {
    %c0_i32 = arith.constant 0 : i32
    %c0_i32_0 = arith.constant 0 : i32
    %c0_i32_1 = arith.constant 0 : i32
    %c0_i32_2 = arith.constant 0 : i32
    return %c0_i32, %c0_i32_0, %c0_i32_1 : i32, i32, i32
  }
  func.func @transform_3(%arg0: i32) -> (i32, i32, i32) {
    %c0_i32 = arith.constant 0 : i32
    %c0_i32_0 = arith.constant 0 : i32
    %c0_i32_1 = arith.constant 0 : i32
    return %arg0, %c0_i32, %c0_i32_0 : i32, i32, i32
  }
  func.func @transform_4(%arg0: i32) -> (i32, i32, i32) {
    %c0_i32 = arith.constant 0 : i32
    %c0_i32_0 = arith.constant 0 : i32
    %c0_i32_1 = arith.constant 0 : i32
    return %arg0, %c0_i32, %c0_i32_0 : i32, i32, i32
  }
}

module attributes {stable_mosaic.version = 11 : i64} {
  func.func @_conv_stats_kernel(%arg0: i32, %arg1: memref<8x10x168xbf16, #tpu.memory_space<vmem>>, %arg2: memref<3x168x40xbf16, #tpu.memory_space<vmem>>, %arg3: memref<8x8x40xf32, #tpu.memory_space<vmem>>, %arg4: memref<1x2x40xf32, #tpu.memory_space<vmem>>) attributes {dimension_semantics = [#tpu.dimension_semantics<parallel>], iteration_bounds = array<i64: 2>, scalar_prefetch = 0 : i64, scratch_operands = 0 : i64, tpu.core_type = #tpu.core_type<tc>, window_params = [{transform_indices = @transform_0, window_bounds = array<i64: 8, 10, 168>}, {pipeline_mode = #tpu.pipeline_mode<synchronous>, transform_indices = @transform_1, window_bounds = array<i64: 3, 168, 40>}, {transform_indices = @transform_2, window_bounds = array<i64: 8, 8, 40>}, {transform_indices = @transform_3, window_bounds = array<i64: 1, 2, 40>}]} {
    %c0 = arith.constant 0 : index
    %c0_0 = arith.constant 0 : index
    %c0_1 = arith.constant 0 : index
    %0 = vector.load %arg2[%c0, %c0_0, %c0_1] : memref<3x168x40xbf16, #tpu.memory_space<vmem>>, vector<1x168x40xbf16>
    %1 = vector.shape_cast %0 : vector<1x168x40xbf16> to vector<168x40xbf16>
    %c1 = arith.constant 1 : index
    %c0_2 = arith.constant 0 : index
    %c0_3 = arith.constant 0 : index
    %2 = vector.load %arg2[%c1, %c0_2, %c0_3] : memref<3x168x40xbf16, #tpu.memory_space<vmem>>, vector<1x168x40xbf16>
    %3 = vector.shape_cast %2 : vector<1x168x40xbf16> to vector<168x40xbf16>
    %c2 = arith.constant 2 : index
    %c0_4 = arith.constant 0 : index
    %c0_5 = arith.constant 0 : index
    %4 = vector.load %arg2[%c2, %c0_4, %c0_5] : memref<3x168x40xbf16, #tpu.memory_space<vmem>>, vector<1x168x40xbf16>
    %5 = vector.shape_cast %4 : vector<1x168x40xbf16> to vector<168x40xbf16>
    %cst = arith.constant 0.000000e+00 : f32
    %6 = vector.broadcast %cst : f32 to vector<1x40xf32>
    %cst_6 = arith.constant 0.000000e+00 : f32
    %7 = vector.broadcast %cst_6 : f32 to vector<1x40xf32>
    %c0_i32 = arith.constant 0 : i32
    %8 = arith.index_cast %c0_i32 : i32 to index
    %c0_7 = arith.constant 0 : index
    %c0_8 = arith.constant 0 : index
    %9 = vector.load %arg1[%8, %c0_7, %c0_8] : memref<8x10x168xbf16, #tpu.memory_space<vmem>>, vector<1x10x168xbf16>
    %10 = vector.shape_cast %9 : vector<1x10x168xbf16> to vector<10x168xbf16>
    %11 = vector.extract_strided_slice %10 {offsets = [0, 0], sizes = [8, 168], strides = [1, 1]} : vector<10x168xbf16> to vector<8x168xbf16>
    %cst_9 = arith.constant dense<0.000000e+00> : vector<8x40xf32>
    %12 = tpu.matmul %11, %1, %cst_9 {dimension_numbers = #tpu.dot_dimension_numbers<[1], [0], [0], [1], [0, 0, 1, 1], [], []>} : vector<8x168xbf16>, vector<168x40xbf16>, vector<8x40xf32> -> vector<8x40xf32>
    %13 = vector.extract_strided_slice %10 {offsets = [1, 0], sizes = [8, 168], strides = [1, 1]} : vector<10x168xbf16> to vector<8x168xbf16>
    %cst_10 = arith.constant dense<0.000000e+00> : vector<8x40xf32>
    %14 = tpu.matmul %13, %3, %cst_10 {dimension_numbers = #tpu.dot_dimension_numbers<[1], [0], [0], [1], [0, 0, 1, 1], [], []>} : vector<8x168xbf16>, vector<168x40xbf16>, vector<8x40xf32> -> vector<8x40xf32>
    %15 = arith.addf %12, %14 : vector<8x40xf32>
    %16 = vector.extract_strided_slice %10 {offsets = [2, 0], sizes = [8, 168], strides = [1, 1]} : vector<10x168xbf16> to vector<8x168xbf16>
    %cst_11 = arith.constant dense<0.000000e+00> : vector<8x40xf32>
    %17 = tpu.matmul %16, %5, %cst_11 {dimension_numbers = #tpu.dot_dimension_numbers<[1], [0], [0], [1], [0, 0, 1, 1], [], []>} : vector<8x168xbf16>, vector<168x40xbf16>, vector<8x40xf32> -> vector<8x40xf32>
    %18 = arith.addf %15, %17 : vector<8x40xf32>
    %19 = arith.index_cast %c0_i32 : i32 to index
    %c0_12 = arith.constant 0 : index
    %c0_13 = arith.constant 0 : index
    %20 = vector.load %arg3[%19, %c0_12, %c0_13] : memref<8x8x40xf32, #tpu.memory_space<vmem>>, vector<1x8x40xf32>
    %21 = vector.shape_cast %20 : vector<1x8x40xf32> to vector<8x40xf32>
    %22 = vector.shape_cast %18 : vector<8x40xf32> to vector<1x8x40xf32>
    tpu.vector_store %arg3[%19, %c0_12, %c0_13], %22 {strides = array<i32>} : memref<8x8x40xf32, #tpu.memory_space<vmem>>, vector<1x8x40xf32>,
    %cst_14 = arith.constant dense<0.000000e+00> : vector<40xf32>
    %23 = vector.multi_reduction <add>, %18, %cst_14 [0] : vector<8x40xf32> to vector<40xf32>
    %24 = vector.shape_cast %23 : vector<40xf32> to vector<1x40xf32>
    %25 = arith.addf %6, %24 : vector<1x40xf32>
    %26 = arith.mulf %18, %18 : vector<8x40xf32>
    %cst_15 = arith.constant dense<0.000000e+00> : vector<40xf32>
    %27 = vector.multi_reduction <add>, %26, %cst_15 [0] : vector<8x40xf32> to vector<40xf32>
    %28 = vector.shape_cast %27 : vector<40xf32> to vector<1x40xf32>
    %29 = arith.addf %7, %28 : vector<1x40xf32>
    %c1_i32 = arith.constant 1 : i32
    %30 = arith.index_cast %c1_i32 : i32 to index
    %c0_16 = arith.constant 0 : index
    %c0_17 = arith.constant 0 : index
    %31 = vector.load %arg1[%30, %c0_16, %c0_17] : memref<8x10x168xbf16, #tpu.memory_space<vmem>>, vector<1x10x168xbf16>
    %32 = vector.shape_cast %31 : vector<1x10x168xbf16> to vector<10x168xbf16>
    %33 = vector.extract_strided_slice %32 {offsets = [0, 0], sizes = [8, 168], strides = [1, 1]} : vector<10x168xbf16> to vector<8x168xbf16>
    %cst_18 = arith.constant dense<0.000000e+00> : vector<8x40xf32>
    %34 = tpu.matmul %33, %1, %cst_18 {dimension_numbers = #tpu.dot_dimension_numbers<[1], [0], [0], [1], [0, 0, 1, 1], [], []>} : vector<8x168xbf16>, vector<168x40xbf16>, vector<8x40xf32> -> vector<8x40xf32>
    %35 = vector.extract_strided_slice %32 {offsets = [1, 0], sizes = [8, 168], strides = [1, 1]} : vector<10x168xbf16> to vector<8x168xbf16>
    %cst_19 = arith.constant dense<0.000000e+00> : vector<8x40xf32>
    %36 = tpu.matmul %35, %3, %cst_19 {dimension_numbers = #tpu.dot_dimension_numbers<[1], [0], [0], [1], [0, 0, 1, 1], [], []>} : vector<8x168xbf16>, vector<168x40xbf16>, vector<8x40xf32> -> vector<8x40xf32>
    %37 = arith.addf %34, %36 : vector<8x40xf32>
    %38 = vector.extract_strided_slice %32 {offsets = [2, 0], sizes = [8, 168], strides = [1, 1]} : vector<10x168xbf16> to vector<8x168xbf16>
    %cst_20 = arith.constant dense<0.000000e+00> : vector<8x40xf32>
    %39 = tpu.matmul %38, %5, %cst_20 {dimension_numbers = #tpu.dot_dimension_numbers<[1], [0], [0], [1], [0, 0, 1, 1], [], []>} : vector<8x168xbf16>, vector<168x40xbf16>, vector<8x40xf32> -> vector<8x40xf32>
    %40 = arith.addf %37, %39 : vector<8x40xf32>
    %41 = arith.index_cast %c1_i32 : i32 to index
    %c0_21 = arith.constant 0 : index
    %c0_22 = arith.constant 0 : index
    %42 = vector.load %arg3[%41, %c0_21, %c0_22] : memref<8x8x40xf32, #tpu.memory_space<vmem>>, vector<1x8x40xf32>
    %43 = vector.shape_cast %42 : vector<1x8x40xf32> to vector<8x40xf32>
    %44 = vector.shape_cast %40 : vector<8x40xf32> to vector<1x8x40xf32>
    tpu.vector_store %arg3[%41, %c0_21, %c0_22], %44 {strides = array<i32>} : memref<8x8x40xf32, #tpu.memory_space<vmem>>, vector<1x8x40xf32>,
    %cst_23 = arith.constant dense<0.000000e+00> : vector<40xf32>
    %45 = vector.multi_reduction <add>, %40, %cst_23 [0] : vector<8x40xf32> to vector<40xf32>
    %46 = vector.shape_cast %45 : vector<40xf32> to vector<1x40xf32>
    %47 = arith.addf %25, %46 : vector<1x40xf32>
    %48 = arith.mulf %40, %40 : vector<8x40xf32>
    %cst_24 = arith.constant dense<0.000000e+00> : vector<40xf32>
    %49 = vector.multi_reduction <add>, %48, %cst_24 [0] : vector<8x40xf32> to vector<40xf32>
    %50 = vector.shape_cast %49 : vector<40xf32> to vector<1x40xf32>
    %51 = arith.addf %29, %50 : vector<1x40xf32>
    %c2_i32 = arith.constant 2 : i32
    %52 = arith.index_cast %c2_i32 : i32 to index
    %c0_25 = arith.constant 0 : index
    %c0_26 = arith.constant 0 : index
    %53 = vector.load %arg1[%52, %c0_25, %c0_26] : memref<8x10x168xbf16, #tpu.memory_space<vmem>>, vector<1x10x168xbf16>
    %54 = vector.shape_cast %53 : vector<1x10x168xbf16> to vector<10x168xbf16>
    %55 = vector.extract_strided_slice %54 {offsets = [0, 0], sizes = [8, 168], strides = [1, 1]} : vector<10x168xbf16> to vector<8x168xbf16>
    %cst_27 = arith.constant dense<0.000000e+00> : vector<8x40xf32>
    %56 = tpu.matmul %55, %1, %cst_27 {dimension_numbers = #tpu.dot_dimension_numbers<[1], [0], [0], [1], [0, 0, 1, 1], [], []>} : vector<8x168xbf16>, vector<168x40xbf16>, vector<8x40xf32> -> vector<8x40xf32>
    %57 = vector.extract_strided_slice %54 {offsets = [1, 0], sizes = [8, 168], strides = [1, 1]} : vector<10x168xbf16> to vector<8x168xbf16>
    %cst_28 = arith.constant dense<0.000000e+00> : vector<8x40xf32>
    %58 = tpu.matmul %57, %3, %cst_28 {dimension_numbers = #tpu.dot_dimension_numbers<[1], [0], [0], [1], [0, 0, 1, 1], [], []>} : vector<8x168xbf16>, vector<168x40xbf16>, vector<8x40xf32> -> vector<8x40xf32>
    %59 = arith.addf %56, %58 : vector<8x40xf32>
    %60 = vector.extract_strided_slice %54 {offsets = [2, 0], sizes = [8, 168], strides = [1, 1]} : vector<10x168xbf16> to vector<8x168xbf16>
    %cst_29 = arith.constant dense<0.000000e+00> : vector<8x40xf32>
    %61 = tpu.matmul %60, %5, %cst_29 {dimension_numbers = #tpu.dot_dimension_numbers<[1], [0], [0], [1], [0, 0, 1, 1], [], []>} : vector<8x168xbf16>, vector<168x40xbf16>, vector<8x40xf32> -> vector<8x40xf32>
    %62 = arith.addf %59, %61 : vector<8x40xf32>
    %63 = arith.index_cast %c2_i32 : i32 to index
    %c0_30 = arith.constant 0 : index
    %c0_31 = arith.constant 0 : index
    %64 = vector.load %arg3[%63, %c0_30, %c0_31] : memref<8x8x40xf32, #tpu.memory_space<vmem>>, vector<1x8x40xf32>
    %65 = vector.shape_cast %64 : vector<1x8x40xf32> to vector<8x40xf32>
    %66 = vector.shape_cast %62 : vector<8x40xf32> to vector<1x8x40xf32>
    tpu.vector_store %arg3[%63, %c0_30, %c0_31], %66 {strides = array<i32>} : memref<8x8x40xf32, #tpu.memory_space<vmem>>, vector<1x8x40xf32>,
    %cst_32 = arith.constant dense<0.000000e+00> : vector<40xf32>
    %67 = vector.multi_reduction <add>, %62, %cst_32 [0] : vector<8x40xf32> to vector<40xf32>
    %68 = vector.shape_cast %67 : vector<40xf32> to vector<1x40xf32>
    %69 = arith.addf %47, %68 : vector<1x40xf32>
    %70 = arith.mulf %62, %62 : vector<8x40xf32>
    %cst_33 = arith.constant dense<0.000000e+00> : vector<40xf32>
    %71 = vector.multi_reduction <add>, %70, %cst_33 [0] : vector<8x40xf32> to vector<40xf32>
    %72 = vector.shape_cast %71 : vector<40xf32> to vector<1x40xf32>
    %73 = arith.addf %51, %72 : vector<1x40xf32>
    %c3_i32 = arith.constant 3 : i32
    %74 = arith.index_cast %c3_i32 : i32 to index
    %c0_34 = arith.constant 0 : index
    %c0_35 = arith.constant 0 : index
    %75 = vector.load %arg1[%74, %c0_34, %c0_35] : memref<8x10x168xbf16, #tpu.memory_space<vmem>>, vector<1x10x168xbf16>
    %76 = vector.shape_cast %75 : vector<1x10x168xbf16> to vector<10x168xbf16>
    %77 = vector.extract_strided_slice %76 {offsets = [0, 0], sizes = [8, 168], strides = [1, 1]} : vector<10x168xbf16> to vector<8x168xbf16>
    %cst_36 = arith.constant dense<0.000000e+00> : vector<8x40xf32>
    %78 = tpu.matmul %77, %1, %cst_36 {dimension_numbers = #tpu.dot_dimension_numbers<[1], [0], [0], [1], [0, 0, 1, 1], [], []>} : vector<8x168xbf16>, vector<168x40xbf16>, vector<8x40xf32> -> vector<8x40xf32>
    %79 = vector.extract_strided_slice %76 {offsets = [1, 0], sizes = [8, 168], strides = [1, 1]} : vector<10x168xbf16> to vector<8x168xbf16>
    %cst_37 = arith.constant dense<0.000000e+00> : vector<8x40xf32>
    %80 = tpu.matmul %79, %3, %cst_37 {dimension_numbers = #tpu.dot_dimension_numbers<[1], [0], [0], [1], [0, 0, 1, 1], [], []>} : vector<8x168xbf16>, vector<168x40xbf16>, vector<8x40xf32> -> vector<8x40xf32>
    %81 = arith.addf %78, %80 : vector<8x40xf32>
    %82 = vector.extract_strided_slice %76 {offsets = [2, 0], sizes = [8, 168], strides = [1, 1]} : vector<10x168xbf16> to vector<8x168xbf16>
    %cst_38 = arith.constant dense<0.000000e+00> : vector<8x40xf32>
    %83 = tpu.matmul %82, %5, %cst_38 {dimension_numbers = #tpu.dot_dimension_numbers<[1], [0], [0], [1], [0, 0, 1, 1], [], []>} : vector<8x168xbf16>, vector<168x40xbf16>, vector<8x40xf32> -> vector<8x40xf32>
    %84 = arith.addf %81, %83 : vector<8x40xf32>
    %85 = arith.index_cast %c3_i32 : i32 to index
    %c0_39 = arith.constant 0 : index
    %c0_40 = arith.constant 0 : index
    %86 = vector.load %arg3[%85, %c0_39, %c0_40] : memref<8x8x40xf32, #tpu.memory_space<vmem>>, vector<1x8x40xf32>
    %87 = vector.shape_cast %86 : vector<1x8x40xf32> to vector<8x40xf32>
    %88 = vector.shape_cast %84 : vector<8x40xf32> to vector<1x8x40xf32>
    tpu.vector_store %arg3[%85, %c0_39, %c0_40], %88 {strides = array<i32>} : memref<8x8x40xf32, #tpu.memory_space<vmem>>, vector<1x8x40xf32>,
    %cst_41 = arith.constant dense<0.000000e+00> : vector<40xf32>
    %89 = vector.multi_reduction <add>, %84, %cst_41 [0] : vector<8x40xf32> to vector<40xf32>
    %90 = vector.shape_cast %89 : vector<40xf32> to vector<1x40xf32>
    %91 = arith.addf %69, %90 : vector<1x40xf32>
    %92 = arith.mulf %84, %84 : vector<8x40xf32>
    %cst_42 = arith.constant dense<0.000000e+00> : vector<40xf32>
    %93 = vector.multi_reduction <add>, %92, %cst_42 [0] : vector<8x40xf32> to vector<40xf32>
    %94 = vector.shape_cast %93 : vector<40xf32> to vector<1x40xf32>
    %95 = arith.addf %73, %94 : vector<1x40xf32>
    %c4_i32 = arith.constant 4 : i32
    %96 = arith.index_cast %c4_i32 : i32 to index
    %c0_43 = arith.constant 0 : index
    %c0_44 = arith.constant 0 : index
    %97 = vector.load %arg1[%96, %c0_43, %c0_44] : memref<8x10x168xbf16, #tpu.memory_space<vmem>>, vector<1x10x168xbf16>
    %98 = vector.shape_cast %97 : vector<1x10x168xbf16> to vector<10x168xbf16>
    %99 = vector.extract_strided_slice %98 {offsets = [0, 0], sizes = [8, 168], strides = [1, 1]} : vector<10x168xbf16> to vector<8x168xbf16>
    %cst_45 = arith.constant dense<0.000000e+00> : vector<8x40xf32>
    %100 = tpu.matmul %99, %1, %cst_45 {dimension_numbers = #tpu.dot_dimension_numbers<[1], [0], [0], [1], [0, 0, 1, 1], [], []>} : vector<8x168xbf16>, vector<168x40xbf16>, vector<8x40xf32> -> vector<8x40xf32>
    %101 = vector.extract_strided_slice %98 {offsets = [1, 0], sizes = [8, 168], strides = [1, 1]} : vector<10x168xbf16> to vector<8x168xbf16>
    %cst_46 = arith.constant dense<0.000000e+00> : vector<8x40xf32>
    %102 = tpu.matmul %101, %3, %cst_46 {dimension_numbers = #tpu.dot_dimension_numbers<[1], [0], [0], [1], [0, 0, 1, 1], [], []>} : vector<8x168xbf16>, vector<168x40xbf16>, vector<8x40xf32> -> vector<8x40xf32>
    %103 = arith.addf %100, %102 : vector<8x40xf32>
    %104 = vector.extract_strided_slice %98 {offsets = [2, 0], sizes = [8, 168], strides = [1, 1]} : vector<10x168xbf16> to vector<8x168xbf16>
    %cst_47 = arith.constant dense<0.000000e+00> : vector<8x40xf32>
    %105 = tpu.matmul %104, %5, %cst_47 {dimension_numbers = #tpu.dot_dimension_numbers<[1], [0], [0], [1], [0, 0, 1, 1], [], []>} : vector<8x168xbf16>, vector<168x40xbf16>, vector<8x40xf32> -> vector<8x40xf32>
    %106 = arith.addf %103, %105 : vector<8x40xf32>
    %107 = arith.index_cast %c4_i32 : i32 to index
    %c0_48 = arith.constant 0 : index
    %c0_49 = arith.constant 0 : index
    %108 = vector.load %arg3[%107, %c0_48, %c0_49] : memref<8x8x40xf32, #tpu.memory_space<vmem>>, vector<1x8x40xf32>
    %109 = vector.shape_cast %108 : vector<1x8x40xf32> to vector<8x40xf32>
    %110 = vector.shape_cast %106 : vector<8x40xf32> to vector<1x8x40xf32>
    tpu.vector_store %arg3[%107, %c0_48, %c0_49], %110 {strides = array<i32>} : memref<8x8x40xf32, #tpu.memory_space<vmem>>, vector<1x8x40xf32>,
    %cst_50 = arith.constant dense<0.000000e+00> : vector<40xf32>
    %111 = vector.multi_reduction <add>, %106, %cst_50 [0] : vector<8x40xf32> to vector<40xf32>
    %112 = vector.shape_cast %111 : vector<40xf32> to vector<1x40xf32>
    %113 = arith.addf %91, %112 : vector<1x40xf32>
    %114 = arith.mulf %106, %106 : vector<8x40xf32>
    %cst_51 = arith.constant dense<0.000000e+00> : vector<40xf32>
    %115 = vector.multi_reduction <add>, %114, %cst_51 [0] : vector<8x40xf32> to vector<40xf32>
    %116 = vector.shape_cast %115 : vector<40xf32> to vector<1x40xf32>
    %117 = arith.addf %95, %116 : vector<1x40xf32>
    %c5_i32 = arith.constant 5 : i32
    %118 = arith.index_cast %c5_i32 : i32 to index
    %c0_52 = arith.constant 0 : index
    %c0_53 = arith.constant 0 : index
    %119 = vector.load %arg1[%118, %c0_52, %c0_53] : memref<8x10x168xbf16, #tpu.memory_space<vmem>>, vector<1x10x168xbf16>
    %120 = vector.shape_cast %119 : vector<1x10x168xbf16> to vector<10x168xbf16>
    %121 = vector.extract_strided_slice %120 {offsets = [0, 0], sizes = [8, 168], strides = [1, 1]} : vector<10x168xbf16> to vector<8x168xbf16>
    %cst_54 = arith.constant dense<0.000000e+00> : vector<8x40xf32>
    %122 = tpu.matmul %121, %1, %cst_54 {dimension_numbers = #tpu.dot_dimension_numbers<[1], [0], [0], [1], [0, 0, 1, 1], [], []>} : vector<8x168xbf16>, vector<168x40xbf16>, vector<8x40xf32> -> vector<8x40xf32>
    %123 = vector.extract_strided_slice %120 {offsets = [1, 0], sizes = [8, 168], strides = [1, 1]} : vector<10x168xbf16> to vector<8x168xbf16>
    %cst_55 = arith.constant dense<0.000000e+00> : vector<8x40xf32>
    %124 = tpu.matmul %123, %3, %cst_55 {dimension_numbers = #tpu.dot_dimension_numbers<[1], [0], [0], [1], [0, 0, 1, 1], [], []>} : vector<8x168xbf16>, vector<168x40xbf16>, vector<8x40xf32> -> vector<8x40xf32>
    %125 = arith.addf %122, %124 : vector<8x40xf32>
    %126 = vector.extract_strided_slice %120 {offsets = [2, 0], sizes = [8, 168], strides = [1, 1]} : vector<10x168xbf16> to vector<8x168xbf16>
    %cst_56 = arith.constant dense<0.000000e+00> : vector<8x40xf32>
    %127 = tpu.matmul %126, %5, %cst_56 {dimension_numbers = #tpu.dot_dimension_numbers<[1], [0], [0], [1], [0, 0, 1, 1], [], []>} : vector<8x168xbf16>, vector<168x40xbf16>, vector<8x40xf32> -> vector<8x40xf32>
    %128 = arith.addf %125, %127 : vector<8x40xf32>
    %129 = arith.index_cast %c5_i32 : i32 to index
    %c0_57 = arith.constant 0 : index
    %c0_58 = arith.constant 0 : index
    %130 = vector.load %arg3[%129, %c0_57, %c0_58] : memref<8x8x40xf32, #tpu.memory_space<vmem>>, vector<1x8x40xf32>
    %131 = vector.shape_cast %130 : vector<1x8x40xf32> to vector<8x40xf32>
    %132 = vector.shape_cast %128 : vector<8x40xf32> to vector<1x8x40xf32>
    tpu.vector_store %arg3[%129, %c0_57, %c0_58], %132 {strides = array<i32>} : memref<8x8x40xf32, #tpu.memory_space<vmem>>, vector<1x8x40xf32>,
    %cst_59 = arith.constant dense<0.000000e+00> : vector<40xf32>
    %133 = vector.multi_reduction <add>, %128, %cst_59 [0] : vector<8x40xf32> to vector<40xf32>
    %134 = vector.shape_cast %133 : vector<40xf32> to vector<1x40xf32>
    %135 = arith.addf %113, %134 : vector<1x40xf32>
    %136 = arith.mulf %128, %128 : vector<8x40xf32>
    %cst_60 = arith.constant dense<0.000000e+00> : vector<40xf32>
    %137 = vector.multi_reduction <add>, %136, %cst_60 [0] : vector<8x40xf32> to vector<40xf32>
    %138 = vector.shape_cast %137 : vector<40xf32> to vector<1x40xf32>
    %139 = arith.addf %117, %138 : vector<1x40xf32>
    %c6_i32 = arith.constant 6 : i32
    %140 = arith.index_cast %c6_i32 : i32 to index
    %c0_61 = arith.constant 0 : index
    %c0_62 = arith.constant 0 : index
    %141 = vector.load %arg1[%140, %c0_61, %c0_62] : memref<8x10x168xbf16, #tpu.memory_space<vmem>>, vector<1x10x168xbf16>
    %142 = vector.shape_cast %141 : vector<1x10x168xbf16> to vector<10x168xbf16>
    %143 = vector.extract_strided_slice %142 {offsets = [0, 0], sizes = [8, 168], strides = [1, 1]} : vector<10x168xbf16> to vector<8x168xbf16>
    %cst_63 = arith.constant dense<0.000000e+00> : vector<8x40xf32>
    %144 = tpu.matmul %143, %1, %cst_63 {dimension_numbers = #tpu.dot_dimension_numbers<[1], [0], [0], [1], [0, 0, 1, 1], [], []>} : vector<8x168xbf16>, vector<168x40xbf16>, vector<8x40xf32> -> vector<8x40xf32>
    %145 = vector.extract_strided_slice %142 {offsets = [1, 0], sizes = [8, 168], strides = [1, 1]} : vector<10x168xbf16> to vector<8x168xbf16>
    %cst_64 = arith.constant dense<0.000000e+00> : vector<8x40xf32>
    %146 = tpu.matmul %145, %3, %cst_64 {dimension_numbers = #tpu.dot_dimension_numbers<[1], [0], [0], [1], [0, 0, 1, 1], [], []>} : vector<8x168xbf16>, vector<168x40xbf16>, vector<8x40xf32> -> vector<8x40xf32>
    %147 = arith.addf %144, %146 : vector<8x40xf32>
    %148 = vector.extract_strided_slice %142 {offsets = [2, 0], sizes = [8, 168], strides = [1, 1]} : vector<10x168xbf16> to vector<8x168xbf16>
    %cst_65 = arith.constant dense<0.000000e+00> : vector<8x40xf32>
    %149 = tpu.matmul %148, %5, %cst_65 {dimension_numbers = #tpu.dot_dimension_numbers<[1], [0], [0], [1], [0, 0, 1, 1], [], []>} : vector<8x168xbf16>, vector<168x40xbf16>, vector<8x40xf32> -> vector<8x40xf32>
    %150 = arith.addf %147, %149 : vector<8x40xf32>
    %151 = arith.index_cast %c6_i32 : i32 to index
    %c0_66 = arith.constant 0 : index
    %c0_67 = arith.constant 0 : index
    %152 = vector.load %arg3[%151, %c0_66, %c0_67] : memref<8x8x40xf32, #tpu.memory_space<vmem>>, vector<1x8x40xf32>
    %153 = vector.shape_cast %152 : vector<1x8x40xf32> to vector<8x40xf32>
    %154 = vector.shape_cast %150 : vector<8x40xf32> to vector<1x8x40xf32>
    tpu.vector_store %arg3[%151, %c0_66, %c0_67], %154 {strides = array<i32>} : memref<8x8x40xf32, #tpu.memory_space<vmem>>, vector<1x8x40xf32>,
    %cst_68 = arith.constant dense<0.000000e+00> : vector<40xf32>
    %155 = vector.multi_reduction <add>, %150, %cst_68 [0] : vector<8x40xf32> to vector<40xf32>
    %156 = vector.shape_cast %155 : vector<40xf32> to vector<1x40xf32>
    %157 = arith.addf %135, %156 : vector<1x40xf32>
    %158 = arith.mulf %150, %150 : vector<8x40xf32>
    %cst_69 = arith.constant dense<0.000000e+00> : vector<40xf32>
    %159 = vector.multi_reduction <add>, %158, %cst_69 [0] : vector<8x40xf32> to vector<40xf32>
    %160 = vector.shape_cast %159 : vector<40xf32> to vector<1x40xf32>
    %161 = arith.addf %139, %160 : vector<1x40xf32>
    %c7_i32 = arith.constant 7 : i32
    %162 = arith.index_cast %c7_i32 : i32 to index
    %c0_70 = arith.constant 0 : index
    %c0_71 = arith.constant 0 : index
    %163 = vector.load %arg1[%162, %c0_70, %c0_71] : memref<8x10x168xbf16, #tpu.memory_space<vmem>>, vector<1x10x168xbf16>
    %164 = vector.shape_cast %163 : vector<1x10x168xbf16> to vector<10x168xbf16>
    %165 = vector.extract_strided_slice %164 {offsets = [0, 0], sizes = [8, 168], strides = [1, 1]} : vector<10x168xbf16> to vector<8x168xbf16>
    %cst_72 = arith.constant dense<0.000000e+00> : vector<8x40xf32>
    %166 = tpu.matmul %165, %1, %cst_72 {dimension_numbers = #tpu.dot_dimension_numbers<[1], [0], [0], [1], [0, 0, 1, 1], [], []>} : vector<8x168xbf16>, vector<168x40xbf16>, vector<8x40xf32> -> vector<8x40xf32>
    %167 = vector.extract_strided_slice %164 {offsets = [1, 0], sizes = [8, 168], strides = [1, 1]} : vector<10x168xbf16> to vector<8x168xbf16>
    %cst_73 = arith.constant dense<0.000000e+00> : vector<8x40xf32>
    %168 = tpu.matmul %167, %3, %cst_73 {dimension_numbers = #tpu.dot_dimension_numbers<[1], [0], [0], [1], [0, 0, 1, 1], [], []>} : vector<8x168xbf16>, vector<168x40xbf16>, vector<8x40xf32> -> vector<8x40xf32>
    %169 = arith.addf %166, %168 : vector<8x40xf32>
    %170 = vector.extract_strided_slice %164 {offsets = [2, 0], sizes = [8, 168], strides = [1, 1]} : vector<10x168xbf16> to vector<8x168xbf16>
    %cst_74 = arith.constant dense<0.000000e+00> : vector<8x40xf32>
    %171 = tpu.matmul %170, %5, %cst_74 {dimension_numbers = #tpu.dot_dimension_numbers<[1], [0], [0], [1], [0, 0, 1, 1], [], []>} : vector<8x168xbf16>, vector<168x40xbf16>, vector<8x40xf32> -> vector<8x40xf32>
    %172 = arith.addf %169, %171 : vector<8x40xf32>
    %173 = arith.index_cast %c7_i32 : i32 to index
    %c0_75 = arith.constant 0 : index
    %c0_76 = arith.constant 0 : index
    %174 = vector.load %arg3[%173, %c0_75, %c0_76] : memref<8x8x40xf32, #tpu.memory_space<vmem>>, vector<1x8x40xf32>
    %175 = vector.shape_cast %174 : vector<1x8x40xf32> to vector<8x40xf32>
    %176 = vector.shape_cast %172 : vector<8x40xf32> to vector<1x8x40xf32>
    tpu.vector_store %arg3[%173, %c0_75, %c0_76], %176 {strides = array<i32>} : memref<8x8x40xf32, #tpu.memory_space<vmem>>, vector<1x8x40xf32>,
    %cst_77 = arith.constant dense<0.000000e+00> : vector<40xf32>
    %177 = vector.multi_reduction <add>, %172, %cst_77 [0] : vector<8x40xf32> to vector<40xf32>
    %178 = vector.shape_cast %177 : vector<40xf32> to vector<1x40xf32>
    %179 = arith.addf %157, %178 : vector<1x40xf32>
    %180 = arith.mulf %172, %172 : vector<8x40xf32>
    %cst_78 = arith.constant dense<0.000000e+00> : vector<40xf32>
    %181 = vector.multi_reduction <add>, %180, %cst_78 [0] : vector<8x40xf32> to vector<40xf32>
    %182 = vector.shape_cast %181 : vector<40xf32> to vector<1x40xf32>
    %183 = arith.addf %161, %182 : vector<1x40xf32>
    %c8_i32 = arith.constant 8 : i32
    %184 = tpu.concatenate %179, %183 in 0 : vector<1x40xf32>, vector<1x40xf32> -> vector<2x40xf32>
    %c0_79 = arith.constant 0 : index
    %c0_80 = arith.constant 0 : index
    %c0_81 = arith.constant 0 : index
    %185 = vector.load %arg4[%c0_79, %c0_80, %c0_81] : memref<1x2x40xf32, #tpu.memory_space<vmem>>, vector<1x2x40xf32>
    %186 = vector.shape_cast %185 : vector<1x2x40xf32> to vector<2x40xf32>
    %187 = vector.shape_cast %184 : vector<2x40xf32> to vector<1x2x40xf32>
    tpu.vector_store %arg4[%c0_79, %c0_80, %c0_81], %187 {strides = array<i32>} : memref<1x2x40xf32, #tpu.memory_space<vmem>>, vector<1x2x40xf32>,
    return
  }
  func.func @transform_0(%arg0: i32) -> (i32, i32, i32) {
    %c0_i32 = arith.constant 0 : i32
    %c0_i32_0 = arith.constant 0 : i32
    %c0_i32_1 = arith.constant 0 : i32
    return %arg0, %c0_i32, %c0_i32_0 : i32, i32, i32
  }
  func.func @transform_1(%arg0: i32) -> (i32, i32, i32) {
    %c0_i32 = arith.constant 0 : i32
    %c0_i32_0 = arith.constant 0 : i32
    %c0_i32_1 = arith.constant 0 : i32
    %c0_i32_2 = arith.constant 0 : i32
    return %c0_i32, %c0_i32_0, %c0_i32_1 : i32, i32, i32
  }
  func.func @transform_2(%arg0: i32) -> (i32, i32, i32) {
    %c0_i32 = arith.constant 0 : i32
    %c0_i32_0 = arith.constant 0 : i32
    %c0_i32_1 = arith.constant 0 : i32
    return %arg0, %c0_i32, %c0_i32_0 : i32, i32, i32
  }
  func.func @transform_3(%arg0: i32) -> (i32, i32, i32) {
    %c0_i32 = arith.constant 0 : i32
    %c0_i32_0 = arith.constant 0 : i32
    %c0_i32_1 = arith.constant 0 : i32
    return %arg0, %c0_i32, %c0_i32_0 : i32, i32, i32
  }
}

</mosaic_0001>

<llo_original>
// kernel: squeeze.64
$region0: #{squeeze.64}
  %s0 = inlined_call_operand.vmem [shape: f32[40], index: 0, kind: input, shape index: {}]
  %s1 = inlined_call_operand.vmem [shape: f32[5,8], index: 1, kind: output, shape index: {}]
  $region1: #{squeeze.64} parent=0
    #allocation0 [shape = 'u8[4096]{0}', space=vmem, size = 0x1000, scoped, tag = 'scoped mem for input reshape']
    %s3 = ssub.s32 2, 1
    %v4 = vld [vmem:[%s0] sm:%s3]
    %5 = vst [vmem:[#allocation0] sm:%s3] %v4
    %v6 = vld [vmem:[#allocation0] sm:$0x1]
    %vm7 = vcmask 64512
    %8 = vst.msk [vmem:[%s1] sm:$0x1] %vm7, %v6
    %v9 = vld [vmem:[#allocation0] sm:$0x1]
    %10 = vrot.lane.b32.xlu0 %v9, 120
    %v11 = vpop.permute.xlu0 %10
    %vm12 = vcmask 64512
    %s13 = scalar_lea.vmem %s1, 1
    %14 = vst.msk [vmem:[%s13] sm:$0x1] %vm12, %v11
    %v15 = vld [vmem:[#allocation0] sm:$0x1]
    %16 = vrot.lane.b32.xlu0 %v15, 112
    %v17 = vpop.permute.xlu0 %16
    %vm18 = vcmask 64512
    %s19 = scalar_lea.vmem %s1, 2
    %20 = vst.msk [vmem:[%s19] sm:$0x1] %vm18, %v17
    %v21 = vld [vmem:[#allocation0] sm:$0x1]
    %22 = vrot.lane.b32.xlu0 %v21, 104
    %v23 = vpop.permute.xlu0 %22
    %vm24 = vcmask 64512
    %s25 = scalar_lea.vmem %s1, 3
    %26 = vst.msk [vmem:[%s25] sm:$0x1] %vm24, %v23
    %v27 = vld [vmem:[#allocation0] sm:$0x1]
    %28 = vrot.lane.b32.xlu0 %v27, 96
    %v29 = vpop.permute.xlu0 %28
    %vm30 = vcmask 64512
    %s31 = scalar_lea.vmem %s1, 4
    %32 = vst.msk [vmem:[%s31] sm:$0x1] %vm30, %v29

// kernel: match_predictor_forward.11
$region0: #{match_predictor_forward.11}
  #allocation0 [shape = 'u32[]', space=smem, size = 0x4, offset = 0x4, fixed_abs, tag = 'smem constant byte address 0x4 - core index']
  #allocation1 [shape = 'u32[72,128]{1,0:T(1,128)}', space=vmem, size = 0x9000, scoped, tag = 'internal scratch']
  %s0 = inlined_call_operand.vmem [shape: f32[16,8,40], index: 0, kind: input, shape index: {}]
  %s1 = inlined_call_operand.vmem [shape: f32[1,1,40], index: 1, kind: input, shape index: {}]
  %s2 = inlined_call_operand.vmem [shape: f32[1,1,40], index: 2, kind: input, shape index: {}]
  %s3 = inlined_call_operand.vmem [shape: f32[16,8,40], index: 3, kind: output, shape index: {}]
  %s4 = sld [smem:[#allocation0]]
  $region45: #{match_predictor_forward.11} parent=0
    _
  %s6 = ssub.s32 1, %s4
  %s7 = scalar_select 0, %s6, %s4
  loop: start=0, step=1, limit=4
  $region2: #{match_predictor_forward.11} parent=0 // loop_pre_header
    _
  $region3: #{match_predictor_forward.11} parent=0 // loop_header
    %s9 = sphi 0, %s13
    %p10 = scmp.ge.s32.totalorder %s9, 4
    %s19 = sphi 0, %s21
    %s22 = sphi 0, %s19
    %s23 = sphi 0, %s22
    %s39 = sphi 0, %s23
    %s43 = sphi 0, %s43
    %s45 = sphi 0, %s43
    %s46 = sphi 0, %s45
    %s60 = sphi 0, %s46
    %s64 = sphi 0, %s64
    %s66 = sphi 0, %s64
    %s67 = sphi 0, %s66
    %s81 = sphi 0, %s67
    %s87 = sphi 0, %s89
    %s90 = sphi 0, %s87
    %s91 = sphi 0, %s90
    %s107 = sphi 0, %s91
  $region4: #{match_predictor_forward.11} parent=0 // loop_header_branch
    %12 = sbr.rel (%p10) target = $region8
  $region5: #{match_predictor_forward.11} parent=0 // loop_body
    %s14 = ssub.s32 %s9, 1
    %s15 = ssub.s32 %s9, 2
    %s16 = sadd.s32 %s9, 1
    %s17 = ssub.s32 %s9, %s16
    %p18 = scmp.eq.s32.totalorder %s17, 0
    %s20 = sadd.s32 %s19, 1
    %s21 = scalar_select %p18, %s19, %s20
    %p24 = pneg %p18
    %p25 = scmp.eq.s32.totalorder %s9, 1
    %p26 = por %p24, %p25
    %p27 = scmp.ne.s32.totalorder %s19, %s22
    %p28 = scmp.eq.s32.totalorder %s9, 0
    %p29 = por %p27, %p28
    %p30 = scmp.ne.s32.totalorder %s19, %s22
    %p31 = scmp.eq.s32.totalorder %s14, 1
    %p32 = por %p30, %p31
    %p33 = scmp.ne.s32.totalorder %s22, %s23
    %p34 = scmp.eq.s32.totalorder %s14, 0
    %p35 = por %p33, %p34
    %p36 = scmp.ne.s32.totalorder %s22, %s23
    %p37 = scmp.eq.s32.totalorder %s15, 1
    %p38 = por %p36, %p37
    %p40 = scmp.ne.s32.totalorder %s23, %s39
    %p41 = scmp.eq.s32.totalorder %s15, 0
    %p42 = por %p40, %p41
    %s44 = sadd.s32 %s43, 1
    %p47 = scmp.eq.s32.totalorder %s9, 1
    %p48 = scmp.ne.s32.totalorder %s43, %s45
    %p49 = scmp.eq.s32.totalorder %s9, 0
    %p50 = por %p48, %p49
    %p51 = scmp.ne.s32.totalorder %s43, %s45
    %p52 = scmp.eq.s32.totalorder %s14, 1
    %p53 = por %p51, %p52
    %p54 = scmp.ne.s32.totalorder %s45, %s46
    %p55 = scmp.eq.s32.totalorder %s14, 0
    %p56 = por %p54, %p55
    %p57 = scmp.ne.s32.totalorder %s45, %s46
    %p58 = scmp.eq.s32.totalorder %s15, 1
    %p59 = por %p57, %p58
    %p61 = scmp.ne.s32.totalorder %s46, %s60
    %p62 = scmp.eq.s32.totalorder %s15, 0
    %p63 = por %p61, %p62
    %s65 = sadd.s32 %s64, 1
    %p68 = scmp.eq.s32.totalorder %s9, 1
    %p69 = scmp.ne.s32.totalorder %s64, %s66
    %p70 = scmp.eq.s32.totalorder %s9, 0
    %p71 = por %p69, %p70
    %p72 = scmp.ne.s32.totalorder %s64, %s66
    %p73 = scmp.eq.s32.totalorder %s14, 1
    %p74 = por %p72, %p73
    %p75 = scmp.ne.s32.totalorder %s66, %s67
    %p76 = scmp.eq.s32.totalorder %s14, 0
    %p77 = por %p75, %p76
    %p78 = scmp.ne.s32.totalorder %s66, %s67
    %p79 = scmp.eq.s32.totalorder %s15, 1
    %p80 = por %p78, %p79
    %p82 = scmp.ne.s32.totalorder %s67, %s81
    %p83 = scmp.eq.s32.totalorder %s15, 0
    %p84 = por %p82, %p83
    %s85 = ssub.s32 %s9, %s16
    %p86 = scmp.eq.s32.totalorder %s85, 0
    %s88 = sadd.s32 %s87, 1
    %s89 = scalar_select %p86, %s87, %s88
    %p92 = pneg %p86
    %p93 = scmp.eq.s32.totalorder %s9, 1
    %p94 = por %p92, %p93
    %p95 = scmp.ne.s32.totalorder %s87, %s90
    %p96 = scmp.eq.s32.totalorder %s9, 0
    %p97 = por %p95, %p96
    %p98 = scmp.ne.s32.totalorder %s87, %s90
    %p99 = scmp.eq.s32.totalorder %s14, 1
    %p100 = por %p98, %p99
    %p101 = scmp.ne.s32.totalorder %s90, %s91
    %p102 = scmp.eq.s32.totalorder %s14, 0
    %p103 = por %p101, %p102
    %p104 = scmp.ne.s32.totalorder %s90, %s91
    %p105 = scmp.eq.s32.totalorder %s15, 1
    %p106 = por %p104, %p105
    %p108 = scmp.ne.s32.totalorder %s91, %s107
    %p109 = scmp.eq.s32.totalorder %s15, 0
    %p110 = por %p108, %p109
    %p111 = scmp.le.s32.totalorder 1, %s9
    %p112 = scmp.lt.s32.totalorder %s9, 3
    %p113 = pnand %p111, %p112
    %p114 = pneg %p113
    // Predicated region
    $region9: #{match_predictor_forward.11} parent=5 // pred_check
      _
    $region10: #{match_predictor_forward.11} parent=5 // pred_check_branch
      %116 = sbr.rel (%p113) target = $region12
    $region11: #{match_predictor_forward.11} parent=5 // pred_region
      %s117 = ssub.s32 %s9, 1
      // Predicated region
      $region13: #{match_predictor_forward.11} parent=11 // pred_check
        %p118 = pneg %p56
      $region14: #{match_predictor_forward.11} parent=11 // pred_check_branch
        %120 = sbr.rel (%p118) target = $region16
      $region15: #{match_predictor_forward.11} parent=11 // pred_region
        _
      $region16: #{match_predictor_forward.11} parent=11 // pred_fallthru
        _
      // Predicated region
      $region17: #{match_predictor_forward.11} parent=11 // pred_check
        %p121 = pneg %p77
      $region18: #{match_predictor_forward.11} parent=11 // pred_check_branch
        %123 = sbr.rel (%p121) target = $region20
      $region19: #{match_predictor_forward.11} parent=11 // pred_region
        _
      $region20: #{match_predictor_forward.11} parent=11 // pred_fallthru
        _
    $region12: #{match_predictor_forward.11} parent=5 // pred_fallthru
      _
    %p124 = scmp.lt.s32.totalorder %s9, 2
    // Predicated region
    $region21: #{match_predictor_forward.11} parent=5 // pred_check
      %p125 = pneg %p124
    $region22: #{match_predictor_forward.11} parent=5 // pred_check_branch
      %127 = sbr.rel (%p125) target = $region24
    $region23: #{match_predictor_forward.11} parent=5 // pred_region
      // Predicated region
      $region25: #{match_predictor_forward.11} parent=23 // pred_check
        %p128 = pneg %p29
      $region26: #{match_predictor_forward.11} parent=23 // pred_check_branch
        %130 = sbr.rel (%p128) target = $region28
      $region27: #{match_predictor_forward.11} parent=23 // pred_region
        %s131 = smul.u32 8, %s9
        %p132 = scmp.lt.s32.totalorder %s131, 15
        %s133 = scalar_select %p132, %s131, 15
        %s134 = smul.addr %s133, 8
        %s135 = scalar_lea.vmem %s0, %s134
        %s136 = smul.u32 8, %s9
      $region28: #{match_predictor_forward.11} parent=23 // pred_fallthru
        _
    $region24: #{match_predictor_forward.11} parent=5 // pred_fallthru
      _
    %p137 = scmp.le.s32.totalorder 1, %s9
    %p138 = scmp.lt.s32.totalorder %s9, 3
    %p139 = pnand %p137, %p138
    %p140 = pneg %p139
    // Predicated region
    $region29: #{match_predictor_forward.11} parent=5 // pred_check
      _
    $region30: #{match_predictor_forward.11} parent=5 // pred_check_branch
      %142 = sbr.rel (%p139) target = $region32
    $region31: #{match_predictor_forward.11} parent=5 // pred_region
      %s143 = ssub.s32 %s9, 1
      %s144 = smul.u32 8, %s14
      %p145 = scmp.lt.s32.totalorder %s144, 15
      %s146 = scalar_select %p145, %s144, 15
      %s147 = smul.addr %s146, 8
      %s148 = scalar_lea.vmem %s0, %s147
      %p149 = pneg %p35
      %p150 = pneg %p32
      %p151 = pneg %p56
      %p152 = pneg %p53
      %p153 = pneg %p77
      %p154 = pneg %p74
      %p155 = pneg %p103
      %p156 = pneg %p100
      %s157 = smul.u32 8, %s14
      %p158 = scmp.lt.s32.totalorder %s157, 15
      %s159 = scalar_select %p158, %s157, 15
      %s160 = smul.addr %s159, 8
      %s161 = scalar_lea.vmem %s3, %s160
      %s162 = smul.u32 8, %s14
      %p163 = scmp.lt.s32.totalorder %s162, 15
      %s164 = scalar_select %p163, %s162, 15
      %s165 = smul.addr %s164, 8
      %s166 = scalar_lea.vmem %s0, %s165
      %s167 = smul.u32 8, %s14
      %s168 = smul.u32 8, %s14
      %p169 = scmp.lt.s32.totalorder %s168, 15
      %s170 = scalar_select %p169, %s168, 15
      %s171 = smul.addr %s170, 8
      %s172 = scalar_lea.vmem %s3, %s171
      %s173 = smul.u32 8, %s14
      %v174 = vld [vmem:[%s166] sm:$0xff]
      %v175 = vld [vmem:[%s166 + $0x8] sm:$0xff]
      %v176 = vld [vmem:[%s166 + $0x10] sm:$0xff]
      %v177 = vld [vmem:[%s166 + $0x18] sm:$0xff]
      %v178 = vld [vmem:[%s166 + $0x20] sm:$0xff]
      %v179 = vld [vmem:[%s166 + $0x28] sm:$0xff]
      %v180 = vld [vmem:[%s166 + $0x30] sm:$0xff]
      %v181 = vld [vmem:[%s166 + $0x38] sm:$0xff]
      %v182 = vld [vmem:[%s1] sm:$0x1]
      %v184 = vperm.slane %v182, 0
      %v186 = vmul.f32 %v174, %v184
      %v187 = vmul.f32 %v175, %v184
      %v188 = vmul.f32 %v176, %v184
      %v189 = vmul.f32 %v177, %v184
      %v190 = vmul.f32 %v178, %v184
      %v191 = vmul.f32 %v179, %v184
      %v192 = vmul.f32 %v180, %v184
      %v193 = vmul.f32 %v181, %v184
      %v194 = vld [vmem:[%s2] sm:$0x1]
      %v196 = vperm.slane %v194, 0
      %v198 = vadd.f32 %v186, %v196
      %v199 = vadd.f32 %v187, %v196
      %v200 = vadd.f32 %v188, %v196
      %v201 = vadd.f32 %v189, %v196
      %v202 = vadd.f32 %v190, %v196
      %v203 = vadd.f32 %v191, %v196
      %v204 = vadd.f32 %v192, %v196
      %v205 = vadd.f32 %v193, %v196
      %vm206 = vcmp.gt.f32.partialorder %v198, 0.0
      %vm207 = vcmp.gt.f32.partialorder %v199, 0.0
      %vm208 = vcmp.gt.f32.partialorder %v200, 0.0
      %vm209 = vcmp.gt.f32.partialorder %v201, 0.0
      %vm210 = vcmp.gt.f32.partialorder %v202, 0.0
      %vm211 = vcmp.gt.f32.partialorder %v203, 0.0
      %vm212 = vcmp.gt.f32.partialorder %v204, 0.0
      %vm213 = vcmp.gt.f32.partialorder %v205, 0.0
      %v214 = vmul.f32 %v198, 0.01
      %v215 = vmul.f32 %v199, 0.01
      %v216 = vmul.f32 %v200, 0.01
      %v217 = vmul.f32 %v201, 0.01
      %v218 = vmul.f32 %v202, 0.01
      %v219 = vmul.f32 %v203, 0.01
      %v220 = vmul.f32 %v204, 0.01
      %v221 = vmul.f32 %v205, 0.01
      %v222 = vsel %vm206, %v198, %v214
      %v223 = vsel %vm207, %v199, %v215
      %v224 = vsel %vm208, %v200, %v216
      %v225 = vsel %vm209, %v201, %v217
      %v226 = vsel %vm210, %v202, %v218
      %v227 = vsel %vm211, %v203, %v219
      %v228 = vsel %vm212, %v204, %v220
      %v229 = vsel %vm213, %v205, %v221
      %vm230 = vcmask 326656
      %231 = vst.msk [vmem:[%s172] sm:$0xff] %vm230, %v222
      %232 = vst.msk [vmem:[%s172 + $0x8] sm:$0xff] %vm230, %v223
      %233 = vst.msk [vmem:[%s172 + $0x10] sm:$0xff] %vm230, %v224
      %234 = vst.msk [vmem:[%s172 + $0x18] sm:$0xff] %vm230, %v225
      %235 = vst.msk [vmem:[%s172 + $0x20] sm:$0xff] %vm230, %v226
      %236 = vst.msk [vmem:[%s172 + $0x28] sm:$0xff] %vm230, %v227
      %237 = vst.msk [vmem:[%s172 + $0x30] sm:$0xff] %vm230, %v228
      %238 = vst.msk [vmem:[%s172 + $0x38] sm:$0xff] %vm230, %v229
      %s239 = smul.u32 8, %s14
      %p240 = scmp.lt.s32.totalorder %s239, 15
      %s241 = scalar_select %p240, %s239, 15
      %s242 = smul.addr %s241, 8
      %s243 = scalar_lea.vmem %s3, %s242
      // Predicated region
      $region33: #{match_predictor_forward.11} parent=31 // pred_check
        %p244 = pneg %p100
      $region34: #{match_predictor_forward.11} parent=31 // pred_check_branch
        %246 = sbr.rel (%p244) target = $region36
      $region35: #{match_predictor_forward.11} parent=31 // pred_region
        %s247 = smul.u32 8, %s14
      $region36: #{match_predictor_forward.11} parent=31 // pred_fallthru
        _
    $region32: #{match_predictor_forward.11} parent=5 // pred_fallthru
      _
    %p248 = scmp.le.s32.totalorder 2, %s9
    // Predicated region
    $region37: #{match_predictor_forward.11} parent=5 // pred_check
      %p249 = pneg %p248
    $region38: #{match_predictor_forward.11} parent=5 // pred_check_branch
      %251 = sbr.rel (%p249) target = $region40
    $region39: #{match_predictor_forward.11} parent=5 // pred_region
      %s252 = ssub.s32 %s9, 2
      // Predicated region
      $region41: #{match_predictor_forward.11} parent=39 // pred_check
        %p253 = pneg %p106
      $region42: #{match_predictor_forward.11} parent=39 // pred_check_branch
        %255 = sbr.rel (%p253) target = $region44
      $region43: #{match_predictor_forward.11} parent=39 // pred_region
        %s256 = smul.u32 8, %s15
        %p257 = scmp.lt.s32.totalorder %s256, 15
        %s258 = scalar_select %p257, %s256, 15
        %s259 = smul.addr %s258, 8
        %s260 = scalar_lea.vmem %s3, %s259
      $region44: #{match_predictor_forward.11} parent=39 // pred_fallthru
        _
    $region40: #{match_predictor_forward.11} parent=5 // pred_fallthru
      _
  $region6: #{match_predictor_forward.11} parent=0 // loop_footer
    %s13 = sadd.s32 1, %s9
  $region7: #{match_predictor_forward.11} parent=0 // loop_footer_branch
    %8 = sbr.rel target = $region3
  $region8: #{match_predictor_forward.11} parent=0 // loop_exit
    _

// kernel: match_predictor_forward.10
$region0: #{match_predictor_forward.10}
  #allocation0 [shape = 'u32[]', space=smem, size = 0x4, offset = 0x4, fixed_abs, tag = 'smem constant byte address 0x4 - core index']
  #allocation1 [shape = 'u32[72,128]{1,0:T(1,128)}', space=vmem, size = 0x9000, scoped, tag = 'internal scratch']
  %s0 = inlined_call_operand.vmem [shape: bf16[16,10,120], index: 0, kind: input, shape index: {}]
  %s1 = inlined_call_operand.vmem [shape: bf16[3,120,40], index: 1, kind: input, shape index: {}]
  %s2 = inlined_call_operand.vmem [shape: f32[16,8,40], index: 2, kind: output, shape index: {0}]
  %s3 = inlined_call_operand.vmem [shape: f32[2,2,40], index: 3, kind: output, shape index: {1}]
  %4 = xla_tuple %s2, %s3
  %s5 = sld [smem:[#allocation0]]
  $region49: #{match_predictor_forward.10} parent=0
    _
  %s7 = ssub.s32 1, %s5
  %s8 = scalar_select 0, %s7, %s5
  loop: start=0, step=1, limit=4
  $region2: #{match_predictor_forward.10} parent=0 // loop_pre_header
    _
  $region3: #{match_predictor_forward.10} parent=0 // loop_header
    %s10 = sphi 0, %s14
    %p11 = scmp.ge.s32.totalorder %s10, 4
    %s20 = sphi 0, %s22
    %s23 = sphi 0, %s20
    %s24 = sphi 0, %s23
    %s40 = sphi 0, %s24
    %s44 = sphi 0, %s44
    %s46 = sphi 0, %s44
    %s47 = sphi 0, %s46
    %s61 = sphi 0, %s47
    %s67 = sphi 0, %s69
    %s70 = sphi 0, %s67
    %s71 = sphi 0, %s70
    %s87 = sphi 0, %s71
    %s93 = sphi 0, %s95
    %s96 = sphi 0, %s93
    %s97 = sphi 0, %s96
    %s113 = sphi 0, %s97
  $region4: #{match_predictor_forward.10} parent=0 // loop_header_branch
    %13 = sbr.rel (%p11) target = $region8
  $region5: #{match_predictor_forward.10} parent=0 // loop_body
    %s15 = ssub.s32 %s10, 1
    %s16 = ssub.s32 %s10, 2
    %s17 = sadd.s32 %s10, 1
    %s18 = ssub.s32 %s10, %s17
    %p19 = scmp.eq.s32.totalorder %s18, 0
    %s21 = sadd.s32 %s20, 1
    %s22 = scalar_select %p19, %s20, %s21
    %p25 = pneg %p19
    %p26 = scmp.eq.s32.totalorder %s10, 1
    %p27 = por %p25, %p26
    %p28 = scmp.ne.s32.totalorder %s20, %s23
    %p29 = scmp.eq.s32.totalorder %s10, 0
    %p30 = por %p28, %p29
    %p31 = scmp.ne.s32.totalorder %s20, %s23
    %p32 = scmp.eq.s32.totalorder %s15, 1
    %p33 = por %p31, %p32
    %p34 = scmp.ne.s32.totalorder %s23, %s24
    %p35 = scmp.eq.s32.totalorder %s15, 0
    %p36 = por %p34, %p35
    %p37 = scmp.ne.s32.totalorder %s23, %s24
    %p38 = scmp.eq.s32.totalorder %s16, 1
    %p39 = por %p37, %p38
    %p41 = scmp.ne.s32.totalorder %s24, %s40
    %p42 = scmp.eq.s32.totalorder %s16, 0
    %p43 = por %p41, %p42
    %s45 = sadd.s32 %s44, 1
    %p48 = scmp.eq.s32.totalorder %s10, 1
    %p49 = scmp.ne.s32.totalorder %s44, %s46
    %p50 = scmp.eq.s32.totalorder %s10, 0
    %p51 = por %p49, %p50
    %p52 = scmp.ne.s32.totalorder %s44, %s46
    %p53 = scmp.eq.s32.totalorder %s15, 1
    %p54 = por %p52, %p53
    %p55 = scmp.ne.s32.totalorder %s46, %s47
    %p56 = scmp.eq.s32.totalorder %s15, 0
    %p57 = por %p55, %p56
    %p58 = scmp.ne.s32.totalorder %s46, %s47
    %p59 = scmp.eq.s32.totalorder %s16, 1
    %p60 = por %p58, %p59
    %p62 = scmp.ne.s32.totalorder %s47, %s61
    %p63 = scmp.eq.s32.totalorder %s16, 0
    %p64 = por %p62, %p63
    %s65 = ssub.s32 %s10, %s17
    %p66 = scmp.eq.s32.totalorder %s65, 0
    %s68 = sadd.s32 %s67, 1
    %s69 = scalar_select %p66, %s67, %s68
    %p72 = pneg %p66
    %p73 = scmp.eq.s32.totalorder %s10, 1
    %p74 = por %p72, %p73
    %p75 = scmp.ne.s32.totalorder %s67, %s70
    %p76 = scmp.eq.s32.totalorder %s10, 0
    %p77 = por %p75, %p76
    %p78 = scmp.ne.s32.totalorder %s67, %s70
    %p79 = scmp.eq.s32.totalorder %s15, 1
    %p80 = por %p78, %p79
    %p81 = scmp.ne.s32.totalorder %s70, %s71
    %p82 = scmp.eq.s32.totalorder %s15, 0
    %p83 = por %p81, %p82
    %p84 = scmp.ne.s32.totalorder %s70, %s71
    %p85 = scmp.eq.s32.totalorder %s16, 1
    %p86 = por %p84, %p85
    %p88 = scmp.ne.s32.totalorder %s71, %s87
    %p89 = scmp.eq.s32.totalorder %s16, 0
    %p90 = por %p88, %p89
    %s91 = ssub.s32 %s10, %s17
    %p92 = scmp.eq.s32.totalorder %s91, 0
    %s94 = sadd.s32 %s93, 1
    %s95 = scalar_select %p92, %s93, %s94
    %p98 = pneg %p92
    %p99 = scmp.eq.s32.totalorder %s10, 1
    %p100 = por %p98, %p99
    %p101 = scmp.ne.s32.totalorder %s93, %s96
    %p102 = scmp.eq.s32.totalorder %s10, 0
    %p103 = por %p101, %p102
    %p104 = scmp.ne.s32.totalorder %s93, %s96
    %p105 = scmp.eq.s32.totalorder %s15, 1
    %p106 = por %p104, %p105
    %p107 = scmp.ne.s32.totalorder %s96, %s97
    %p108 = scmp.eq.s32.totalorder %s15, 0
    %p109 = por %p107, %p108
    %p110 = scmp.ne.s32.totalorder %s96, %s97
    %p111 = scmp.eq.s32.totalorder %s16, 1
    %p112 = por %p110, %p111
    %p114 = scmp.ne.s32.totalorder %s97, %s113
    %p115 = scmp.eq.s32.totalorder %s16, 0
    %p116 = por %p114, %p115
    %p117 = scmp.le.s32.totalorder 1, %s10
    %p118 = scmp.lt.s32.totalorder %s10, 3
    %p119 = pnand %p117, %p118
    %p120 = pneg %p119
    // Predicated region
    $region9: #{match_predictor_forward.10} parent=5 // pred_check
      _
    $region10: #{match_predictor_forward.10} parent=5 // pred_check_branch
      %122 = sbr.rel (%p119) target = $region12
    $region11: #{match_predictor_forward.10} parent=5 // pred_region
      %s123 = ssub.s32 %s10, 1
      // Predicated region
      $region13: #{match_predictor_forward.10} parent=11 // pred_check
        %p124 = pneg %p57
      $region14: #{match_predictor_forward.10} parent=11 // pred_check_branch
        %126 = sbr.rel (%p124) target = $region16
      $region15: #{match_predictor_forward.10} parent=11 // pred_region
        _
      $region16: #{match_predictor_forward.10} parent=11 // pred_fallthru
        _
    $region12: #{match_predictor_forward.10} parent=5 // pred_fallthru
      _
    %p127 = scmp.lt.s32.totalorder %s10, 2
    // Predicated region
    $region17: #{match_predictor_forward.10} parent=5 // pred_check
      %p128 = pneg %p127
    $region18: #{match_predictor_forward.10} parent=5 // pred_check_branch
      %130 = sbr.rel (%p128) target = $region20
    $region19: #{match_predictor_forward.10} parent=5 // pred_region
      // Predicated region
      $region21: #{match_predictor_forward.10} parent=19 // pred_check
        %p131 = pneg %p30
      $region22: #{match_predictor_forward.10} parent=19 // pred_check_branch
        %133 = sbr.rel (%p131) target = $region24
      $region23: #{match_predictor_forward.10} parent=19 // pred_region
        %s134 = smul.u32 8, %s10
        %p135 = scmp.lt.s32.totalorder %s134, 15
        %s136 = scalar_select %p135, %s134, 15
        %s137 = smul.addr %s136, 2
        %s138 = smul.addr %s137, 4
        %s139 = scalar_lea.vmem %s0, %s138
        %s140 = smul.u32 8, %s10
      $region24: #{match_predictor_forward.10} parent=19 // pred_fallthru
        _
    $region20: #{match_predictor_forward.10} parent=5 // pred_fallthru
      _
    %p141 = scmp.le.s32.totalorder 1, %s10
    %p142 = scmp.lt.s32.totalorder %s10, 3
    %p143 = pnand %p141, %p142
    %p144 = pneg %p143
    // Predicated region
    $region25: #{match_predictor_forward.10} parent=5 // pred_check
      _
    $region26: #{match_predictor_forward.10} parent=5 // pred_check_branch
      %146 = sbr.rel (%p143) target = $region28
    $region27: #{match_predictor_forward.10} parent=5 // pred_region
      %s147 = ssub.s32 %s10, 1
      %s148 = smul.u32 8, %s15
      %p149 = scmp.lt.s32.totalorder %s148, 15
      %s150 = scalar_select %p149, %s148, 15
      %s151 = smul.addr %s150, 2
      %s152 = smul.addr %s151, 4
      %s153 = scalar_lea.vmem %s0, %s152
      %p154 = pneg %p36
      %p155 = pneg %p33
      %p156 = pneg %p57
      %p157 = pneg %p54
      %p158 = pneg %p83
      %p159 = pneg %p80
      %s160 = smul.u32 8, %s15
      %p161 = scmp.lt.s32.totalorder %s160, 15
      %s162 = scalar_select %p161, %s160, 15
      %s163 = smul.addr %s162, 8
      %s164 = scalar_lea.vmem %s2, %s163
      %p165 = pneg %p109
      %p166 = pneg %p106
      %p167 = scmp.lt.s32.totalorder %s15, 1
      %s168 = scalar_select %p167, %s15, 1
      %s169 = smul.addr %s168, 2
      %s170 = scalar_lea.vmem %s3, %s169
      %s171 = smul.u32 8, %s15
      %p172 = scmp.lt.s32.totalorder %s171, 15
      %s173 = scalar_select %p172, %s171, 15
      %s174 = smul.addr %s173, 2
      %s175 = smul.addr %s174, 4
      %s176 = scalar_lea.vmem %s0, %s175
      %s177 = smul.u32 8, %s15
      %s178 = smul.u32 8, %s15
      %p179 = scmp.lt.s32.totalorder %s178, 15
      %s180 = scalar_select %p179, %s178, 15
      %s181 = smul.addr %s180, 8
      %s182 = scalar_lea.vmem %s2, %s181
      %s183 = smul.u32 8, %s15
      %p184 = scmp.lt.s32.totalorder %s15, 1
      %s185 = scalar_select %p184, %s15, 1
      %s186 = smul.addr %s185, 2
      %s187 = scalar_lea.vmem %s3, %s186
      %v188 = vld [vmem:[%s1] sm:$0xf]
      %v189 = vld [vmem:[%s1 + $0x4] sm:$0xf]
      %v190 = vld [vmem:[%s1 + $0x8] sm:$0xf]
      %v191 = vld [vmem:[%s1 + $0xc] sm:$0xf]
      %v192 = vld [vmem:[%s1 + $0x10] sm:$0xf]
      %v193 = vld [vmem:[%s1 + $0x14] sm:$0xf]
      %v194 = vld [vmem:[%s1 + $0x18] sm:$0xf]
      %v195 = vld [vmem:[%s1 + $0x1c] sm:$0xf]
      %v196 = vld [vmem:[%s1 + $0x20] sm:$0xf]
      %v197 = vld [vmem:[%s1 + $0x24] sm:$0xf]
      %v198 = vld [vmem:[%s1 + $0x28] sm:$0xf]
      %v199 = vld [vmem:[%s1 + $0x2c] sm:$0xf]
      %v200 = vld [vmem:[%s1 + $0x30] sm:$0xf]
      %v201 = vld [vmem:[%s1 + $0x34] sm:$0xf]
      %v202 = vld [vmem:[%s1 + $0x38] sm:$0xf]
      %s203 = scalar_lea.vmem %s1, 60
      %v204 = vld [vmem:[%s203] sm:$0xf]
      %v205 = vld [vmem:[%s203 + $0x4] sm:$0xf]
      %v206 = vld [vmem:[%s203 + $0x8] sm:$0xf]
      %v207 = vld [vmem:[%s203 + $0xc] sm:$0xf]
      %v208 = vld [vmem:[%s203 + $0x10] sm:$0xf]
      %v209 = vld [vmem:[%s203 + $0x14] sm:$0xf]
      %v210 = vld [vmem:[%s203 + $0x18] sm:$0xf]
      %v211 = vld [vmem:[%s203 + $0x1c] sm:$0xf]
      %v212 = vld [vmem:[%s203 + $0x20] sm:$0xf]
      %v213 = vld [vmem:[%s203 + $0x24] sm:$0xf]
      %v214 = vld [vmem:[%s203 + $0x28] sm:$0xf]
      %v215 = vld [vmem:[%s203 + $0x2c] sm:$0xf]
      %v216 = vld [vmem:[%s203 + $0x30] sm:$0xf]
      %v217 = vld [vmem:[%s203 + $0x34] sm:$0xf]
      %v218 = vld [vmem:[%s203 + $0x38] sm:$0xf]
      %s219 = scalar_lea.vmem %s1, 120
      %v220 = vld [vmem:[%s219] sm:$0xf]
      %v221 = vld [vmem:[%s219 + $0x4] sm:$0xf]
      %v222 = vld [vmem:[%s219 + $0x8] sm:$0xf]
      %v223 = vld [vmem:[%s219 + $0xc] sm:$0xf]
      %v224 = vld [vmem:[%s219 + $0x10] sm:$0xf]
      %v225 = vld [vmem:[%s219 + $0x14] sm:$0xf]
      %v226 = vld [vmem:[%s219 + $0x18] sm:$0xf]
      %v227 = vld [vmem:[%s219 + $0x1c] sm:$0xf]
      %v228 = vld [vmem:[%s219 + $0x20] sm:$0xf]
      %v229 = vld [vmem:[%s219 + $0x24] sm:$0xf]
      %v230 = vld [vmem:[%s219 + $0x28] sm:$0xf]
      %v231 = vld [vmem:[%s219 + $0x2c] sm:$0xf]
      %v232 = vld [vmem:[%s219 + $0x30] sm:$0xf]
      %v233 = vld [vmem:[%s219 + $0x34] sm:$0xf]
      %v234 = vld [vmem:[%s219 + $0x38] sm:$0xf]
      %v235 = vld [vmem:[%s176] sm:$0xf]
      %v236 = vld [vmem:[%s176 + $0x4] sm:$0x1]
      %v239 = vunpack.c.l.b16 %v235
      %v240 = vunpack.c.l.b16 %v236
      %v241 = vpack.c.b16 %v240, %v239
      %v243 = vshrl.u32 %v241, 16
      %v245 = vshll.u32 %v241, 16
      %v247 = vrot.slane %v245, 1
      %v248 = vor.u32 %v243, %v247
      %v264 = vunpack.c.l.b16 %v204
      %v265 = vunpack.c.l.b16 %v205
      %v266 = vunpack.c.l.b16 %v206
      %v267 = vunpack.c.l.b16 %v207
      %v268 = vunpack.c.l.b16 %v208
      %v269 = vunpack.c.l.b16 %v209
      %v270 = vunpack.c.l.b16 %v210
      %v271 = vunpack.c.l.b16 %v211
      %v272 = vunpack.c.l.b16 %v212
      %v273 = vunpack.c.l.b16 %v213
      %v274 = vunpack.c.l.b16 %v214
      %v275 = vunpack.c.l.b16 %v215
      %v276 = vunpack.c.l.b16 %v216
      %v277 = vunpack.c.l.b16 %v217
      %v278 = vunpack.c.l.b16 %v218
      %v279 = vpack.c.b16 %v265, %v264
      %v280 = vpack.c.b16 %v267, %v266
      %v281 = vpack.c.b16 %v269, %v268
      %v282 = vpack.c.b16 %v271, %v270
      %v283 = vpack.c.b16 %v273, %v272
      %v284 = vpack.c.b16 %v275, %v274
      %v285 = vpack.c.b16 %v277, %v276
      %v286 = vpack.c.b16 %v278, %v278
      %vm294 = vcmask 982016
      %v296 = vsel %vm294, %v248, 0
      %vm298 = vcmask 1043456
      %v300 = vsel %vm298, %v286, 0
      %302 = vmatpush.bf16.msra.mxu0 %v300
      %303 = vmatpush.bf16.msra.mxu0 %v285
      %304 = vmatpush.bf16.msra.mxu0 %v284
      %305 = vmatpush.bf16.msra.mxu0 %v283
      %306 = vmatpush.bf16.msra.mxu0 %v282
      %307 = vmatpush.bf16.msra.mxu0 %v281
      %308 = vmatpush.bf16.msra.mxu0 %v280
      %309 = vmatpush.bf16.msra.mxu0 %v279
      %310 = vmatmul.bf16.gmra.mxu0 %v296
      %v311 = vpop.f32.mrf.mxu0
      %v312 = vadd.f32 0.0, %v311
      %v313 = vpop.f32.mrf.mxu0
      %314 = vdwg.mxu0
      %v330 = vunpack.c.l.b16 %v188
      %v331 = vunpack.c.l.b16 %v189
      %v332 = vunpack.c.l.b16 %v190
      %v333 = vunpack.c.l.b16 %v191
      %v334 = vunpack.c.l.b16 %v192
      %v335 = vunpack.c.l.b16 %v193
      %v336 = vunpack.c.l.b16 %v194
      %v337 = vunpack.c.l.b16 %v195
      %v338 = vunpack.c.l.b16 %v196
      %v339 = vunpack.c.l.b16 %v197
      %v340 = vunpack.c.l.b16 %v198
      %v341 = vunpack.c.l.b16 %v199
      %v342 = vunpack.c.l.b16 %v200
      %v343 = vunpack.c.l.b16 %v201
      %v344 = vunpack.c.l.b16 %v202
      %v345 = vpack.c.b16 %v331, %v330
      %v346 = vpack.c.b16 %v333, %v332
      %v347 = vpack.c.b16 %v335, %v334
      %v348 = vpack.c.b16 %v337, %v336
      %v349 = vpack.c.b16 %v339, %v338
      %v350 = vpack.c.b16 %v341, %v340
      %v351 = vpack.c.b16 %v343, %v342
      %v352 = vpack.c.b16 %v344, %v344
      %v361 = vsel %vm294, %v235, 0
      %v364 = vsel %vm298, %v352, 0
      %366 = vmatpush.bf16.msra.mxu0 %v364
      %367 = vmatpush.bf16.msra.mxu0 %v351
      %368 = vmatpush.bf16.msra.mxu0 %v350
      %369 = vmatpush.bf16.msra.mxu0 %v349
      %370 = vmatpush.bf16.msra.mxu0 %v348
      %371 = vmatpush.bf16.msra.mxu0 %v347
      %372 = vmatpush.bf16.msra.mxu0 %v346
      %373 = vmatpush.bf16.msra.mxu0 %v345
      %374 = vmatmul.bf16.gmra.mxu0 %v361
      %v375 = vpop.f32.mrf.mxu0
      %v376 = vadd.f32 %v312, %v375
      %v377 = vpop.f32.mrf.mxu0
      %378 = vdwg.mxu0
      %v379 = vrot.slane %v241, 1
      %v395 = vunpack.c.l.b16 %v220
      %v396 = vunpack.c.l.b16 %v221
      %v397 = vunpack.c.l.b16 %v222
      %v398 = vunpack.c.l.b16 %v223
      %v399 = vunpack.c.l.b16 %v224
      %v400 = vunpack.c.l.b16 %v225
      %v401 = vunpack.c.l.b16 %v226
      %v402 = vunpack.c.l.b16 %v227
      %v403 = vunpack.c.l.b16 %v228
      %v404 = vunpack.c.l.b16 %v229
      %v405 = vunpack.c.l.b16 %v230
      %v406 = vunpack.c.l.b16 %v231
      %v407 = vunpack.c.l.b16 %v232
      %v408 = vunpack.c.l.b16 %v233
      %v409 = vunpack.c.l.b16 %v234
      %v410 = vpack.c.b16 %v396, %v395
      %v411 = vpack.c.b16 %v398, %v397
      %v412 = vpack.c.b16 %v400, %v399
      %v413 = vpack.c.b16 %v402, %v401
      %v414 = vpack.c.b16 %v404, %v403
      %v415 = vpack.c.b16 %v406, %v405
      %v416 = vpack.c.b16 %v408, %v407
      %v417 = vpack.c.b16 %v409, %v409
      %v426 = vsel %vm294, %v379, 0
      %v429 = vsel %vm298, %v417, 0
      %431 = vmatpush.bf16.msra.mxu0 %v429
      %432 = vmatpush.bf16.msra.mxu0 %v416
      %433 = vmatpush.bf16.msra.mxu0 %v415
      %434 = vmatpush.bf16.msra.mxu0 %v414
      %435 = vmatpush.bf16.msra.mxu0 %v413
      %436 = vmatpush.bf16.msra.mxu0 %v412
      %437 = vmatpush.bf16.msra.mxu0 %v411
      %438 = vmatpush.bf16.msra.mxu0 %v410
      %439 = vmatmul.bf16.gmra.mxu0 %v426
      %v440 = vpop.f32.mrf.mxu0
      %v441 = vadd.f32 0.0, %v440
      %v442 = vpop.f32.mrf.mxu0
      %443 = vdwg.mxu0
      %v444 = vadd.f32 %v376, %v441
      %vm445 = vcmask 326656
      %446 = vst.msk [vmem:[%s182] sm:$0xff] %vm445, %v444
      %v447 = vsel %vm445, %v444, 0.0
      %v448 = vrot.slane %v447, 4
      %v449 = vadd.f32 %v447, %v448
      %v450 = vrot.slane %v449, 2
      %v451 = vadd.f32 %v449, %v450
      %v452 = vrot.slane %v451, 1
      %v453 = vadd.f32 %v451, %v452
      %v454 = vadd.f32 %v453, 0.0
      %v455 = vmul.f32 %v444, %v444
      %v456 = vsel %vm445, %v455, 0.0
      %v457 = vrot.slane %v456, 4
      %v458 = vadd.f32 %v456, %v457
      %v459 = vrot.slane %v458, 2
      %v460 = vadd.f32 %v458, %v459
      %v461 = vrot.slane %v460, 1
      %v462 = vadd.f32 %v460, %v461
      %v463 = vadd.f32 %v462, 0.0
      %s464 = scalar_lea.vmem %s176, 8
      %v465 = vld [vmem:[%s464] sm:$0xf]
      %v466 = vld [vmem:[%s464 + $0x4] sm:$0x1]
      %v469 = vunpack.c.l.b16 %v465
      %v470 = vunpack.c.l.b16 %v466
      %v471 = vpack.c.b16 %v470, %v469
      %v473 = vshrl.u32 %v471, 16
      %v475 = vshll.u32 %v471, 16
      %v477 = vrot.slane %v475, 1
      %v478 = vor.u32 %v473, %v477
      %v480 = vsel %vm294, %v478, 0
      %482 = vmatpush.bf16.msra.mxu0 %v300
      %483 = vmatpush.bf16.msra.mxu0 %v285
      %484 = vmatpush.bf16.msra.mxu0 %v284
      %485 = vmatpush.bf16.msra.mxu0 %v283
      %486 = vmatpush.bf16.msra.mxu0 %v282
      %487 = vmatpush.bf16.msra.mxu0 %v281
      %488 = vmatpush.bf16.msra.mxu0 %v280
      %489 = vmatpush.bf16.msra.mxu0 %v279
      %490 = vmatmul.bf16.gmra.mxu0 %v480
      %v491 = vpop.f32.mrf.mxu0
      %v492 = vadd.f32 0.0, %v491
      %v493 = vpop.f32.mrf.mxu0
      %494 = vdwg.mxu0
      %v496 = vsel %vm294, %v465, 0
      %498 = vmatpush.bf16.msra.mxu0 %v364
      %499 = vmatpush.bf16.msra.mxu0 %v351
      %500 = vmatpush.bf16.msra.mxu0 %v350
      %501 = vmatpush.bf16.msra.mxu0 %v349
      %502 = vmatpush.bf16.msra.mxu0 %v348
      %503 = vmatpush.bf16.msra.mxu0 %v347
      %504 = vmatpush.bf16.msra.mxu0 %v346
      %505 = vmatpush.bf16.msra.mxu0 %v345
      %506 = vmatmul.bf16.gmra.mxu0 %v496
      %v507 = vpop.f32.mrf.mxu0
      %v508 = vadd.f32 %v492, %v507
      %v509 = vpop.f32.mrf.mxu0
      %510 = vdwg.mxu0
      %v511 = vrot.slane %v471, 1
      %v513 = vsel %vm294, %v511, 0
      %515 = vmatpush.bf16.msra.mxu0 %v429
      %516 = vmatpush.bf16.msra.mxu0 %v416
      %517 = vmatpush.bf16.msra.mxu0 %v415
      %518 = vmatpush.bf16.msra.mxu0 %v414
      %519 = vmatpush.bf16.msra.mxu0 %v413
      %520 = vmatpush.bf16.msra.mxu0 %v412
      %521 = vmatpush.bf16.msra.mxu0 %v411
      %522 = vmatpush.bf16.msra.mxu0 %v410
      %523 = vmatmul.bf16.gmra.mxu0 %v513
      %v524 = vpop.f32.mrf.mxu0
      %v525 = vadd.f32 0.0, %v524
      %v526 = vpop.f32.mrf.mxu0
      %527 = vdwg.mxu0
      %v528 = vadd.f32 %v508, %v525
      %s529 = scalar_lea.vmem %s182, 8
      %530 = vst.msk [vmem:[%s529] sm:$0xff] %vm445, %v528
      %v531 = vsel %vm445, %v528, 0.0
      %v532 = vrot.slane %v531, 4
      %v533 = vadd.f32 %v531, %v532
      %v534 = vrot.slane %v533, 2
      %v535 = vadd.f32 %v533, %v534
      %v536 = vrot.slane %v535, 1
      %v537 = vadd.f32 %v535, %v536
      %v538 = vadd.f32 %v454, %v537
      %v539 = vmul.f32 %v528, %v528
      %v540 = vsel %vm445, %v539, 0.0
      %v541 = vrot.slane %v540, 4
      %v542 = vadd.f32 %v540, %v541
      %v543 = vrot.slane %v542, 2
      %v544 = vadd.f32 %v542, %v543
      %v545 = vrot.slane %v544, 1
      %v546 = vadd.f32 %v544, %v545
      %v547 = vadd.f32 %v463, %v546
      %s548 = scalar_lea.vmem %s176, 16
      %v549 = vld [vmem:[%s548] sm:$0xf]
      %v550 = vld [vmem:[%s548 + $0x4] sm:$0x1]
      %v553 = vunpack.c.l.b16 %v549
      %v554 = vunpack.c.l.b16 %v550
      %v555 = vpack.c.b16 %v554, %v553
      %v557 = vshrl.u32 %v555, 16
      %v559 = vshll.u32 %v555, 16
      %v561 = vrot.slane %v559, 1
      %v562 = vor.u32 %v557, %v561
      %v564 = vsel %vm294, %v562, 0
      %566 = vmatpush.bf16.msra.mxu0 %v300
      %567 = vmatpush.bf16.msra.mxu0 %v285
      %568 = vmatpush.bf16.msra.mxu0 %v284
      %569 = vmatpush.bf16.msra.mxu0 %v283
      %570 = vmatpush.bf16.msra.mxu0 %v282
      %571 = vmatpush.bf16.msra.mxu0 %v281
      %572 = vmatpush.bf16.msra.mxu0 %v280
      %573 = vmatpush.bf16.msra.mxu0 %v279
      %574 = vmatmul.bf16.gmra.mxu0 %v564
      %v575 = vpop.f32.mrf.mxu0
      %v576 = vadd.f32 0.0, %v575
      %v577 = vpop.f32.mrf.mxu0
      %578 = vdwg.mxu0
      %v580 = vsel %vm294, %v549, 0
      %582 = vmatpush.bf16.msra.mxu0 %v364
      %583 = vmatpush.bf16.msra.mxu0 %v351
      %584 = vmatpush.bf16.msra.mxu0 %v350
      %585 = vmatpush.bf16.msra.mxu0 %v349
      %586 = vmatpush.bf16.msra.mxu0 %v348
      %587 = vmatpush.bf16.msra.mxu0 %v347
      %588 = vmatpush.bf16.msra.mxu0 %v346
      %589 = vmatpush.bf16.msra.mxu0 %v345
      %590 = vmatmul.bf16.gmra.mxu0 %v580
      %v591 = vpop.f32.mrf.mxu0
      %v592 = vadd.f32 %v576, %v591
      %v593 = vpop.f32.mrf.mxu0
      %594 = vdwg.mxu0
      %v595 = vrot.slane %v555, 1
      %v597 = vsel %vm294, %v595, 0
      %599 = vmatpush.bf16.msra.mxu0 %v429
      %600 = vmatpush.bf16.msra.mxu0 %v416
      %601 = vmatpush.bf16.msra.mxu0 %v415
      %602 = vmatpush.bf16.msra.mxu0 %v414
      %603 = vmatpush.bf16.msra.mxu0 %v413
      %604 = vmatpush.bf16.msra.mxu0 %v412
      %605 = vmatpush.bf16.msra.mxu0 %v411
      %606 = vmatpush.bf16.msra.mxu0 %v410
      %607 = vmatmul.bf16.gmra.mxu0 %v597
      %v608 = vpop.f32.mrf.mxu0
      %v609 = vadd.f32 0.0, %v608
      %v610 = vpop.f32.mrf.mxu0
      %611 = vdwg.mxu0
      %v612 = vadd.f32 %v592, %v609
      %s613 = scalar_lea.vmem %s182, 16
      %614 = vst.msk [vmem:[%s613] sm:$0xff] %vm445, %v612
      %v615 = vsel %vm445, %v612, 0.0
      %v616 = vrot.slane %v615, 4
      %v617 = vadd.f32 %v615, %v616
      %v618 = vrot.slane %v617, 2
      %v619 = vadd.f32 %v617, %v618
      %v620 = vrot.slane %v619, 1
      %v621 = vadd.f32 %v619, %v620
      %v622 = vadd.f32 %v538, %v621
      %v623 = vmul.f32 %v612, %v612
      %v624 = vsel %vm445, %v623, 0.0
      %v625 = vrot.slane %v624, 4
      %v626 = vadd.f32 %v624, %v625
      %v627 = vrot.slane %v626, 2
      %v628 = vadd.f32 %v626, %v627
      %v629 = vrot.slane %v628, 1
      %v630 = vadd.f32 %v628, %v629
      %v631 = vadd.f32 %v547, %v630
      %s632 = scalar_lea.vmem %s176, 24
      %v633 = vld [vmem:[%s632] sm:$0xf]
      %v634 = vld [vmem:[%s632 + $0x4] sm:$0x1]
      %v637 = vunpack.c.l.b16 %v633
      %v638 = vunpack.c.l.b16 %v634
      %v639 = vpack.c.b16 %v638, %v637
      %v641 = vshrl.u32 %v639, 16
      %v643 = vshll.u32 %v639, 16
      %v645 = vrot.slane %v643, 1
      %v646 = vor.u32 %v641, %v645
      %v648 = vsel %vm294, %v646, 0
      %650 = vmatpush.bf16.msra.mxu0 %v300
      %651 = vmatpush.bf16.msra.mxu0 %v285
      %652 = vmatpush.bf16.msra.mxu0 %v284
      %653 = vmatpush.bf16.msra.mxu0 %v283
      %654 = vmatpush.bf16.msra.mxu0 %v282
      %655 = vmatpush.bf16.msra.mxu0 %v281
      %656 = vmatpush.bf16.msra.mxu0 %v280
      %657 = vmatpush.bf16.msra.mxu0 %v279
      %658 = vmatmul.bf16.gmra.mxu0 %v648
      %v659 = vpop.f32.mrf.mxu0
      %v660 = vadd.f32 0.0, %v659
      %v661 = vpop.f32.mrf.mxu0
      %662 = vdwg.mxu0
      %v664 = vsel %vm294, %v633, 0
      %666 = vmatpush.bf16.msra.mxu0 %v364
      %667 = vmatpush.bf16.msra.mxu0 %v351
      %668 = vmatpush.bf16.msra.mxu0 %v350
      %669 = vmatpush.bf16.msra.mxu0 %v349
      %670 = vmatpush.bf16.msra.mxu0 %v348
      %671 = vmatpush.bf16.msra.mxu0 %v347
      %672 = vmatpush.bf16.msra.mxu0 %v346
      %673 = vmatpush.bf16.msra.mxu0 %v345
      %674 = vmatmul.bf16.gmra.mxu0 %v664
      %v675 = vpop.f32.mrf.mxu0
      %v676 = vadd.f32 %v660, %v675
      %v677 = vpop.f32.mrf.mxu0
      %678 = vdwg.mxu0
      %v679 = vrot.slane %v639, 1
      %v681 = vsel %vm294, %v679, 0
      %683 = vmatpush.bf16.msra.mxu0 %v429
      %684 = vmatpush.bf16.msra.mxu0 %v416
      %685 = vmatpush.bf16.msra.mxu0 %v415
      %686 = vmatpush.bf16.msra.mxu0 %v414
      %687 = vmatpush.bf16.msra.mxu0 %v413
      %688 = vmatpush.bf16.msra.mxu0 %v412
      %689 = vmatpush.bf16.msra.mxu0 %v411
      %690 = vmatpush.bf16.msra.mxu0 %v410
      %691 = vmatmul.bf16.gmra.mxu0 %v681
      %v692 = vpop.f32.mrf.mxu0
      %v693 = vadd.f32 0.0, %v692
      %v694 = vpop.f32.mrf.mxu0
      %695 = vdwg.mxu0
      %v696 = vadd.f32 %v676, %v693
      %s697 = scalar_lea.vmem %s182, 24
      %698 = vst.msk [vmem:[%s697] sm:$0xff] %vm445, %v696
      %v699 = vsel %vm445, %v696, 0.0
      %v700 = vrot.slane %v699, 4
      %v701 = vadd.f32 %v699, %v700
      %v702 = vrot.slane %v701, 2
      %v703 = vadd.f32 %v701, %v702
      %v704 = vrot.slane %v703, 1
      %v705 = vadd.f32 %v703, %v704
      %v706 = vadd.f32 %v622, %v705
      %v707 = vmul.f32 %v696, %v696
      %v708 = vsel %vm445, %v707, 0.0
      %v709 = vrot.slane %v708, 4
      %v710 = vadd.f32 %v708, %v709
      %v711 = vrot.slane %v710, 2
      %v712 = vadd.f32 %v710, %v711
      %v713 = vrot.slane %v712, 1
      %v714 = vadd.f32 %v712, %v713
      %v715 = vadd.f32 %v631, %v714
      %s716 = scalar_lea.vmem %s176, 32
      %v717 = vld [vmem:[%s716] sm:$0xf]
      %v718 = vld [vmem:[%s716 + $0x4] sm:$0x1]
      %v721 = vunpack.c.l.b16 %v717
      %v722 = vunpack.c.l.b16 %v718
      %v723 = vpack.c.b16 %v722, %v721
      %v725 = vshrl.u32 %v723, 16
      %v727 = vshll.u32 %v723, 16
      %v729 = vrot.slane %v727, 1
      %v730 = vor.u32 %v725, %v729
      %v732 = vsel %vm294, %v730, 0
      %734 = vmatpush.bf16.msra.mxu0 %v300
      %735 = vmatpush.bf16.msra.mxu0 %v285
      %736 = vmatpush.bf16.msra.mxu0 %v284
      %737 = vmatpush.bf16.msra.mxu0 %v283
      %738 = vmatpush.bf16.msra.mxu0 %v282
      %739 = vmatpush.bf16.msra.mxu0 %v281
      %740 = vmatpush.bf16.msra.mxu0 %v280
      %741 = vmatpush.bf16.msra.mxu0 %v279
      %742 = vmatmul.bf16.gmra.mxu0 %v732
      %v743 = vpop.f32.mrf.mxu0
      %v744 = vadd.f32 0.0, %v743
      %v745 = vpop.f32.mrf.mxu0
      %746 = vdwg.mxu0
      %v748 = vsel %vm294, %v717, 0
      %750 = vmatpush.bf16.msra.mxu0 %v364
      %751 = vmatpush.bf16.msra.mxu0 %v351
      %752 = vmatpush.bf16.msra.mxu0 %v350
      %753 = vmatpush.bf16.msra.mxu0 %v349
      %754 = vmatpush.bf16.msra.mxu0 %v348
      %755 = vmatpush.bf16.msra.mxu0 %v347
      %756 = vmatpush.bf16.msra.mxu0 %v346
      %757 = vmatpush.bf16.msra.mxu0 %v345
      %758 = vmatmul.bf16.gmra.mxu0 %v748
      %v759 = vpop.f32.mrf.mxu0
      %v760 = vadd.f32 %v744, %v759
      %v761 = vpop.f32.mrf.mxu0
      %762 = vdwg.mxu0
      %v763 = vrot.slane %v723, 1
      %v765 = vsel %vm294, %v763, 0
      %767 = vmatpush.bf16.msra.mxu0 %v429
      %768 = vmatpush.bf16.msra.mxu0 %v416
      %769 = vmatpush.bf16.msra.mxu0 %v415
      %770 = vmatpush.bf16.msra.mxu0 %v414
      %771 = vmatpush.bf16.msra.mxu0 %v413
      %772 = vmatpush.bf16.msra.mxu0 %v412
      %773 = vmatpush.bf16.msra.mxu0 %v411
      %774 = vmatpush.bf16.msra.mxu0 %v410
      %775 = vmatmul.bf16.gmra.mxu0 %v765
      %v776 = vpop.f32.mrf.mxu0
      %v777 = vadd.f32 0.0, %v776
      %v778 = vpop.f32.mrf.mxu0
      %779 = vdwg.mxu0
      %v780 = vadd.f32 %v760, %v777
      %s781 = scalar_lea.vmem %s182, 32
      %782 = vst.msk [vmem:[%s781] sm:$0xff] %vm445, %v780
      %v783 = vsel %vm445, %v780, 0.0
      %v784 = vrot.slane %v783, 4
      %v785 = vadd.f32 %v783, %v784
      %v786 = vrot.slane %v785, 2
      %v787 = vadd.f32 %v785, %v786
      %v788 = vrot.slane %v787, 1
      %v789 = vadd.f32 %v787, %v788
      %v790 = vadd.f32 %v706, %v789
      %v791 = vmul.f32 %v780, %v780
      %v792 = vsel %vm445, %v791, 0.0
      %v793 = vrot.slane %v792, 4
      %v794 = vadd.f32 %v792, %v793
      %v795 = vrot.slane %v794, 2
      %v796 = vadd.f32 %v794, %v795
      %v797 = vrot.slane %v796, 1
      %v798 = vadd.f32 %v796, %v797
      %v799 = vadd.f32 %v715, %v798
      %s800 = scalar_lea.vmem %s176, 40
      %v801 = vld [vmem:[%s800] sm:$0xf]
      %v802 = vld [vmem:[%s800 + $0x4] sm:$0x1]
      %v805 = vunpack.c.l.b16 %v801
      %v806 = vunpack.c.l.b16 %v802
      %v807 = vpack.c.b16 %v806, %v805
      %v809 = vshrl.u32 %v807, 16
      %v811 = vshll.u32 %v807, 16
      %v813 = vrot.slane %v811, 1
      %v814 = vor.u32 %v809, %v813
      %v816 = vsel %vm294, %v814, 0
      %818 = vmatpush.bf16.msra.mxu0 %v300
      %819 = vmatpush.bf16.msra.mxu0 %v285
      %820 = vmatpush.bf16.msra.mxu0 %v284
      %821 = vmatpush.bf16.msra.mxu0 %v283
      %822 = vmatpush.bf16.msra.mxu0 %v282
      %823 = vmatpush.bf16.msra.mxu0 %v281
      %824 = vmatpush.bf16.msra.mxu0 %v280
      %825 = vmatpush.bf16.msra.mxu0 %v279
      %826 = vmatmul.bf16.gmra.mxu0 %v816
      %v827 = vpop.f32.mrf.mxu0
      %v828 = vadd.f32 0.0, %v827
      %v829 = vpop.f32.mrf.mxu0
      %830 = vdwg.mxu0
      %v832 = vsel %vm294, %v801, 0
      %834 = vmatpush.bf16.msra.mxu0 %v364
      %835 = vmatpush.bf16.msra.mxu0 %v351
      %836 = vmatpush.bf16.msra.mxu0 %v350
      %837 = vmatpush.bf16.msra.mxu0 %v349
      %838 = vmatpush.bf16.msra.mxu0 %v348
      %839 = vmatpush.bf16.msra.mxu0 %v347
      %840 = vmatpush.bf16.msra.mxu0 %v346
      %841 = vmatpush.bf16.msra.mxu0 %v345
      %842 = vmatmul.bf16.gmra.mxu0 %v832
      %v843 = vpop.f32.mrf.mxu0
      %v844 = vadd.f32 %v828, %v843
      %v845 = vpop.f32.mrf.mxu0
      %846 = vdwg.mxu0
      %v847 = vrot.slane %v807, 1
      %v849 = vsel %vm294, %v847, 0
      %851 = vmatpush.bf16.msra.mxu0 %v429
      %852 = vmatpush.bf16.msra.mxu0 %v416
      %853 = vmatpush.bf16.msra.mxu0 %v415
      %854 = vmatpush.bf16.msra.mxu0 %v414
      %855 = vmatpush.bf16.msra.mxu0 %v413
      %856 = vmatpush.bf16.msra.mxu0 %v412
      %857 = vmatpush.bf16.msra.mxu0 %v411
      %858 = vmatpush.bf16.msra.mxu0 %v410
      %859 = vmatmul.bf16.gmra.mxu0 %v849
      %v860 = vpop.f32.mrf.mxu0
      %v861 = vadd.f32 0.0, %v860
      %v862 = vpop.f32.mrf.mxu0
      %863 = vdwg.mxu0
      %v864 = vadd.f32 %v844, %v861
      %s865 = scalar_lea.vmem %s182, 40
      %866 = vst.msk [vmem:[%s865] sm:$0xff] %vm445, %v864
      %v867 = vsel %vm445, %v864, 0.0
      %v868 = vrot.slane %v867, 4
      %v869 = vadd.f32 %v867, %v868
      %v870 = vrot.slane %v869, 2
      %v871 = vadd.f32 %v869, %v870
      %v872 = vrot.slane %v871, 1
      %v873 = vadd.f32 %v871, %v872
      %v874 = vadd.f32 %v790, %v873
      %v875 = vmul.f32 %v864, %v864
      %v876 = vsel %vm445, %v875, 0.0
      %v877 = vrot.slane %v876, 4
      %v878 = vadd.f32 %v876, %v877
      %v879 = vrot.slane %v878, 2
      %v880 = vadd.f32 %v878, %v879
      %v881 = vrot.slane %v880, 1
      %v882 = vadd.f32 %v880, %v881
      %v883 = vadd.f32 %v799, %v882
      %s884 = scalar_lea.vmem %s176, 48
      %v885 = vld [vmem:[%s884] sm:$0xf]
      %v886 = vld [vmem:[%s884 + $0x4] sm:$0x1]
      %v889 = vunpack.c.l.b16 %v885
      %v890 = vunpack.c.l.b16 %v886
      %v891 = vpack.c.b16 %v890, %v889
      %v893 = vshrl.u32 %v891, 16
      %v895 = vshll.u32 %v891, 16
      %v897 = vrot.slane %v895, 1
      %v898 = vor.u32 %v893, %v897
      %v900 = vsel %vm294, %v898, 0
      %902 = vmatpush.bf16.msra.mxu0 %v300
      %903 = vmatpush.bf16.msra.mxu0 %v285
      %904 = vmatpush.bf16.msra.mxu0 %v284
      %905 = vmatpush.bf16.msra.mxu0 %v283
      %906 = vmatpush.bf16.msra.mxu0 %v282
      %907 = vmatpush.bf16.msra.mxu0 %v281
      %908 = vmatpush.bf16.msra.mxu0 %v280
      %909 = vmatpush.bf16.msra.mxu0 %v279
      %910 = vmatmul.bf16.gmra.mxu0 %v900
      %v911 = vpop.f32.mrf.mxu0
      %v912 = vadd.f32 0.0, %v911
      %v913 = vpop.f32.mrf.mxu0
      %914 = vdwg.mxu0
      %v916 = vsel %vm294, %v885, 0
      %918 = vmatpush.bf16.msra.mxu0 %v364
      %919 = vmatpush.bf16.msra.mxu0 %v351
      %920 = vmatpush.bf16.msra.mxu0 %v350
      %921 = vmatpush.bf16.msra.mxu0 %v349
      %922 = vmatpush.bf16.msra.mxu0 %v348
      %923 = vmatpush.bf16.msra.mxu0 %v347
      %924 = vmatpush.bf16.msra.mxu0 %v346
      %925 = vmatpush.bf16.msra.mxu0 %v345
      %926 = vmatmul.bf16.gmra.mxu0 %v916
      %v927 = vpop.f32.mrf.mxu0
      %v928 = vadd.f32 %v912, %v927
      %v929 = vpop.f32.mrf.mxu0
      %930 = vdwg.mxu0
      %v931 = vrot.slane %v891, 1
      %v933 = vsel %vm294, %v931, 0
      %935 = vmatpush.bf16.msra.mxu0 %v429
      %936 = vmatpush.bf16.msra.mxu0 %v416
      %937 = vmatpush.bf16.msra.mxu0 %v415
      %938 = vmatpush.bf16.msra.mxu0 %v414
      %939 = vmatpush.bf16.msra.mxu0 %v413
      %940 = vmatpush.bf16.msra.mxu0 %v412
      %941 = vmatpush.bf16.msra.mxu0 %v411
      %942 = vmatpush.bf16.msra.mxu0 %v410
      %943 = vmatmul.bf16.gmra.mxu0 %v933
      %v944 = vpop.f32.mrf.mxu0
      %v945 = vadd.f32 0.0, %v944
      %v946 = vpop.f32.mrf.mxu0
      %947 = vdwg.mxu0
      %v948 = vadd.f32 %v928, %v945
      %s949 = scalar_lea.vmem %s182, 48
      %950 = vst.msk [vmem:[%s949] sm:$0xff] %vm445, %v948
      %v951 = vsel %vm445, %v948, 0.0
      %v952 = vrot.slane %v951, 4
      %v953 = vadd.f32 %v951, %v952
      %v954 = vrot.slane %v953, 2
      %v955 = vadd.f32 %v953, %v954
      %v956 = vrot.slane %v955, 1
      %v957 = vadd.f32 %v955, %v956
      %v958 = vadd.f32 %v874, %v957
      %v959 = vmul.f32 %v948, %v948
      %v960 = vsel %vm445, %v959, 0.0
      %v961 = vrot.slane %v960, 4
      %v962 = vadd.f32 %v960, %v961
      %v963 = vrot.slane %v962, 2
      %v964 = vadd.f32 %v962, %v963
      %v965 = vrot.slane %v964, 1
      %v966 = vadd.f32 %v964, %v965
      %v967 = vadd.f32 %v883, %v966
      %s968 = scalar_lea.vmem %s176, 56
      %v969 = vld [vmem:[%s968] sm:$0xf]
      %v970 = vld [vmem:[%s968 + $0x4] sm:$0x1]
      %v973 = vunpack.c.l.b16 %v969
      %v974 = vunpack.c.l.b16 %v970
      %v975 = vpack.c.b16 %v974, %v973
      %v977 = vshrl.u32 %v975, 16
      %v979 = vshll.u32 %v975, 16
      %v981 = vrot.slane %v979, 1
      %v982 = vor.u32 %v977, %v981
      %v984 = vsel %vm294, %v982, 0
      %986 = vmatpush.bf16.msra.mxu0 %v300
      %987 = vmatpush.bf16.msra.mxu0 %v285
      %988 = vmatpush.bf16.msra.mxu0 %v284
      %989 = vmatpush.bf16.msra.mxu0 %v283
      %990 = vmatpush.bf16.msra.mxu0 %v282
      %991 = vmatpush.bf16.msra.mxu0 %v281
      %992 = vmatpush.bf16.msra.mxu0 %v280
      %993 = vmatpush.bf16.msra.mxu0 %v279
      %994 = vmatmul.bf16.gmra.mxu0 %v984
      %v995 = vpop.f32.mrf.mxu0
      %v996 = vadd.f32 0.0, %v995
      %v997 = vpop.f32.mrf.mxu0
      %998 = vdwg.mxu0
      %v1000 = vsel %vm294, %v969, 0
      %1002 = vmatpush.bf16.msra.mxu0 %v364
      %1003 = vmatpush.bf16.msra.mxu0 %v351
      %1004 = vmatpush.bf16.msra.mxu0 %v350
      %1005 = vmatpush.bf16.msra.mxu0 %v349
      %1006 = vmatpush.bf16.msra.mxu0 %v348
      %1007 = vmatpush.bf16.msra.mxu0 %v347
      %1008 = vmatpush.bf16.msra.mxu0 %v346
      %1009 = vmatpush.bf16.msra.mxu0 %v345
      %1010 = vmatmul.bf16.gmra.mxu0 %v1000
      %v1011 = vpop.f32.mrf.mxu0
      %v1012 = vadd.f32 %v996, %v1011
      %v1013 = vpop.f32.mrf.mxu0
      %1014 = vdwg.mxu0
      %v1015 = vrot.slane %v975, 1
      %v1017 = vsel %vm294, %v1015, 0
      %1019 = vmatpush.bf16.msra.mxu0 %v429
      %1020 = vmatpush.bf16.msra.mxu0 %v416
      %1021 = vmatpush.bf16.msra.mxu0 %v415
      %1022 = vmatpush.bf16.msra.mxu0 %v414
      %1023 = vmatpush.bf16.msra.mxu0 %v413
      %1024 = vmatpush.bf16.msra.mxu0 %v412
      %1025 = vmatpush.bf16.msra.mxu0 %v411
      %1026 = vmatpush.bf16.msra.mxu0 %v410
      %1027 = vmatmul.bf16.gmra.mxu0 %v1017
      %v1028 = vpop.f32.mrf.mxu0
      %v1029 = vadd.f32 0.0, %v1028
      %v1030 = vpop.f32.mrf.mxu0
      %1031 = vdwg.mxu0
      %v1032 = vadd.f32 %v1012, %v1029
      %s1033 = scalar_lea.vmem %s182, 56
      %1034 = vst.msk [vmem:[%s1033] sm:$0xff] %vm445, %v1032
      %v1035 = vsel %vm445, %v1032, 0.0
      %v1036 = vrot.slane %v1035, 4
      %v1037 = vadd.f32 %v1035, %v1036
      %v1038 = vrot.slane %v1037, 2
      %v1039 = vadd.f32 %v1037, %v1038
      %v1040 = vrot.slane %v1039, 1
      %v1041 = vadd.f32 %v1039, %v1040
      %v1042 = vadd.f32 %v958, %v1041
      %v1043 = vmul.f32 %v1032, %v1032
      %v1044 = vsel %vm445, %v1043, 0.0
      %v1045 = vrot.slane %v1044, 4
      %v1046 = vadd.f32 %v1044, %v1045
      %v1047 = vrot.slane %v1046, 2
      %v1048 = vadd.f32 %v1046, %v1047
      %v1049 = vrot.slane %v1048, 1
      %v1050 = vadd.f32 %v1048, %v1049
      %v1051 = vadd.f32 %v967, %v1050
      %vm1052 = vcmask 1040384
      %v1053 = vsel %vm1052, %v1042, %v1051
      %vm1054 = vcmask 320512
      %1055 = vst.msk [vmem:[%s187] sm:$0x3] %vm1054, %v1053
      %s1056 = smul.u32 8, %s15
      %p1057 = scmp.lt.s32.totalorder %s1056, 15
      %s1058 = scalar_select %p1057, %s1056, 15
      %s1059 = smul.addr %s1058, 8
      %s1060 = scalar_lea.vmem %s2, %s1059
      %p1061 = scmp.lt.s32.totalorder %s15, 1
      %s1062 = scalar_select %p1061, %s15, 1
      %s1063 = smul.addr %s1062, 2
      %s1064 = scalar_lea.vmem %s3, %s1063
      // Predicated region
      $region29: #{match_predictor_forward.10} parent=27 // pred_check
        %p1065 = pneg %p80
      $region30: #{match_predictor_forward.10} parent=27 // pred_check_branch
        %1067 = sbr.rel (%p1065) target = $region32
      $region31: #{match_predictor_forward.10} parent=27 // pred_region
        %s1068 = smul.u32 8, %s15
      $region32: #{match_predictor_forward.10} parent=27 // pred_fallthru
        _
      // Predicated region
      $region33: #{match_predictor_forward.10} parent=27 // pred_check
        %p1069 = pneg %p106
      $region34: #{match_predictor_forward.10} parent=27 // pred_check_branch
        %1071 = sbr.rel (%p1069) target = $region36
      $region35: #{match_predictor_forward.10} parent=27 // pred_region
        _
      $region36: #{match_predictor_forward.10} parent=27 // pred_fallthru
        _
    $region28: #{match_predictor_forward.10} parent=5 // pred_fallthru
      _
    %p1072 = scmp.le.s32.totalorder 2, %s10
    // Predicated region
    $region37: #{match_predictor_forward.10} parent=5 // pred_check
      %p1073 = pneg %p1072
    $region38: #{match_predictor_forward.10} parent=5 // pred_check_branch
      %1075 = sbr.rel (%p1073) target = $region40
    $region39: #{match_predictor_forward.10} parent=5 // pred_region
      %s1076 = ssub.s32 %s10, 2
      // Predicated region
      $region41: #{match_predictor_forward.10} parent=39 // pred_check
        %p1077 = pneg %p86
      $region42: #{match_predictor_forward.10} parent=39 // pred_check_branch
        %1079 = sbr.rel (%p1077) target = $region44
      $region43: #{match_predictor_forward.10} parent=39 // pred_region
        %s1080 = smul.u32 8, %s16
        %p1081 = scmp.lt.s32.totalorder %s1080, 15
        %s1082 = scalar_select %p1081, %s1080, 15
        %s1083 = smul.addr %s1082, 8
        %s1084 = scalar_lea.vmem %s2, %s1083
      $region44: #{match_predictor_forward.10} parent=39 // pred_fallthru
        _
      // Predicated region
      $region45: #{match_predictor_forward.10} parent=39 // pred_check
        %p1085 = pneg %p112
      $region46: #{match_predictor_forward.10} parent=39 // pred_check_branch
        %1087 = sbr.rel (%p1085) target = $region48
      $region47: #{match_predictor_forward.10} parent=39 // pred_region
        %p1088 = scmp.lt.s32.totalorder %s16, 1
        %s1089 = scalar_select %p1088, %s16, 1
        %s1090 = smul.addr %s1089, 2
        %s1091 = scalar_lea.vmem %s3, %s1090
      $region48: #{match_predictor_forward.10} parent=39 // pred_fallthru
        _
    $region40: #{match_predictor_forward.10} parent=5 // pred_fallthru
      _
  $region6: #{match_predictor_forward.10} parent=0 // loop_footer
    %s14 = sadd.s32 1, %s10
  $region7: #{match_predictor_forward.10} parent=0 // loop_footer_branch
    %9 = sbr.rel target = $region3
  $region8: #{match_predictor_forward.10} parent=0 // loop_exit
    _

// kernel: match_predictor_forward.13
$region0: #{match_predictor_forward.13}
  #allocation0 [shape = 'u32[]', space=smem, size = 0x4, offset = 0x4, fixed_abs, tag = 'smem constant byte address 0x4 - core index']
  #allocation1 [shape = 'u32[72,128]{1,0:T(1,128)}', space=vmem, size = 0x9000, scoped, tag = 'internal scratch']
  %s0 = inlined_call_operand.vmem [shape: f32[16,8,40], index: 0, kind: input, shape index: {}]
  %s1 = inlined_call_operand.vmem [shape: f32[1,1,40], index: 1, kind: input, shape index: {}]
  %s2 = inlined_call_operand.vmem [shape: f32[1,1,40], index: 2, kind: input, shape index: {}]
  %s3 = inlined_call_operand.vmem [shape: f32[16,8,40], index: 3, kind: input, shape index: {}]
  %s4 = inlined_call_operand.vmem [shape: f32[16,8,40], index: 4, kind: output, shape index: {}]
  %s5 = sld [smem:[#allocation0]]
  $region49: #{match_predictor_forward.13} parent=0
    _
  %s7 = ssub.s32 1, %s5
  %s8 = scalar_select 0, %s7, %s5
  loop: start=0, step=1, limit=4
  $region2: #{match_predictor_forward.13} parent=0 // loop_pre_header
    _
  $region3: #{match_predictor_forward.13} parent=0 // loop_header
    %s10 = sphi 0, %s14
    %p11 = scmp.ge.s32.totalorder %s10, 4
    %s20 = sphi 0, %s22
    %s23 = sphi 0, %s20
    %s24 = sphi 0, %s23
    %s40 = sphi 0, %s24
    %s44 = sphi 0, %s44
    %s46 = sphi 0, %s44
    %s47 = sphi 0, %s46
    %s61 = sphi 0, %s47
    %s65 = sphi 0, %s65
    %s67 = sphi 0, %s65
    %s68 = sphi 0, %s67
    %s82 = sphi 0, %s68
    %s88 = sphi 0, %s90
    %s91 = sphi 0, %s88
    %s92 = sphi 0, %s91
    %s108 = sphi 0, %s92
    %s114 = sphi 0, %s116
    %s117 = sphi 0, %s114
    %s118 = sphi 0, %s117
    %s134 = sphi 0, %s118
  $region4: #{match_predictor_forward.13} parent=0 // loop_header_branch
    %13 = sbr.rel (%p11) target = $region8
  $region5: #{match_predictor_forward.13} parent=0 // loop_body
    %s15 = ssub.s32 %s10, 1
    %s16 = ssub.s32 %s10, 2
    %s17 = sadd.s32 %s10, 1
    %s18 = ssub.s32 %s10, %s17
    %p19 = scmp.eq.s32.totalorder %s18, 0
    %s21 = sadd.s32 %s20, 1
    %s22 = scalar_select %p19, %s20, %s21
    %p25 = pneg %p19
    %p26 = scmp.eq.s32.totalorder %s10, 1
    %p27 = por %p25, %p26
    %p28 = scmp.ne.s32.totalorder %s20, %s23
    %p29 = scmp.eq.s32.totalorder %s10, 0
    %p30 = por %p28, %p29
    %p31 = scmp.ne.s32.totalorder %s20, %s23
    %p32 = scmp.eq.s32.totalorder %s15, 1
    %p33 = por %p31, %p32
    %p34 = scmp.ne.s32.totalorder %s23, %s24
    %p35 = scmp.eq.s32.totalorder %s15, 0
    %p36 = por %p34, %p35
    %p37 = scmp.ne.s32.totalorder %s23, %s24
    %p38 = scmp.eq.s32.totalorder %s16, 1
    %p39 = por %p37, %p38
    %p41 = scmp.ne.s32.totalorder %s24, %s40
    %p42 = scmp.eq.s32.totalorder %s16, 0
    %p43 = por %p41, %p42
    %s45 = sadd.s32 %s44, 1
    %p48 = scmp.eq.s32.totalorder %s10, 1
    %p49 = scmp.ne.s32.totalorder %s44, %s46
    %p50 = scmp.eq.s32.totalorder %s10, 0
    %p51 = por %p49, %p50
    %p52 = scmp.ne.s32.totalorder %s44, %s46
    %p53 = scmp.eq.s32.totalorder %s15, 1
    %p54 = por %p52, %p53
    %p55 = scmp.ne.s32.totalorder %s46, %s47
    %p56 = scmp.eq.s32.totalorder %s15, 0
    %p57 = por %p55, %p56
    %p58 = scmp.ne.s32.totalorder %s46, %s47
    %p59 = scmp.eq.s32.totalorder %s16, 1
    %p60 = por %p58, %p59
    %p62 = scmp.ne.s32.totalorder %s47, %s61
    %p63 = scmp.eq.s32.totalorder %s16, 0
    %p64 = por %p62, %p63
    %s66 = sadd.s32 %s65, 1
    %p69 = scmp.eq.s32.totalorder %s10, 1
    %p70 = scmp.ne.s32.totalorder %s65, %s67
    %p71 = scmp.eq.s32.totalorder %s10, 0
    %p72 = por %p70, %p71
    %p73 = scmp.ne.s32.totalorder %s65, %s67
    %p74 = scmp.eq.s32.totalorder %s15, 1
    %p75 = por %p73, %p74
    %p76 = scmp.ne.s32.totalorder %s67, %s68
    %p77 = scmp.eq.s32.totalorder %s15, 0
    %p78 = por %p76, %p77
    %p79 = scmp.ne.s32.totalorder %s67, %s68
    %p80 = scmp.eq.s32.totalorder %s16, 1
    %p81 = por %p79, %p80
    %p83 = scmp.ne.s32.totalorder %s68, %s82
    %p84 = scmp.eq.s32.totalorder %s16, 0
    %p85 = por %p83, %p84
    %s86 = ssub.s32 %s10, %s17
    %p87 = scmp.eq.s32.totalorder %s86, 0
    %s89 = sadd.s32 %s88, 1
    %s90 = scalar_select %p87, %s88, %s89
    %p93 = pneg %p87
    %p94 = scmp.eq.s32.totalorder %s10, 1
    %p95 = por %p93, %p94
    %p96 = scmp.ne.s32.totalorder %s88, %s91
    %p97 = scmp.eq.s32.totalorder %s10, 0
    %p98 = por %p96, %p97
    %p99 = scmp.ne.s32.totalorder %s88, %s91
    %p100 = scmp.eq.s32.totalorder %s15, 1
    %p101 = por %p99, %p100
    %p102 = scmp.ne.s32.totalorder %s91, %s92
    %p103 = scmp.eq.s32.totalorder %s15, 0
    %p104 = por %p102, %p103
    %p105 = scmp.ne.s32.totalorder %s91, %s92
    %p106 = scmp.eq.s32.totalorder %s16, 1
    %p107 = por %p105, %p106
    %p109 = scmp.ne.s32.totalorder %s92, %s108
    %p110 = scmp.eq.s32.totalorder %s16, 0
    %p111 = por %p109, %p110
    %s112 = ssub.s32 %s10, %s17
    %p113 = scmp.eq.s32.totalorder %s112, 0
    %s115 = sadd.s32 %s114, 1
    %s116 = scalar_select %p113, %s114, %s115
    %p119 = pneg %p113
    %p120 = scmp.eq.s32.totalorder %s10, 1
    %p121 = por %p119, %p120
    %p122 = scmp.ne.s32.totalorder %s114, %s117
    %p123 = scmp.eq.s32.totalorder %s10, 0
    %p124 = por %p122, %p123
    %p125 = scmp.ne.s32.totalorder %s114, %s117
    %p126 = scmp.eq.s32.totalorder %s15, 1
    %p127 = por %p125, %p126
    %p128 = scmp.ne.s32.totalorder %s117, %s118
    %p129 = scmp.eq.s32.totalorder %s15, 0
    %p130 = por %p128, %p129
    %p131 = scmp.ne.s32.totalorder %s117, %s118
    %p132 = scmp.eq.s32.totalorder %s16, 1
    %p133 = por %p131, %p132
    %p135 = scmp.ne.s32.totalorder %s118, %s134
    %p136 = scmp.eq.s32.totalorder %s16, 0
    %p137 = por %p135, %p136
    %p138 = scmp.le.s32.totalorder 1, %s10
    %p139 = scmp.lt.s32.totalorder %s10, 3
    %p140 = pnand %p138, %p139
    %p141 = pneg %p140
    // Predicated region
    $region9: #{match_predictor_forward.13} parent=5 // pred_check
      _
    $region10: #{match_predictor_forward.13} parent=5 // pred_check_branch
      %143 = sbr.rel (%p140) target = $region12
    $region11: #{match_predictor_forward.13} parent=5 // pred_region
      %s144 = ssub.s32 %s10, 1
      // Predicated region
      $region13: #{match_predictor_forward.13} parent=11 // pred_check
        %p145 = pneg %p57
      $region14: #{match_predictor_forward.13} parent=11 // pred_check_branch
        %147 = sbr.rel (%p145) target = $region16
      $region15: #{match_predictor_forward.13} parent=11 // pred_region
        _
      $region16: #{match_predictor_forward.13} parent=11 // pred_fallthru
        _
      // Predicated region
      $region17: #{match_predictor_forward.13} parent=11 // pred_check
        %p148 = pneg %p78
      $region18: #{match_predictor_forward.13} parent=11 // pred_check_branch
        %150 = sbr.rel (%p148) target = $region20
      $region19: #{match_predictor_forward.13} parent=11 // pred_region
        _
      $region20: #{match_predictor_forward.13} parent=11 // pred_fallthru
        _
    $region12: #{match_predictor_forward.13} parent=5 // pred_fallthru
      _
    %p151 = scmp.lt.s32.totalorder %s10, 2
    // Predicated region
    $region21: #{match_predictor_forward.13} parent=5 // pred_check
      %p152 = pneg %p151
    $region22: #{match_predictor_forward.13} parent=5 // pred_check_branch
      %154 = sbr.rel (%p152) target = $region24
    $region23: #{match_predictor_forward.13} parent=5 // pred_region
      // Predicated region
      $region25: #{match_predictor_forward.13} parent=23 // pred_check
        %p155 = pneg %p30
      $region26: #{match_predictor_forward.13} parent=23 // pred_check_branch
        %157 = sbr.rel (%p155) target = $region28
      $region27: #{match_predictor_forward.13} parent=23 // pred_region
        %s158 = smul.u32 8, %s10
        %p159 = scmp.lt.s32.totalorder %s158, 15
        %s160 = scalar_select %p159, %s158, 15
        %s161 = smul.addr %s160, 8
        %s162 = scalar_lea.vmem %s0, %s161
        %s163 = smul.u32 8, %s10
      $region28: #{match_predictor_forward.13} parent=23 // pred_fallthru
        _
      // Predicated region
      $region29: #{match_predictor_forward.13} parent=23 // pred_check
        %p164 = pneg %p98
      $region30: #{match_predictor_forward.13} parent=23 // pred_check_branch
        %166 = sbr.rel (%p164) target = $region32
      $region31: #{match_predictor_forward.13} parent=23 // pred_region
        %s167 = smul.u32 8, %s10
        %p168 = scmp.lt.s32.totalorder %s167, 15
        %s169 = scalar_select %p168, %s167, 15
        %s170 = smul.addr %s169, 8
        %s171 = scalar_lea.vmem %s3, %s170
        %s172 = smul.u32 8, %s10
      $region32: #{match_predictor_forward.13} parent=23 // pred_fallthru
        _
    $region24: #{match_predictor_forward.13} parent=5 // pred_fallthru
      _
    %p173 = scmp.le.s32.totalorder 1, %s10
    %p174 = scmp.lt.s32.totalorder %s10, 3
    %p175 = pnand %p173, %p174
    %p176 = pneg %p175
    // Predicated region
    $region33: #{match_predictor_forward.13} parent=5 // pred_check
      _
    $region34: #{match_predictor_forward.13} parent=5 // pred_check_branch
      %178 = sbr.rel (%p175) target = $region36
    $region35: #{match_predictor_forward.13} parent=5 // pred_region
      %s179 = ssub.s32 %s10, 1
      %s180 = smul.u32 8, %s15
      %p181 = scmp.lt.s32.totalorder %s180, 15
      %s182 = scalar_select %p181, %s180, 15
      %s183 = smul.addr %s182, 8
      %s184 = scalar_lea.vmem %s0, %s183
      %p185 = pneg %p36
      %p186 = pneg %p33
      %p187 = pneg %p57
      %p188 = pneg %p54
      %p189 = pneg %p78
      %p190 = pneg %p75
      %s191 = smul.u32 8, %s15
      %p192 = scmp.lt.s32.totalorder %s191, 15
      %s193 = scalar_select %p192, %s191, 15
      %s194 = smul.addr %s193, 8
      %s195 = scalar_lea.vmem %s3, %s194
      %p196 = pneg %p104
      %p197 = pneg %p101
      %p198 = pneg %p130
      %p199 = pneg %p127
      %s200 = smul.u32 8, %s15
      %p201 = scmp.lt.s32.totalorder %s200, 15
      %s202 = scalar_select %p201, %s200, 15
      %s203 = smul.addr %s202, 8
      %s204 = scalar_lea.vmem %s4, %s203
      %s205 = smul.u32 8, %s15
      %p206 = scmp.lt.s32.totalorder %s205, 15
      %s207 = scalar_select %p206, %s205, 15
      %s208 = smul.addr %s207, 8
      %s209 = scalar_lea.vmem %s0, %s208
      %s210 = smul.u32 8, %s15
      %s211 = smul.u32 8, %s15
      %p212 = scmp.lt.s32.totalorder %s211, 15
      %s213 = scalar_select %p212, %s211, 15
      %s214 = smul.addr %s213, 8
      %s215 = scalar_lea.vmem %s3, %s214
      %s216 = smul.u32 8, %s15
      %s217 = smul.u32 8, %s15
      %p218 = scmp.lt.s32.totalorder %s217, 15
      %s219 = scalar_select %p218, %s217, 15
      %s220 = smul.addr %s219, 8
      %s221 = scalar_lea.vmem %s4, %s220
      %s222 = smul.u32 8, %s15
      %v223 = vld [vmem:[%s209] sm:$0xff]
      %v224 = vld [vmem:[%s209 + $0x8] sm:$0xff]
      %v225 = vld [vmem:[%s209 + $0x10] sm:$0xff]
      %v226 = vld [vmem:[%s209 + $0x18] sm:$0xff]
      %v227 = vld [vmem:[%s209 + $0x20] sm:$0xff]
      %v228 = vld [vmem:[%s209 + $0x28] sm:$0xff]
      %v229 = vld [vmem:[%s209 + $0x30] sm:$0xff]
      %v230 = vld [vmem:[%s209 + $0x38] sm:$0xff]
      %v231 = vld [vmem:[%s1] sm:$0x1]
      %v233 = vperm.slane %v231, 0
      %v235 = vmul.f32 %v223, %v233
      %v236 = vmul.f32 %v224, %v233
      %v237 = vmul.f32 %v225, %v233
      %v238 = vmul.f32 %v226, %v233
      %v239 = vmul.f32 %v227, %v233
      %v240 = vmul.f32 %v228, %v233
      %v241 = vmul.f32 %v229, %v233
      %v242 = vmul.f32 %v230, %v233
      %v243 = vld [vmem:[%s2] sm:$0x1]
      %v245 = vperm.slane %v243, 0
      %v247 = vadd.f32 %v235, %v245
      %v248 = vadd.f32 %v236, %v245
      %v249 = vadd.f32 %v237, %v245
      %v250 = vadd.f32 %v238, %v245
      %v251 = vadd.f32 %v239, %v245
      %v252 = vadd.f32 %v240, %v245
      %v253 = vadd.f32 %v241, %v245
      %v254 = vadd.f32 %v242, %v245
      %vm255 = vcmp.gt.f32.partialorder %v247, 0.0
      %vm256 = vcmp.gt.f32.partialorder %v248, 0.0
      %vm257 = vcmp.gt.f32.partialorder %v249, 0.0
      %vm258 = vcmp.gt.f32.partialorder %v250, 0.0
      %vm259 = vcmp.gt.f32.partialorder %v251, 0.0
      %vm260 = vcmp.gt.f32.partialorder %v252, 0.0
      %vm261 = vcmp.gt.f32.partialorder %v253, 0.0
      %vm262 = vcmp.gt.f32.partialorder %v254, 0.0
      %v263 = vmul.f32 %v247, 0.01
      %v264 = vmul.f32 %v248, 0.01
      %v265 = vmul.f32 %v249, 0.01
      %v266 = vmul.f32 %v250, 0.01
      %v267 = vmul.f32 %v251, 0.01
      %v268 = vmul.f32 %v252, 0.01
      %v269 = vmul.f32 %v253, 0.01
      %v270 = vmul.f32 %v254, 0.01
      %v271 = vsel %vm255, %v247, %v263
      %v272 = vsel %vm256, %v248, %v264
      %v273 = vsel %vm257, %v249, %v265
      %v274 = vsel %vm258, %v250, %v266
      %v275 = vsel %vm259, %v251, %v267
      %v276 = vsel %vm260, %v252, %v268
      %v277 = vsel %vm261, %v253, %v269
      %v278 = vsel %vm262, %v254, %v270
      %v279 = vld [vmem:[%s215] sm:$0xff]
      %v280 = vld [vmem:[%s215 + $0x8] sm:$0xff]
      %v281 = vld [vmem:[%s215 + $0x10] sm:$0xff]
      %v282 = vld [vmem:[%s215 + $0x18] sm:$0xff]
      %v283 = vld [vmem:[%s215 + $0x20] sm:$0xff]
      %v284 = vld [vmem:[%s215 + $0x28] sm:$0xff]
      %v285 = vld [vmem:[%s215 + $0x30] sm:$0xff]
      %v286 = vld [vmem:[%s215 + $0x38] sm:$0xff]
      %v287 = vadd.f32 %v279, %v271
      %v288 = vadd.f32 %v280, %v272
      %v289 = vadd.f32 %v281, %v273
      %v290 = vadd.f32 %v282, %v274
      %v291 = vadd.f32 %v283, %v275
      %v292 = vadd.f32 %v284, %v276
      %v293 = vadd.f32 %v285, %v277
      %v294 = vadd.f32 %v286, %v278
      %vm295 = vcmask 326656
      %296 = vst.msk [vmem:[%s221] sm:$0xff] %vm295, %v287
      %297 = vst.msk [vmem:[%s221 + $0x8] sm:$0xff] %vm295, %v288
      %298 = vst.msk [vmem:[%s221 + $0x10] sm:$0xff] %vm295, %v289
      %299 = vst.msk [vmem:[%s221 + $0x18] sm:$0xff] %vm295, %v290
      %300 = vst.msk [vmem:[%s221 + $0x20] sm:$0xff] %vm295, %v291
      %301 = vst.msk [vmem:[%s221 + $0x28] sm:$0xff] %vm295, %v292
      %302 = vst.msk [vmem:[%s221 + $0x30] sm:$0xff] %vm295, %v293
      %303 = vst.msk [vmem:[%s221 + $0x38] sm:$0xff] %vm295, %v294
      %s304 = smul.u32 8, %s15
      %p305 = scmp.lt.s32.totalorder %s304, 15
      %s306 = scalar_select %p305, %s304, 15
      %s307 = smul.addr %s306, 8
      %s308 = scalar_lea.vmem %s4, %s307
      // Predicated region
      $region37: #{match_predictor_forward.13} parent=35 // pred_check
        %p309 = pneg %p127
      $region38: #{match_predictor_forward.13} parent=35 // pred_check_branch
        %311 = sbr.rel (%p309) target = $region40
      $region39: #{match_predictor_forward.13} parent=35 // pred_region
        %s312 = smul.u32 8, %s15
      $region40: #{match_predictor_forward.13} parent=35 // pred_fallthru
        _
    $region36: #{match_predictor_forward.13} parent=5 // pred_fallthru
      _
    %p313 = scmp.le.s32.totalorder 2, %s10
    // Predicated region
    $region41: #{match_predictor_forward.13} parent=5 // pred_check
      %p314 = pneg %p313
    $region42: #{match_predictor_forward.13} parent=5 // pred_check_branch
      %316 = sbr.rel (%p314) target = $region44
    $region43: #{match_predictor_forward.13} parent=5 // pred_region
      %s317 = ssub.s32 %s10, 2
      // Predicated region
      $region45: #{match_predictor_forward.13} parent=43 // pred_check
        %p318 = pneg %p133
      $region46: #{match_predictor_forward.13} parent=43 // pred_check_branch
        %320 = sbr.rel (%p318) target = $region48
      $region47: #{match_predictor_forward.13} parent=43 // pred_region
        %s321 = smul.u32 8, %s16
        %p322 = scmp.lt.s32.totalorder %s321, 15
        %s323 = scalar_select %p322, %s321, 15
        %s324 = smul.addr %s323, 8
        %s325 = scalar_lea.vmem %s4, %s324
      $region48: #{match_predictor_forward.13} parent=43 // pred_fallthru
        _
    $region44: #{match_predictor_forward.13} parent=5 // pred_fallthru
      _
  $region6: #{match_predictor_forward.13} parent=0 // loop_footer
    %s14 = sadd.s32 1, %s10
  $region7: #{match_predictor_forward.13} parent=0 // loop_footer_branch
    %9 = sbr.rel target = $region3
  $region8: #{match_predictor_forward.13} parent=0 // loop_exit
    _

// kernel: match_predictor_forward.12
$region0: #{match_predictor_forward.12}
  #allocation0 [shape = 'u32[]', space=smem, size = 0x4, offset = 0x4, fixed_abs, tag = 'smem constant byte address 0x4 - core index']
  #allocation1 [shape = 'u32[72,128]{1,0:T(1,128)}', space=vmem, size = 0x9000, scoped, tag = 'internal scratch']
  %s0 = inlined_call_operand.vmem [shape: bf16[16,10,168], index: 0, kind: input, shape index: {}]
  %s1 = inlined_call_operand.vmem [shape: bf16[3,168,40], index: 1, kind: input, shape index: {}]
  %s2 = inlined_call_operand.vmem [shape: f32[16,8,40], index: 2, kind: output, shape index: {0}]
  %s3 = inlined_call_operand.vmem [shape: f32[2,2,40], index: 3, kind: output, shape index: {1}]
  %4 = xla_tuple %s2, %s3
  %s5 = sld [smem:[#allocation0]]
  $region49: #{match_predictor_forward.12} parent=0
    _
  %s7 = ssub.s32 1, %s5
  %s8 = scalar_select 0, %s7, %s5
  loop: start=0, step=1, limit=4
  $region2: #{match_predictor_forward.12} parent=0 // loop_pre_header
    _
  $region3: #{match_predictor_forward.12} parent=0 // loop_header
    %s10 = sphi 0, %s14
    %p11 = scmp.ge.s32.totalorder %s10, 4
    %s20 = sphi 0, %s22
    %s23 = sphi 0, %s20
    %s24 = sphi 0, %s23
    %s40 = sphi 0, %s24
    %s44 = sphi 0, %s44
    %s46 = sphi 0, %s44
    %s47 = sphi 0, %s46
    %s61 = sphi 0, %s47
    %s67 = sphi 0, %s69
    %s70 = sphi 0, %s67
    %s71 = sphi 0, %s70
    %s87 = sphi 0, %s71
    %s93 = sphi 0, %s95
    %s96 = sphi 0, %s93
    %s97 = sphi 0, %s96
    %s113 = sphi 0, %s97
  $region4: #{match_predictor_forward.12} parent=0 // loop_header_branch
    %13 = sbr.rel (%p11) target = $region8
  $region5: #{match_predictor_forward.12} parent=0 // loop_body
    %s15 = ssub.s32 %s10, 1
    %s16 = ssub.s32 %s10, 2
    %s17 = sadd.s32 %s10, 1
    %s18 = ssub.s32 %s10, %s17
    %p19 = scmp.eq.s32.totalorder %s18, 0
    %s21 = sadd.s32 %s20, 1
    %s22 = scalar_select %p19, %s20, %s21
    %p25 = pneg %p19
    %p26 = scmp.eq.s32.totalorder %s10, 1
    %p27 = por %p25, %p26
    %p28 = scmp.ne.s32.totalorder %s20, %s23
    %p29 = scmp.eq.s32.totalorder %s10, 0
    %p30 = por %p28, %p29
    %p31 = scmp.ne.s32.totalorder %s20, %s23
    %p32 = scmp.eq.s32.totalorder %s15, 1
    %p33 = por %p31, %p32
    %p34 = scmp.ne.s32.totalorder %s23, %s24
    %p35 = scmp.eq.s32.totalorder %s15, 0
    %p36 = por %p34, %p35
    %p37 = scmp.ne.s32.totalorder %s23, %s24
    %p38 = scmp.eq.s32.totalorder %s16, 1
    %p39 = por %p37, %p38
    %p41 = scmp.ne.s32.totalorder %s24, %s40
    %p42 = scmp.eq.s32.totalorder %s16, 0
    %p43 = por %p41, %p42
    %s45 = sadd.s32 %s44, 1
    %p48 = scmp.eq.s32.totalorder %s10, 1
    %p49 = scmp.ne.s32.totalorder %s44, %s46
    %p50 = scmp.eq.s32.totalorder %s10, 0
    %p51 = por %p49, %p50
    %p52 = scmp.ne.s32.totalorder %s44, %s46
    %p53 = scmp.eq.s32.totalorder %s15, 1
    %p54 = por %p52, %p53
    %p55 = scmp.ne.s32.totalorder %s46, %s47
    %p56 = scmp.eq.s32.totalorder %s15, 0
    %p57 = por %p55, %p56
    %p58 = scmp.ne.s32.totalorder %s46, %s47
    %p59 = scmp.eq.s32.totalorder %s16, 1
    %p60 = por %p58, %p59
    %p62 = scmp.ne.s32.totalorder %s47, %s61
    %p63 = scmp.eq.s32.totalorder %s16, 0
    %p64 = por %p62, %p63
    %s65 = ssub.s32 %s10, %s17
    %p66 = scmp.eq.s32.totalorder %s65, 0
    %s68 = sadd.s32 %s67, 1
    %s69 = scalar_select %p66, %s67, %s68
    %p72 = pneg %p66
    %p73 = scmp.eq.s32.totalorder %s10, 1
    %p74 = por %p72, %p73
    %p75 = scmp.ne.s32.totalorder %s67, %s70
    %p76 = scmp.eq.s32.totalorder %s10, 0
    %p77 = por %p75, %p76
    %p78 = scmp.ne.s32.totalorder %s67, %s70
    %p79 = scmp.eq.s32.totalorder %s15, 1
    %p80 = por %p78, %p79
    %p81 = scmp.ne.s32.totalorder %s70, %s71
    %p82 = scmp.eq.s32.totalorder %s15, 0
    %p83 = por %p81, %p82
    %p84 = scmp.ne.s32.totalorder %s70, %s71
    %p85 = scmp.eq.s32.totalorder %s16, 1
    %p86 = por %p84, %p85
    %p88 = scmp.ne.s32.totalorder %s71, %s87
    %p89 = scmp.eq.s32.totalorder %s16, 0
    %p90 = por %p88, %p89
    %s91 = ssub.s32 %s10, %s17
    %p92 = scmp.eq.s32.totalorder %s91, 0
    %s94 = sadd.s32 %s93, 1
    %s95 = scalar_select %p92, %s93, %s94
    %p98 = pneg %p92
    %p99 = scmp.eq.s32.totalorder %s10, 1
    %p100 = por %p98, %p99
    %p101 = scmp.ne.s32.totalorder %s93, %s96
    %p102 = scmp.eq.s32.totalorder %s10, 0
    %p103 = por %p101, %p102
    %p104 = scmp.ne.s32.totalorder %s93, %s96
    %p105 = scmp.eq.s32.totalorder %s15, 1
    %p106 = por %p104, %p105
    %p107 = scmp.ne.s32.totalorder %s96, %s97
    %p108 = scmp.eq.s32.totalorder %s15, 0
    %p109 = por %p107, %p108
    %p110 = scmp.ne.s32.totalorder %s96, %s97
    %p111 = scmp.eq.s32.totalorder %s16, 1
    %p112 = por %p110, %p111
    %p114 = scmp.ne.s32.totalorder %s97, %s113
    %p115 = scmp.eq.s32.totalorder %s16, 0
    %p116 = por %p114, %p115
    %p117 = scmp.le.s32.totalorder 1, %s10
    %p118 = scmp.lt.s32.totalorder %s10, 3
    %p119 = pnand %p117, %p118
    %p120 = pneg %p119
    // Predicated region
    $region9: #{match_predictor_forward.12} parent=5 // pred_check
      _
    $region10: #{match_predictor_forward.12} parent=5 // pred_check_branch
      %122 = sbr.rel (%p119) target = $region12
    $region11: #{match_predictor_forward.12} parent=5 // pred_region
      %s123 = ssub.s32 %s10, 1
      // Predicated region
      $region13: #{match_predictor_forward.12} parent=11 // pred_check
        %p124 = pneg %p57
      $region14: #{match_predictor_forward.12} parent=11 // pred_check_branch
        %126 = sbr.rel (%p124) target = $region16
      $region15: #{match_predictor_forward.12} parent=11 // pred_region
        _
      $region16: #{match_predictor_forward.12} parent=11 // pred_fallthru
        _
    $region12: #{match_predictor_forward.12} parent=5 // pred_fallthru
      _
    %p127 = scmp.lt.s32.totalorder %s10, 2
    // Predicated region
    $region17: #{match_predictor_forward.12} parent=5 // pred_check
      %p128 = pneg %p127
    $region18: #{match_predictor_forward.12} parent=5 // pred_check_branch
      %130 = sbr.rel (%p128) target = $region20
    $region19: #{match_predictor_forward.12} parent=5 // pred_region
      // Predicated region
      $region21: #{match_predictor_forward.12} parent=19 // pred_check
        %p131 = pneg %p30
      $region22: #{match_predictor_forward.12} parent=19 // pred_check_branch
        %133 = sbr.rel (%p131) target = $region24
      $region23: #{match_predictor_forward.12} parent=19 // pred_region
        %s134 = smul.u32 8, %s10
        %p135 = scmp.lt.s32.totalorder %s134, 15
        %s136 = scalar_select %p135, %s134, 15
        %s137 = smul.addr %s136, 4
        %s138 = smul.addr %s137, 4
        %s139 = scalar_lea.vmem %s0, %s138
        %s140 = smul.u32 8, %s10
      $region24: #{match_predictor_forward.12} parent=19 // pred_fallthru
        _
    $region20: #{match_predictor_forward.12} parent=5 // pred_fallthru
      _
    %p141 = scmp.le.s32.totalorder 1, %s10
    %p142 = scmp.lt.s32.totalorder %s10, 3
    %p143 = pnand %p141, %p142
    %p144 = pneg %p143
    // Predicated region
    $region25: #{match_predictor_forward.12} parent=5 // pred_check
      _
    $region26: #{match_predictor_forward.12} parent=5 // pred_check_branch
      %146 = sbr.rel (%p143) target = $region28
    $region27: #{match_predictor_forward.12} parent=5 // pred_region
      %s147 = ssub.s32 %s10, 1
      %s148 = smul.u32 8, %s15
      %p149 = scmp.lt.s32.totalorder %s148, 15
      %s150 = scalar_select %p149, %s148, 15
      %s151 = smul.addr %s150, 4
      %s152 = smul.addr %s151, 4
      %s153 = scalar_lea.vmem %s0, %s152
      %p154 = pneg %p36
      %p155 = pneg %p33
      %p156 = pneg %p57
      %p157 = pneg %p54
      %p158 = pneg %p83
      %p159 = pneg %p80
      %s160 = smul.u32 8, %s15
      %p161 = scmp.lt.s32.totalorder %s160, 15
      %s162 = scalar_select %p161, %s160, 15
      %s163 = smul.addr %s162, 8
      %s164 = scalar_lea.vmem %s2, %s163
      %p165 = pneg %p109
      %p166 = pneg %p106
      %p167 = scmp.lt.s32.totalorder %s15, 1
      %s168 = scalar_select %p167, %s15, 1
      %s169 = smul.addr %s168, 2
      %s170 = scalar_lea.vmem %s3, %s169
      %s171 = smul.u32 8, %s15
      %p172 = scmp.lt.s32.totalorder %s171, 15
      %s173 = scalar_select %p172, %s171, 15
      %s174 = smul.addr %s173, 4
      %s175 = smul.addr %s174, 4
      %s176 = scalar_lea.vmem %s0, %s175
      %s177 = smul.u32 8, %s15
      %s178 = smul.u32 8, %s15
      %p179 = scmp.lt.s32.totalorder %s178, 15
      %s180 = scalar_select %p179, %s178, 15
      %s181 = smul.addr %s180, 8
      %s182 = scalar_lea.vmem %s2, %s181
      %s183 = smul.u32 8, %s15
      %p184 = scmp.lt.s32.totalorder %s15, 1
      %s185 = scalar_select %p184, %s15, 1
      %s186 = smul.addr %s185, 2
      %s187 = scalar_lea.vmem %s3, %s186
      %v189 = vld [vmem:[%s1] sm:$0xf]
      %v190 = vld [vmem:[%s1 + $0x4] sm:$0xf]
      %v191 = vld [vmem:[%s1 + $0x8] sm:$0xf]
      %v192 = vld [vmem:[%s1 + $0xc] sm:$0xf]
      %v193 = vld [vmem:[%s1 + $0x10] sm:$0xf]
      %v194 = vld [vmem:[%s1 + $0x14] sm:$0xf]
      %v195 = vld [vmem:[%s1 + $0x18] sm:$0xf]
      %v196 = vld [vmem:[%s1 + $0x1c] sm:$0xf]
      %v197 = vld [vmem:[%s1 + $0x20] sm:$0xf]
      %v198 = vld [vmem:[%s1 + $0x24] sm:$0xf]
      %v199 = vld [vmem:[%s1 + $0x28] sm:$0xf]
      %v200 = vld [vmem:[%s1 + $0x2c] sm:$0xf]
      %v201 = vld [vmem:[%s1 + $0x30] sm:$0xf]
      %v202 = vld [vmem:[%s1 + $0x34] sm:$0xf]
      %v203 = vld [vmem:[%s1 + $0x38] sm:$0xf]
      %v204 = vld [vmem:[%s1 + $0x3c] sm:$0xf]
      %v205 = vld [vmem:[%s1 + $0x40] sm:$0xf]
      %v206 = vld [vmem:[%s1 + $0x44] sm:$0xf]
      %v207 = vld [vmem:[%s1 + $0x48] sm:$0xf]
      %v208 = vld [vmem:[%s1 + $0x4c] sm:$0xf]
      %v209 = vld [vmem:[%s1 + $0x50] sm:$0xf]
      %s210 = scalar_lea.vmem %s1, 84
      %v211 = vld [vmem:[%s210] sm:$0xf]
      %v212 = vld [vmem:[%s210 + $0x4] sm:$0xf]
      %v213 = vld [vmem:[%s210 + $0x8] sm:$0xf]
      %v214 = vld [vmem:[%s210 + $0xc] sm:$0xf]
      %v215 = vld [vmem:[%s210 + $0x10] sm:$0xf]
      %v216 = vld [vmem:[%s210 + $0x14] sm:$0xf]
      %v217 = vld [vmem:[%s210 + $0x18] sm:$0xf]
      %v218 = vld [vmem:[%s210 + $0x1c] sm:$0xf]
      %v219 = vld [vmem:[%s210 + $0x20] sm:$0xf]
      %v220 = vld [vmem:[%s210 + $0x24] sm:$0xf]
      %v221 = vld [vmem:[%s210 + $0x28] sm:$0xf]
      %v222 = vld [vmem:[%s210 + $0x2c] sm:$0xf]
      %v223 = vld [vmem:[%s210 + $0x30] sm:$0xf]
      %v224 = vld [vmem:[%s210 + $0x34] sm:$0xf]
      %v225 = vld [vmem:[%s210 + $0x38] sm:$0xf]
      %v226 = vld [vmem:[%s210 + $0x3c] sm:$0xf]
      %v227 = vld [vmem:[%s210 + $0x40] sm:$0xf]
      %v228 = vld [vmem:[%s210 + $0x44] sm:$0xf]
      %v229 = vld [vmem:[%s210 + $0x48] sm:$0xf]
      %v230 = vld [vmem:[%s210 + $0x4c] sm:$0xf]
      %v231 = vld [vmem:[%s210 + $0x50] sm:$0xf]
      %s232 = scalar_lea.vmem %s1, 168
      %v233 = vld [vmem:[%s232] sm:$0xf]
      %v234 = vld [vmem:[%s232 + $0x4] sm:$0xf]
      %v235 = vld [vmem:[%s232 + $0x8] sm:$0xf]
      %v236 = vld [vmem:[%s232 + $0xc] sm:$0xf]
      %v237 = vld [vmem:[%s232 + $0x10] sm:$0xf]
      %v238 = vld [vmem:[%s232 + $0x14] sm:$0xf]
      %v239 = vld [vmem:[%s232 + $0x18] sm:$0xf]
      %v240 = vld [vmem:[%s232 + $0x1c] sm:$0xf]
      %v241 = vld [vmem:[%s232 + $0x20] sm:$0xf]
      %v242 = vld [vmem:[%s232 + $0x24] sm:$0xf]
      %v243 = vld [vmem:[%s232 + $0x28] sm:$0xf]
      %v244 = vld [vmem:[%s232 + $0x2c] sm:$0xf]
      %v245 = vld [vmem:[%s232 + $0x30] sm:$0xf]
      %v246 = vld [vmem:[%s232 + $0x34] sm:$0xf]
      %v247 = vld [vmem:[%s232 + $0x38] sm:$0xf]
      %v248 = vld [vmem:[%s232 + $0x3c] sm:$0xf]
      %v249 = vld [vmem:[%s232 + $0x40] sm:$0xf]
      %v250 = vld [vmem:[%s232 + $0x44] sm:$0xf]
      %v251 = vld [vmem:[%s232 + $0x48] sm:$0xf]
      %v252 = vld [vmem:[%s232 + $0x4c] sm:$0xf]
      %v253 = vld [vmem:[%s232 + $0x50] sm:$0xf]
      %v254 = vld [vmem:[%s176] sm:$0xff]
      %v255 = vld [vmem:[%s176 + $0x8] sm:$0x11]
      %v258 = vunpack.c.l.b16 %v254
      %v259 = vunpack.c.h.b16 %v254
      %v260 = vunpack.c.l.b16 %v255
      %v261 = vunpack.c.h.b16 %v255
      %v262 = vpack.c.b16 %v260, %v258
      %v263 = vpack.c.b16 %v261, %v259
      %v265 = vshrl.u32 %v262, 16
      %v267 = vshll.u32 %v262, 16
      %v269 = vrot.slane %v267, 1
      %v270 = vor.u32 %v265, %v269
      %v272 = vshrl.u32 %v263, 16
      %v274 = vshll.u32 %v263, 16
      %v276 = vrot.slane %v274, 1
      %v277 = vor.u32 %v272, %v276
      %v300 = vunpack.c.l.b16 %v211
      %v301 = vunpack.c.l.b16 %v212
      %v302 = vunpack.c.l.b16 %v213
      %v303 = vunpack.c.l.b16 %v214
      %v304 = vunpack.c.l.b16 %v215
      %v305 = vunpack.c.l.b16 %v216
      %v306 = vunpack.c.l.b16 %v217
      %v307 = vunpack.c.l.b16 %v218
      %v308 = vunpack.c.l.b16 %v219
      %v309 = vunpack.c.l.b16 %v220
      %v310 = vunpack.c.l.b16 %v221
      %v311 = vunpack.c.l.b16 %v222
      %v312 = vunpack.c.l.b16 %v223
      %v313 = vunpack.c.l.b16 %v224
      %v314 = vunpack.c.l.b16 %v225
      %v315 = vunpack.c.l.b16 %v226
      %v316 = vunpack.c.l.b16 %v227
      %v317 = vunpack.c.l.b16 %v228
      %v318 = vunpack.c.l.b16 %v229
      %v319 = vunpack.c.l.b16 %v230
      %v320 = vunpack.c.l.b16 %v231
      %v321 = vpack.c.b16 %v301, %v300
      %v322 = vpack.c.b16 %v303, %v302
      %v323 = vpack.c.b16 %v305, %v304
      %v324 = vpack.c.b16 %v307, %v306
      %v325 = vpack.c.b16 %v309, %v308
      %v326 = vpack.c.b16 %v311, %v310
      %v327 = vpack.c.b16 %v313, %v312
      %v328 = vpack.c.b16 %v315, %v314
      %v329 = vpack.c.b16 %v317, %v316
      %v330 = vpack.c.b16 %v319, %v318
      %v331 = vpack.c.b16 %v320, %v320
      %vm342 = vcmask 326656
      %v344 = vsel %vm342, %v277, 0
      %vm346 = vcmask 1043456
      %v348 = vsel %vm346, %v331, 0
      %350 = vmatpush.bf16.msra.mxu0 %v328
      %351 = vmatpush.bf16.msra.mxu0 %v327
      %352 = vmatpush.bf16.msra.mxu0 %v326
      %353 = vmatpush.bf16.msra.mxu0 %v325
      %354 = vmatpush.bf16.msra.mxu0 %v324
      %355 = vmatpush.bf16.msra.mxu0 %v323
      %356 = vmatpush.bf16.msra.mxu0 %v322
      %357 = vmatpush.bf16.msra.mxu0 %v321
      %358 = vmatmul.bf16.gmra.mxu0 %v270
      %v359 = vpop.f32.mrf.mxu0
      %v360 = vadd.f32 0.0, %v359
      %v361 = vpop.f32.mrf.mxu0
      %362 = vdwg.mxu0
      %363 = vmatpush.bf16.msra.mxu0 0
      %364 = vmatpush.bf16.msra.mxu0 0
      %365 = vmatpush.bf16.msra.mxu0 0
      %366 = vmatpush.bf16.msra.mxu0 0
      %367 = vmatpush.bf16.msra.mxu0 0
      %368 = vmatpush.bf16.msra.mxu0 %v348
      %369 = vmatpush.bf16.msra.mxu0 %v330
      %370 = vmatpush.bf16.msra.mxu0 %v329
      %371 = vmatmul.bf16.gmra.mxu0 %v344
      %v372 = vpop.f32.mrf.mxu0
      %v373 = vadd.f32 %v360, %v372
      %v374 = vpop.f32.mrf.mxu0
      %375 = vdwg.mxu0
      %v376 = vpack.c.b16 %v258, %v258
      %v377 = vpack.c.b16 %v259, %v259
      %v400 = vunpack.c.l.b16 %v189
      %v401 = vunpack.c.l.b16 %v190
      %v402 = vunpack.c.l.b16 %v191
      %v403 = vunpack.c.l.b16 %v192
      %v404 = vunpack.c.l.b16 %v193
      %v405 = vunpack.c.l.b16 %v194
      %v406 = vunpack.c.l.b16 %v195
      %v407 = vunpack.c.l.b16 %v196
      %v408 = vunpack.c.l.b16 %v197
      %v409 = vunpack.c.l.b16 %v198
      %v410 = vunpack.c.l.b16 %v199
      %v411 = vunpack.c.l.b16 %v200
      %v412 = vunpack.c.l.b16 %v201
      %v413 = vunpack.c.l.b16 %v202
      %v414 = vunpack.c.l.b16 %v203
      %v415 = vunpack.c.l.b16 %v204
      %v416 = vunpack.c.l.b16 %v205
      %v417 = vunpack.c.l.b16 %v206
      %v418 = vunpack.c.l.b16 %v207
      %v419 = vunpack.c.l.b16 %v208
      %v420 = vunpack.c.l.b16 %v209
      %v421 = vpack.c.b16 %v401, %v400
      %v422 = vpack.c.b16 %v403, %v402
      %v423 = vpack.c.b16 %v405, %v404
      %v424 = vpack.c.b16 %v407, %v406
      %v425 = vpack.c.b16 %v409, %v408
      %v426 = vpack.c.b16 %v411, %v410
      %v427 = vpack.c.b16 %v413, %v412
      %v428 = vpack.c.b16 %v415, %v414
      %v429 = vpack.c.b16 %v417, %v416
      %v430 = vpack.c.b16 %v419, %v418
      %v431 = vpack.c.b16 %v420, %v420
      %v443 = vsel %vm342, %v377, 0
      %v446 = vsel %vm346, %v431, 0
      %448 = vmatpush.bf16.msra.mxu0 %v428
      %449 = vmatpush.bf16.msra.mxu0 %v427
      %450 = vmatpush.bf16.msra.mxu0 %v426
      %451 = vmatpush.bf16.msra.mxu0 %v425
      %452 = vmatpush.bf16.msra.mxu0 %v424
      %453 = vmatpush.bf16.msra.mxu0 %v423
      %454 = vmatpush.bf16.msra.mxu0 %v422
      %455 = vmatpush.bf16.msra.mxu0 %v421
      %456 = vmatmul.bf16.gmra.mxu0 %v376
      %v457 = vpop.f32.mrf.mxu0
      %v458 = vadd.f32 %v373, %v457
      %v459 = vpop.f32.mrf.mxu0
      %460 = vdwg.mxu0
      %461 = vmatpush.bf16.msra.mxu0 0
      %462 = vmatpush.bf16.msra.mxu0 0
      %463 = vmatpush.bf16.msra.mxu0 0
      %464 = vmatpush.bf16.msra.mxu0 0
      %465 = vmatpush.bf16.msra.mxu0 0
      %466 = vmatpush.bf16.msra.mxu0 %v446
      %467 = vmatpush.bf16.msra.mxu0 %v430
      %468 = vmatpush.bf16.msra.mxu0 %v429
      %469 = vmatmul.bf16.gmra.mxu0 %v443
      %v470 = vpop.f32.mrf.mxu0
      %v471 = vadd.f32 %v458, %v470
      %v472 = vpop.f32.mrf.mxu0
      %473 = vdwg.mxu0
      %v474 = vrot.slane %v262, 1
      %v475 = vrot.slane %v263, 1
      %v498 = vunpack.c.l.b16 %v233
      %v499 = vunpack.c.l.b16 %v234
      %v500 = vunpack.c.l.b16 %v235
      %v501 = vunpack.c.l.b16 %v236
      %v502 = vunpack.c.l.b16 %v237
      %v503 = vunpack.c.l.b16 %v238
      %v504 = vunpack.c.l.b16 %v239
      %v505 = vunpack.c.l.b16 %v240
      %v506 = vunpack.c.l.b16 %v241
      %v507 = vunpack.c.l.b16 %v242
      %v508 = vunpack.c.l.b16 %v243
      %v509 = vunpack.c.l.b16 %v244
      %v510 = vunpack.c.l.b16 %v245
      %v511 = vunpack.c.l.b16 %v246
      %v512 = vunpack.c.l.b16 %v247
      %v513 = vunpack.c.l.b16 %v248
      %v514 = vunpack.c.l.b16 %v249
      %v515 = vunpack.c.l.b16 %v250
      %v516 = vunpack.c.l.b16 %v251
      %v517 = vunpack.c.l.b16 %v252
      %v518 = vunpack.c.l.b16 %v253
      %v519 = vpack.c.b16 %v499, %v498
      %v520 = vpack.c.b16 %v501, %v500
      %v521 = vpack.c.b16 %v503, %v502
      %v522 = vpack.c.b16 %v505, %v504
      %v523 = vpack.c.b16 %v507, %v506
      %v524 = vpack.c.b16 %v509, %v508
      %v525 = vpack.c.b16 %v511, %v510
      %v526 = vpack.c.b16 %v513, %v512
      %v527 = vpack.c.b16 %v515, %v514
      %v528 = vpack.c.b16 %v517, %v516
      %v529 = vpack.c.b16 %v518, %v518
      %v541 = vsel %vm342, %v475, 0
      %v544 = vsel %vm346, %v529, 0
      %546 = vmatpush.bf16.msra.mxu0 %v526
      %547 = vmatpush.bf16.msra.mxu0 %v525
      %548 = vmatpush.bf16.msra.mxu0 %v524
      %549 = vmatpush.bf16.msra.mxu0 %v523
      %550 = vmatpush.bf16.msra.mxu0 %v522
      %551 = vmatpush.bf16.msra.mxu0 %v521
      %552 = vmatpush.bf16.msra.mxu0 %v520
      %553 = vmatpush.bf16.msra.mxu0 %v519
      %554 = vmatmul.bf16.gmra.mxu0 %v474
      %v555 = vpop.f32.mrf.mxu0
      %v556 = vadd.f32 0.0, %v555
      %v557 = vpop.f32.mrf.mxu0
      %558 = vdwg.mxu0
      %559 = vmatpush.bf16.msra.mxu0 0
      %560 = vmatpush.bf16.msra.mxu0 0
      %561 = vmatpush.bf16.msra.mxu0 0
      %562 = vmatpush.bf16.msra.mxu0 0
      %563 = vmatpush.bf16.msra.mxu0 0
      %564 = vmatpush.bf16.msra.mxu0 %v544
      %565 = vmatpush.bf16.msra.mxu0 %v528
      %566 = vmatpush.bf16.msra.mxu0 %v527
      %567 = vmatmul.bf16.gmra.mxu0 %v541
      %v568 = vpop.f32.mrf.mxu0
      %v569 = vadd.f32 %v556, %v568
      %v570 = vpop.f32.mrf.mxu0
      %571 = vdwg.mxu0
      %v572 = vadd.f32 %v471, %v569
      %573 = vst.msk [vmem:[%s182] sm:$0xff] %vm342, %v572
      %v574 = vsel %vm342, %v572, 0.0
      %v575 = vrot.slane %v574, 4
      %v576 = vadd.f32 %v574, %v575
      %v577 = vrot.slane %v576, 2
      %v578 = vadd.f32 %v576, %v577
      %v579 = vrot.slane %v578, 1
      %v580 = vadd.f32 %v578, %v579
      %v581 = vadd.f32 %v580, 0.0
      %v582 = vmul.f32 %v572, %v572
      %v583 = vsel %vm342, %v582, 0.0
      %v584 = vrot.slane %v583, 4
      %v585 = vadd.f32 %v583, %v584
      %v586 = vrot.slane %v585, 2
      %v587 = vadd.f32 %v585, %v586
      %v588 = vrot.slane %v587, 1
      %v589 = vadd.f32 %v587, %v588
      %v590 = vadd.f32 %v589, 0.0
      %s591 = scalar_lea.vmem %s176, 16
      %v592 = vld [vmem:[%s591] sm:$0xff]
      %v593 = vld [vmem:[%s591 + $0x8] sm:$0x11]
      %v596 = vunpack.c.l.b16 %v592
      %v597 = vunpack.c.h.b16 %v592
      %v598 = vunpack.c.l.b16 %v593
      %v599 = vunpack.c.h.b16 %v593
      %v600 = vpack.c.b16 %v598, %v596
      %v601 = vpack.c.b16 %v599, %v597
      %v603 = vshrl.u32 %v600, 16
      %v605 = vshll.u32 %v600, 16
      %v607 = vrot.slane %v605, 1
      %v608 = vor.u32 %v603, %v607
      %v610 = vshrl.u32 %v601, 16
      %v612 = vshll.u32 %v601, 16
      %v614 = vrot.slane %v612, 1
      %v615 = vor.u32 %v610, %v614
      %v618 = vsel %vm342, %v615, 0
      %620 = vmatpush.bf16.msra.mxu0 %v328
      %621 = vmatpush.bf16.msra.mxu0 %v327
      %622 = vmatpush.bf16.msra.mxu0 %v326
      %623 = vmatpush.bf16.msra.mxu0 %v325
      %624 = vmatpush.bf16.msra.mxu0 %v324
      %625 = vmatpush.bf16.msra.mxu0 %v323
      %626 = vmatpush.bf16.msra.mxu0 %v322
      %627 = vmatpush.bf16.msra.mxu0 %v321
      %628 = vmatmul.bf16.gmra.mxu0 %v608
      %v629 = vpop.f32.mrf.mxu0
      %v630 = vadd.f32 0.0, %v629
      %v631 = vpop.f32.mrf.mxu0
      %632 = vdwg.mxu0
      %633 = vmatpush.bf16.msra.mxu0 0
      %634 = vmatpush.bf16.msra.mxu0 0
      %635 = vmatpush.bf16.msra.mxu0 0
      %636 = vmatpush.bf16.msra.mxu0 0
      %637 = vmatpush.bf16.msra.mxu0 0
      %638 = vmatpush.bf16.msra.mxu0 %v348
      %639 = vmatpush.bf16.msra.mxu0 %v330
      %640 = vmatpush.bf16.msra.mxu0 %v329
      %641 = vmatmul.bf16.gmra.mxu0 %v618
      %v642 = vpop.f32.mrf.mxu0
      %v643 = vadd.f32 %v630, %v642
      %v644 = vpop.f32.mrf.mxu0
      %645 = vdwg.mxu0
      %v646 = vpack.c.b16 %v596, %v596
      %v647 = vpack.c.b16 %v597, %v597
      %v650 = vsel %vm342, %v647, 0
      %652 = vmatpush.bf16.msra.mxu0 %v428
      %653 = vmatpush.bf16.msra.mxu0 %v427
      %654 = vmatpush.bf16.msra.mxu0 %v426
      %655 = vmatpush.bf16.msra.mxu0 %v425
      %656 = vmatpush.bf16.msra.mxu0 %v424
      %657 = vmatpush.bf16.msra.mxu0 %v423
      %658 = vmatpush.bf16.msra.mxu0 %v422
      %659 = vmatpush.bf16.msra.mxu0 %v421
      %660 = vmatmul.bf16.gmra.mxu0 %v646
      %v661 = vpop.f32.mrf.mxu0
      %v662 = vadd.f32 %v643, %v661
      %v663 = vpop.f32.mrf.mxu0
      %664 = vdwg.mxu0
      %665 = vmatpush.bf16.msra.mxu0 0
      %666 = vmatpush.bf16.msra.mxu0 0
      %667 = vmatpush.bf16.msra.mxu0 0
      %668 = vmatpush.bf16.msra.mxu0 0
      %669 = vmatpush.bf16.msra.mxu0 0
      %670 = vmatpush.bf16.msra.mxu0 %v446
      %671 = vmatpush.bf16.msra.mxu0 %v430
      %672 = vmatpush.bf16.msra.mxu0 %v429
      %673 = vmatmul.bf16.gmra.mxu0 %v650
      %v674 = vpop.f32.mrf.mxu0
      %v675 = vadd.f32 %v662, %v674
      %v676 = vpop.f32.mrf.mxu0
      %677 = vdwg.mxu0
      %v678 = vrot.slane %v600, 1
      %v679 = vrot.slane %v601, 1
      %v682 = vsel %vm342, %v679, 0
      %684 = vmatpush.bf16.msra.mxu0 %v526
      %685 = vmatpush.bf16.msra.mxu0 %v525
      %686 = vmatpush.bf16.msra.mxu0 %v524
      %687 = vmatpush.bf16.msra.mxu0 %v523
      %688 = vmatpush.bf16.msra.mxu0 %v522
      %689 = vmatpush.bf16.msra.mxu0 %v521
      %690 = vmatpush.bf16.msra.mxu0 %v520
      %691 = vmatpush.bf16.msra.mxu0 %v519
      %692 = vmatmul.bf16.gmra.mxu0 %v678
      %v693 = vpop.f32.mrf.mxu0
      %v694 = vadd.f32 0.0, %v693
      %v695 = vpop.f32.mrf.mxu0
      %696 = vdwg.mxu0
      %697 = vmatpush.bf16.msra.mxu0 0
      %698 = vmatpush.bf16.msra.mxu0 0
      %699 = vmatpush.bf16.msra.mxu0 0
      %700 = vmatpush.bf16.msra.mxu0 0
      %701 = vmatpush.bf16.msra.mxu0 0
      %702 = vmatpush.bf16.msra.mxu0 %v544
      %703 = vmatpush.bf16.msra.mxu0 %v528
      %704 = vmatpush.bf16.msra.mxu0 %v527
      %705 = vmatmul.bf16.gmra.mxu0 %v682
      %v706 = vpop.f32.mrf.mxu0
      %v707 = vadd.f32 %v694, %v706
      %v708 = vpop.f32.mrf.mxu0
      %709 = vdwg.mxu0
      %v710 = vadd.f32 %v675, %v707
      %s711 = scalar_lea.vmem %s182, 8
      %712 = vst.msk [vmem:[%s711] sm:$0xff] %vm342, %v710
      %v713 = vsel %vm342, %v710, 0.0
      %v714 = vrot.slane %v713, 4
      %v715 = vadd.f32 %v713, %v714
      %v716 = vrot.slane %v715, 2
      %v717 = vadd.f32 %v715, %v716
      %v718 = vrot.slane %v717, 1
      %v719 = vadd.f32 %v717, %v718
      %v720 = vadd.f32 %v581, %v719
      %v721 = vmul.f32 %v710, %v710
      %v722 = vsel %vm342, %v721, 0.0
      %v723 = vrot.slane %v722, 4
      %v724 = vadd.f32 %v722, %v723
      %v725 = vrot.slane %v724, 2
      %v726 = vadd.f32 %v724, %v725
      %v727 = vrot.slane %v726, 1
      %v728 = vadd.f32 %v726, %v727
      %v729 = vadd.f32 %v590, %v728
      %s730 = scalar_lea.vmem %s176, 32
      %v731 = vld [vmem:[%s730] sm:$0xff]
      %v732 = vld [vmem:[%s730 + $0x8] sm:$0x11]
      %v735 = vunpack.c.l.b16 %v731
      %v736 = vunpack.c.h.b16 %v731
      %v737 = vunpack.c.l.b16 %v732
      %v738 = vunpack.c.h.b16 %v732
      %v739 = vpack.c.b16 %v737, %v735
      %v740 = vpack.c.b16 %v738, %v736
      %v742 = vshrl.u32 %v739, 16
      %v744 = vshll.u32 %v739, 16
      %v746 = vrot.slane %v744, 1
      %v747 = vor.u32 %v742, %v746
      %v749 = vshrl.u32 %v740, 16
      %v751 = vshll.u32 %v740, 16
      %v753 = vrot.slane %v751, 1
      %v754 = vor.u32 %v749, %v753
      %v757 = vsel %vm342, %v754, 0
      %759 = vmatpush.bf16.msra.mxu0 %v328
      %760 = vmatpush.bf16.msra.mxu0 %v327
      %761 = vmatpush.bf16.msra.mxu0 %v326
      %762 = vmatpush.bf16.msra.mxu0 %v325
      %763 = vmatpush.bf16.msra.mxu0 %v324
      %764 = vmatpush.bf16.msra.mxu0 %v323
      %765 = vmatpush.bf16.msra.mxu0 %v322
      %766 = vmatpush.bf16.msra.mxu0 %v321
      %767 = vmatmul.bf16.gmra.mxu0 %v747
      %v768 = vpop.f32.mrf.mxu0
      %v769 = vadd.f32 0.0, %v768
      %v770 = vpop.f32.mrf.mxu0
      %771 = vdwg.mxu0
      %772 = vmatpush.bf16.msra.mxu0 0
      %773 = vmatpush.bf16.msra.mxu0 0
      %774 = vmatpush.bf16.msra.mxu0 0
      %775 = vmatpush.bf16.msra.mxu0 0
      %776 = vmatpush.bf16.msra.mxu0 0
      %777 = vmatpush.bf16.msra.mxu0 %v348
      %778 = vmatpush.bf16.msra.mxu0 %v330
      %779 = vmatpush.bf16.msra.mxu0 %v329
      %780 = vmatmul.bf16.gmra.mxu0 %v757
      %v781 = vpop.f32.mrf.mxu0
      %v782 = vadd.f32 %v769, %v781
      %v783 = vpop.f32.mrf.mxu0
      %784 = vdwg.mxu0
      %v785 = vpack.c.b16 %v735, %v735
      %v786 = vpack.c.b16 %v736, %v736
      %v789 = vsel %vm342, %v786, 0
      %791 = vmatpush.bf16.msra.mxu0 %v428
      %792 = vmatpush.bf16.msra.mxu0 %v427
      %793 = vmatpush.bf16.msra.mxu0 %v426
      %794 = vmatpush.bf16.msra.mxu0 %v425
      %795 = vmatpush.bf16.msra.mxu0 %v424
      %796 = vmatpush.bf16.msra.mxu0 %v423
      %797 = vmatpush.bf16.msra.mxu0 %v422
      %798 = vmatpush.bf16.msra.mxu0 %v421
      %799 = vmatmul.bf16.gmra.mxu0 %v785
      %v800 = vpop.f32.mrf.mxu0
      %v801 = vadd.f32 %v782, %v800
      %v802 = vpop.f32.mrf.mxu0
      %803 = vdwg.mxu0
      %804 = vmatpush.bf16.msra.mxu0 0
      %805 = vmatpush.bf16.msra.mxu0 0
      %806 = vmatpush.bf16.msra.mxu0 0
      %807 = vmatpush.bf16.msra.mxu0 0
      %808 = vmatpush.bf16.msra.mxu0 0
      %809 = vmatpush.bf16.msra.mxu0 %v446
      %810 = vmatpush.bf16.msra.mxu0 %v430
      %811 = vmatpush.bf16.msra.mxu0 %v429
      %812 = vmatmul.bf16.gmra.mxu0 %v789
      %v813 = vpop.f32.mrf.mxu0
      %v814 = vadd.f32 %v801, %v813
      %v815 = vpop.f32.mrf.mxu0
      %816 = vdwg.mxu0
      %v817 = vrot.slane %v739, 1
      %v818 = vrot.slane %v740, 1
      %v821 = vsel %vm342, %v818, 0
      %823 = vmatpush.bf16.msra.mxu0 %v526
      %824 = vmatpush.bf16.msra.mxu0 %v525
      %825 = vmatpush.bf16.msra.mxu0 %v524
      %826 = vmatpush.bf16.msra.mxu0 %v523
      %827 = vmatpush.bf16.msra.mxu0 %v522
      %828 = vmatpush.bf16.msra.mxu0 %v521
      %829 = vmatpush.bf16.msra.mxu0 %v520
      %830 = vmatpush.bf16.msra.mxu0 %v519
      %831 = vmatmul.bf16.gmra.mxu0 %v817
      %v832 = vpop.f32.mrf.mxu0
      %v833 = vadd.f32 0.0, %v832
      %v834 = vpop.f32.mrf.mxu0
      %835 = vdwg.mxu0
      %836 = vmatpush.bf16.msra.mxu0 0
      %837 = vmatpush.bf16.msra.mxu0 0
      %838 = vmatpush.bf16.msra.mxu0 0
      %839 = vmatpush.bf16.msra.mxu0 0
      %840 = vmatpush.bf16.msra.mxu0 0
      %841 = vmatpush.bf16.msra.mxu0 %v544
      %842 = vmatpush.bf16.msra.mxu0 %v528
      %843 = vmatpush.bf16.msra.mxu0 %v527
      %844 = vmatmul.bf16.gmra.mxu0 %v821
      %v845 = vpop.f32.mrf.mxu0
      %v846 = vadd.f32 %v833, %v845
      %v847 = vpop.f32.mrf.mxu0
      %848 = vdwg.mxu0
      %v849 = vadd.f32 %v814, %v846
      %s850 = scalar_lea.vmem %s182, 16
      %851 = vst.msk [vmem:[%s850] sm:$0xff] %vm342, %v849
      %v852 = vsel %vm342, %v849, 0.0
      %v853 = vrot.slane %v852, 4
      %v854 = vadd.f32 %v852, %v853
      %v855 = vrot.slane %v854, 2
      %v856 = vadd.f32 %v854, %v855
      %v857 = vrot.slane %v856, 1
      %v858 = vadd.f32 %v856, %v857
      %v859 = vadd.f32 %v720, %v858
      %v860 = vmul.f32 %v849, %v849
      %v861 = vsel %vm342, %v860, 0.0
      %v862 = vrot.slane %v861, 4
      %v863 = vadd.f32 %v861, %v862
      %v864 = vrot.slane %v863, 2
      %v865 = vadd.f32 %v863, %v864
      %v866 = vrot.slane %v865, 1
      %v867 = vadd.f32 %v865, %v866
      %v868 = vadd.f32 %v729, %v867
      %s869 = scalar_lea.vmem %s176, 48
      %v870 = vld [vmem:[%s869] sm:$0xff]
      %v871 = vld [vmem:[%s869 + $0x8] sm:$0x11]
      %v874 = vunpack.c.l.b16 %v870
      %v875 = vunpack.c.h.b16 %v870
      %v876 = vunpack.c.l.b16 %v871
      %v877 = vunpack.c.h.b16 %v871
      %v878 = vpack.c.b16 %v876, %v874
      %v879 = vpack.c.b16 %v877, %v875
      %v881 = vshrl.u32 %v878, 16
      %v883 = vshll.u32 %v878, 16
      %v885 = vrot.slane %v883, 1
      %v886 = vor.u32 %v881, %v885
      %v888 = vshrl.u32 %v879, 16
      %v890 = vshll.u32 %v879, 16
      %v892 = vrot.slane %v890, 1
      %v893 = vor.u32 %v888, %v892
      %v896 = vsel %vm342, %v893, 0
      %898 = vmatpush.bf16.msra.mxu0 %v328
      %899 = vmatpush.bf16.msra.mxu0 %v327
      %900 = vmatpush.bf16.msra.mxu0 %v326
      %901 = vmatpush.bf16.msra.mxu0 %v325
      %902 = vmatpush.bf16.msra.mxu0 %v324
      %903 = vmatpush.bf16.msra.mxu0 %v323
      %904 = vmatpush.bf16.msra.mxu0 %v322
      %905 = vmatpush.bf16.msra.mxu0 %v321
      %906 = vmatmul.bf16.gmra.mxu0 %v886
      %v907 = vpop.f32.mrf.mxu0
      %v908 = vadd.f32 0.0, %v907
      %v909 = vpop.f32.mrf.mxu0
      %910 = vdwg.mxu0
      %911 = vmatpush.bf16.msra.mxu0 0
      %912 = vmatpush.bf16.msra.mxu0 0
      %913 = vmatpush.bf16.msra.mxu0 0
      %914 = vmatpush.bf16.msra.mxu0 0
      %915 = vmatpush.bf16.msra.mxu0 0
      %916 = vmatpush.bf16.msra.mxu0 %v348
      %917 = vmatpush.bf16.msra.mxu0 %v330
      %918 = vmatpush.bf16.msra.mxu0 %v329
      %919 = vmatmul.bf16.gmra.mxu0 %v896
      %v920 = vpop.f32.mrf.mxu0
      %v921 = vadd.f32 %v908, %v920
      %v922 = vpop.f32.mrf.mxu0
      %923 = vdwg.mxu0
      %v924 = vpack.c.b16 %v874, %v874
      %v925 = vpack.c.b16 %v875, %v875
      %v928 = vsel %vm342, %v925, 0
      %930 = vmatpush.bf16.msra.mxu0 %v428
      %931 = vmatpush.bf16.msra.mxu0 %v427
      %932 = vmatpush.bf16.msra.mxu0 %v426
      %933 = vmatpush.bf16.msra.mxu0 %v425
      %934 = vmatpush.bf16.msra.mxu0 %v424
      %935 = vmatpush.bf16.msra.mxu0 %v423
      %936 = vmatpush.bf16.msra.mxu0 %v422
      %937 = vmatpush.bf16.msra.mxu0 %v421
      %938 = vmatmul.bf16.gmra.mxu0 %v924
      %v939 = vpop.f32.mrf.mxu0
      %v940 = vadd.f32 %v921, %v939
      %v941 = vpop.f32.mrf.mxu0
      %942 = vdwg.mxu0
      %943 = vmatpush.bf16.msra.mxu0 0
      %944 = vmatpush.bf16.msra.mxu0 0
      %945 = vmatpush.bf16.msra.mxu0 0
      %946 = vmatpush.bf16.msra.mxu0 0
      %947 = vmatpush.bf16.msra.mxu0 0
      %948 = vmatpush.bf16.msra.mxu0 %v446
      %949 = vmatpush.bf16.msra.mxu0 %v430
      %950 = vmatpush.bf16.msra.mxu0 %v429
      %951 = vmatmul.bf16.gmra.mxu0 %v928
      %v952 = vpop.f32.mrf.mxu0
      %v953 = vadd.f32 %v940, %v952
      %v954 = vpop.f32.mrf.mxu0
      %955 = vdwg.mxu0
      %v956 = vrot.slane %v878, 1
      %v957 = vrot.slane %v879, 1
      %v960 = vsel %vm342, %v957, 0
      %962 = vmatpush.bf16.msra.mxu0 %v526
      %963 = vmatpush.bf16.msra.mxu0 %v525
      %964 = vmatpush.bf16.msra.mxu0 %v524
      %965 = vmatpush.bf16.msra.mxu0 %v523
      %966 = vmatpush.bf16.msra.mxu0 %v522
      %967 = vmatpush.bf16.msra.mxu0 %v521
      %968 = vmatpush.bf16.msra.mxu0 %v520
      %969 = vmatpush.bf16.msra.mxu0 %v519
      %970 = vmatmul.bf16.gmra.mxu0 %v956
      %v971 = vpop.f32.mrf.mxu0
      %v972 = vadd.f32 0.0, %v971
      %v973 = vpop.f32.mrf.mxu0
      %974 = vdwg.mxu0
      %975 = vmatpush.bf16.msra.mxu0 0
      %976 = vmatpush.bf16.msra.mxu0 0
      %977 = vmatpush.bf16.msra.mxu0 0
      %978 = vmatpush.bf16.msra.mxu0 0
      %979 = vmatpush.bf16.msra.mxu0 0
      %980 = vmatpush.bf16.msra.mxu0 %v544
      %981 = vmatpush.bf16.msra.mxu0 %v528
      %982 = vmatpush.bf16.msra.mxu0 %v527
      %983 = vmatmul.bf16.gmra.mxu0 %v960
      %v984 = vpop.f32.mrf.mxu0
      %v985 = vadd.f32 %v972, %v984
      %v986 = vpop.f32.mrf.mxu0
      %987 = vdwg.mxu0
      %v988 = vadd.f32 %v953, %v985
      %s989 = scalar_lea.vmem %s182, 24
      %990 = vst.msk [vmem:[%s989] sm:$0xff] %vm342, %v988
      %v991 = vsel %vm342, %v988, 0.0
      %v992 = vrot.slane %v991, 4
      %v993 = vadd.f32 %v991, %v992
      %v994 = vrot.slane %v993, 2
      %v995 = vadd.f32 %v993, %v994
      %v996 = vrot.slane %v995, 1
      %v997 = vadd.f32 %v995, %v996
      %v998 = vadd.f32 %v859, %v997
      %v999 = vmul.f32 %v988, %v988
      %v1000 = vsel %vm342, %v999, 0.0
      %v1001 = vrot.slane %v1000, 4
      %v1002 = vadd.f32 %v1000, %v1001
      %v1003 = vrot.slane %v1002, 2
      %v1004 = vadd.f32 %v1002, %v1003
      %v1005 = vrot.slane %v1004, 1
      %v1006 = vadd.f32 %v1004, %v1005
      %v1007 = vadd.f32 %v868, %v1006
      %s1008 = scalar_lea.vmem %s176, 64
      %v1009 = vld [vmem:[%s1008] sm:$0xff]
      %v1010 = vld [vmem:[%s1008 + $0x8] sm:$0x11]
      %v1013 = vunpack.c.l.b16 %v1009
      %v1014 = vunpack.c.h.b16 %v1009
      %v1015 = vunpack.c.l.b16 %v1010
      %v1016 = vunpack.c.h.b16 %v1010
      %v1017 = vpack.c.b16 %v1015, %v1013
      %v1018 = vpack.c.b16 %v1016, %v1014
      %v1020 = vshrl.u32 %v1017, 16
      %v1022 = vshll.u32 %v1017, 16
      %v1024 = vrot.slane %v1022, 1
      %v1025 = vor.u32 %v1020, %v1024
      %v1027 = vshrl.u32 %v1018, 16
      %v1029 = vshll.u32 %v1018, 16
      %v1031 = vrot.slane %v1029, 1
      %v1032 = vor.u32 %v1027, %v1031
      %v1035 = vsel %vm342, %v1032, 0
      %1037 = vmatpush.bf16.msra.mxu0 %v328
      %1038 = vmatpush.bf16.msra.mxu0 %v327
      %1039 = vmatpush.bf16.msra.mxu0 %v326
      %1040 = vmatpush.bf16.msra.mxu0 %v325
      %1041 = vmatpush.bf16.msra.mxu0 %v324
      %1042 = vmatpush.bf16.msra.mxu0 %v323
      %1043 = vmatpush.bf16.msra.mxu0 %v322
      %1044 = vmatpush.bf16.msra.mxu0 %v321
      %1045 = vmatmul.bf16.gmra.mxu0 %v1025
      %v1046 = vpop.f32.mrf.mxu0
      %v1047 = vadd.f32 0.0, %v1046
      %v1048 = vpop.f32.mrf.mxu0
      %1049 = vdwg.mxu0
      %1050 = vmatpush.bf16.msra.mxu0 0
      %1051 = vmatpush.bf16.msra.mxu0 0
      %1052 = vmatpush.bf16.msra.mxu0 0
      %1053 = vmatpush.bf16.msra.mxu0 0
      %1054 = vmatpush.bf16.msra.mxu0 0
      %1055 = vmatpush.bf16.msra.mxu0 %v348
      %1056 = vmatpush.bf16.msra.mxu0 %v330
      %1057 = vmatpush.bf16.msra.mxu0 %v329
      %1058 = vmatmul.bf16.gmra.mxu0 %v1035
      %v1059 = vpop.f32.mrf.mxu0
      %v1060 = vadd.f32 %v1047, %v1059
      %v1061 = vpop.f32.mrf.mxu0
      %1062 = vdwg.mxu0
      %v1063 = vpack.c.b16 %v1013, %v1013
      %v1064 = vpack.c.b16 %v1014, %v1014
      %v1067 = vsel %vm342, %v1064, 0
      %1069 = vmatpush.bf16.msra.mxu0 %v428
      %1070 = vmatpush.bf16.msra.mxu0 %v427
      %1071 = vmatpush.bf16.msra.mxu0 %v426
      %1072 = vmatpush.bf16.msra.mxu0 %v425
      %1073 = vmatpush.bf16.msra.mxu0 %v424
      %1074 = vmatpush.bf16.msra.mxu0 %v423
      %1075 = vmatpush.bf16.msra.mxu0 %v422
      %1076 = vmatpush.bf16.msra.mxu0 %v421
      %1077 = vmatmul.bf16.gmra.mxu0 %v1063
      %v1078 = vpop.f32.mrf.mxu0
      %v1079 = vadd.f32 %v1060, %v1078
      %v1080 = vpop.f32.mrf.mxu0
      %1081 = vdwg.mxu0
      %1082 = vmatpush.bf16.msra.mxu0 0
      %1083 = vmatpush.bf16.msra.mxu0 0
      %1084 = vmatpush.bf16.msra.mxu0 0
      %1085 = vmatpush.bf16.msra.mxu0 0
      %1086 = vmatpush.bf16.msra.mxu0 0
      %1087 = vmatpush.bf16.msra.mxu0 %v446
      %1088 = vmatpush.bf16.msra.mxu0 %v430
      %1089 = vmatpush.bf16.msra.mxu0 %v429
      %1090 = vmatmul.bf16.gmra.mxu0 %v1067
      %v1091 = vpop.f32.mrf.mxu0
      %v1092 = vadd.f32 %v1079, %v1091
      %v1093 = vpop.f32.mrf.mxu0
      %1094 = vdwg.mxu0
      %v1095 = vrot.slane %v1017, 1
      %v1096 = vrot.slane %v1018, 1
      %v1099 = vsel %vm342, %v1096, 0
      %1101 = vmatpush.bf16.msra.mxu0 %v526
      %1102 = vmatpush.bf16.msra.mxu0 %v525
      %1103 = vmatpush.bf16.msra.mxu0 %v524
      %1104 = vmatpush.bf16.msra.mxu0 %v523
      %1105 = vmatpush.bf16.msra.mxu0 %v522
      %1106 = vmatpush.bf16.msra.mxu0 %v521
      %1107 = vmatpush.bf16.msra.mxu0 %v520
      %1108 = vmatpush.bf16.msra.mxu0 %v519
      %1109 = vmatmul.bf16.gmra.mxu0 %v1095
      %v1110 = vpop.f32.mrf.mxu0
      %v1111 = vadd.f32 0.0, %v1110
      %v1112 = vpop.f32.mrf.mxu0
      %1113 = vdwg.mxu0
      %1114 = vmatpush.bf16.msra.mxu0 0
      %1115 = vmatpush.bf16.msra.mxu0 0
      %1116 = vmatpush.bf16.msra.mxu0 0
      %1117 = vmatpush.bf16.msra.mxu0 0
      %1118 = vmatpush.bf16.msra.mxu0 0
      %1119 = vmatpush.bf16.msra.mxu0 %v544
      %1120 = vmatpush.bf16.msra.mxu0 %v528
      %1121 = vmatpush.bf16.msra.mxu0 %v527
      %1122 = vmatmul.bf16.gmra.mxu0 %v1099
      %v1123 = vpop.f32.mrf.mxu0
      %v1124 = vadd.f32 %v1111, %v1123
      %v1125 = vpop.f32.mrf.mxu0
      %1126 = vdwg.mxu0
      %v1127 = vadd.f32 %v1092, %v1124
      %s1128 = scalar_lea.vmem %s182, 32
      %1129 = vst.msk [vmem:[%s1128] sm:$0xff] %vm342, %v1127
      %v1130 = vsel %vm342, %v1127, 0.0
      %v1131 = vrot.slane %v1130, 4
      %v1132 = vadd.f32 %v1130, %v1131
      %v1133 = vrot.slane %v1132, 2
      %v1134 = vadd.f32 %v1132, %v1133
      %v1135 = vrot.slane %v1134, 1
      %v1136 = vadd.f32 %v1134, %v1135
      %v1137 = vadd.f32 %v998, %v1136
      %v1138 = vmul.f32 %v1127, %v1127
      %v1139 = vsel %vm342, %v1138, 0.0
      %v1140 = vrot.slane %v1139, 4
      %v1141 = vadd.f32 %v1139, %v1140
      %v1142 = vrot.slane %v1141, 2
      %v1143 = vadd.f32 %v1141, %v1142
      %v1144 = vrot.slane %v1143, 1
      %v1145 = vadd.f32 %v1143, %v1144
      %v1146 = vadd.f32 %v1007, %v1145
      %s1147 = scalar_lea.vmem %s176, 80
      %v1148 = vld [vmem:[%s1147] sm:$0xff]
      %v1149 = vld [vmem:[%s1147 + $0x8] sm:$0x11]
      %v1152 = vunpack.c.l.b16 %v1148
      %v1153 = vunpack.c.h.b16 %v1148
      %v1154 = vunpack.c.l.b16 %v1149
      %v1155 = vunpack.c.h.b16 %v1149
      %v1156 = vpack.c.b16 %v1154, %v1152
      %v1157 = vpack.c.b16 %v1155, %v1153
      %v1159 = vshrl.u32 %v1156, 16
      %v1161 = vshll.u32 %v1156, 16
      %v1163 = vrot.slane %v1161, 1
      %v1164 = vor.u32 %v1159, %v1163
      %v1166 = vshrl.u32 %v1157, 16
      %v1168 = vshll.u32 %v1157, 16
      %v1170 = vrot.slane %v1168, 1
      %v1171 = vor.u32 %v1166, %v1170
      %v1174 = vsel %vm342, %v1171, 0
      %1176 = vmatpush.bf16.msra.mxu0 %v328
      %1177 = vmatpush.bf16.msra.mxu0 %v327
      %1178 = vmatpush.bf16.msra.mxu0 %v326
      %1179 = vmatpush.bf16.msra.mxu0 %v325
      %1180 = vmatpush.bf16.msra.mxu0 %v324
      %1181 = vmatpush.bf16.msra.mxu0 %v323
      %1182 = vmatpush.bf16.msra.mxu0 %v322
      %1183 = vmatpush.bf16.msra.mxu0 %v321
      %1184 = vmatmul.bf16.gmra.mxu0 %v1164
      %v1185 = vpop.f32.mrf.mxu0
      %v1186 = vadd.f32 0.0, %v1185
      %v1187 = vpop.f32.mrf.mxu0
      %1188 = vdwg.mxu0
      %1189 = vmatpush.bf16.msra.mxu0 0
      %1190 = vmatpush.bf16.msra.mxu0 0
      %1191 = vmatpush.bf16.msra.mxu0 0
      %1192 = vmatpush.bf16.msra.mxu0 0
      %1193 = vmatpush.bf16.msra.mxu0 0
      %1194 = vmatpush.bf16.msra.mxu0 %v348
      %1195 = vmatpush.bf16.msra.mxu0 %v330
      %1196 = vmatpush.bf16.msra.mxu0 %v329
      %1197 = vmatmul.bf16.gmra.mxu0 %v1174
      %v1198 = vpop.f32.mrf.mxu0
      %v1199 = vadd.f32 %v1186, %v1198
      %v1200 = vpop.f32.mrf.mxu0
      %1201 = vdwg.mxu0
      %v1202 = vpack.c.b16 %v1152, %v1152
      %v1203 = vpack.c.b16 %v1153, %v1153
      %v1206 = vsel %vm342, %v1203, 0
      %1208 = vmatpush.bf16.msra.mxu0 %v428
      %1209 = vmatpush.bf16.msra.mxu0 %v427
      %1210 = vmatpush.bf16.msra.mxu0 %v426
      %1211 = vmatpush.bf16.msra.mxu0 %v425
      %1212 = vmatpush.bf16.msra.mxu0 %v424
      %1213 = vmatpush.bf16.msra.mxu0 %v423
      %1214 = vmatpush.bf16.msra.mxu0 %v422
      %1215 = vmatpush.bf16.msra.mxu0 %v421
      %1216 = vmatmul.bf16.gmra.mxu0 %v1202
      %v1217 = vpop.f32.mrf.mxu0
      %v1218 = vadd.f32 %v1199, %v1217
      %v1219 = vpop.f32.mrf.mxu0
      %1220 = vdwg.mxu0
      %1221 = vmatpush.bf16.msra.mxu0 0
      %1222 = vmatpush.bf16.msra.mxu0 0
      %1223 = vmatpush.bf16.msra.mxu0 0
      %1224 = vmatpush.bf16.msra.mxu0 0
      %1225 = vmatpush.bf16.msra.mxu0 0
      %1226 = vmatpush.bf16.msra.mxu0 %v446
      %1227 = vmatpush.bf16.msra.mxu0 %v430
      %1228 = vmatpush.bf16.msra.mxu0 %v429
      %1229 = vmatmul.bf16.gmra.mxu0 %v1206
      %v1230 = vpop.f32.mrf.mxu0
      %v1231 = vadd.f32 %v1218, %v1230
      %v1232 = vpop.f32.mrf.mxu0
      %1233 = vdwg.mxu0
      %v1234 = vrot.slane %v1156, 1
      %v1235 = vrot.slane %v1157, 1
      %v1238 = vsel %vm342, %v1235, 0
      %1240 = vmatpush.bf16.msra.mxu0 %v526
      %1241 = vmatpush.bf16.msra.mxu0 %v525
      %1242 = vmatpush.bf16.msra.mxu0 %v524
      %1243 = vmatpush.bf16.msra.mxu0 %v523
      %1244 = vmatpush.bf16.msra.mxu0 %v522
      %1245 = vmatpush.bf16.msra.mxu0 %v521
      %1246 = vmatpush.bf16.msra.mxu0 %v520
      %1247 = vmatpush.bf16.msra.mxu0 %v519
      %1248 = vmatmul.bf16.gmra.mxu0 %v1234
      %v1249 = vpop.f32.mrf.mxu0
      %v1250 = vadd.f32 0.0, %v1249
      %v1251 = vpop.f32.mrf.mxu0
      %1252 = vdwg.mxu0
      %1253 = vmatpush.bf16.msra.mxu0 0
      %1254 = vmatpush.bf16.msra.mxu0 0
      %1255 = vmatpush.bf16.msra.mxu0 0
      %1256 = vmatpush.bf16.msra.mxu0 0
      %1257 = vmatpush.bf16.msra.mxu0 0
      %1258 = vmatpush.bf16.msra.mxu0 %v544
      %1259 = vmatpush.bf16.msra.mxu0 %v528
      %1260 = vmatpush.bf16.msra.mxu0 %v527
      %1261 = vmatmul.bf16.gmra.mxu0 %v1238
      %v1262 = vpop.f32.mrf.mxu0
      %v1263 = vadd.f32 %v1250, %v1262
      %v1264 = vpop.f32.mrf.mxu0
      %1265 = vdwg.mxu0
      %v1266 = vadd.f32 %v1231, %v1263
      %s1267 = scalar_lea.vmem %s182, 40
      %1268 = vst.msk [vmem:[%s1267] sm:$0xff] %vm342, %v1266
      %v1269 = vsel %vm342, %v1266, 0.0
      %v1270 = vrot.slane %v1269, 4
      %v1271 = vadd.f32 %v1269, %v1270
      %v1272 = vrot.slane %v1271, 2
      %v1273 = vadd.f32 %v1271, %v1272
      %v1274 = vrot.slane %v1273, 1
      %v1275 = vadd.f32 %v1273, %v1274
      %v1276 = vadd.f32 %v1137, %v1275
      %v1277 = vmul.f32 %v1266, %v1266
      %v1278 = vsel %vm342, %v1277, 0.0
      %v1279 = vrot.slane %v1278, 4
      %v1280 = vadd.f32 %v1278, %v1279
      %v1281 = vrot.slane %v1280, 2
      %v1282 = vadd.f32 %v1280, %v1281
      %v1283 = vrot.slane %v1282, 1
      %v1284 = vadd.f32 %v1282, %v1283
      %v1285 = vadd.f32 %v1146, %v1284
      %s1286 = scalar_lea.vmem %s176, 96
      %v1287 = vld [vmem:[%s1286] sm:$0xff]
      %v1288 = vld [vmem:[%s1286 + $0x8] sm:$0x11]
      %v1291 = vunpack.c.l.b16 %v1287
      %v1292 = vunpack.c.h.b16 %v1287
      %v1293 = vunpack.c.l.b16 %v1288
      %v1294 = vunpack.c.h.b16 %v1288
      %v1295 = vpack.c.b16 %v1293, %v1291
      %v1296 = vpack.c.b16 %v1294, %v1292
      %v1298 = vshrl.u32 %v1295, 16
      %v1300 = vshll.u32 %v1295, 16
      %v1302 = vrot.slane %v1300, 1
      %v1303 = vor.u32 %v1298, %v1302
      %v1305 = vshrl.u32 %v1296, 16
      %v1307 = vshll.u32 %v1296, 16
      %v1309 = vrot.slane %v1307, 1
      %v1310 = vor.u32 %v1305, %v1309
      %v1313 = vsel %vm342, %v1310, 0
      %1315 = vmatpush.bf16.msra.mxu0 %v328
      %1316 = vmatpush.bf16.msra.mxu0 %v327
      %1317 = vmatpush.bf16.msra.mxu0 %v326
      %1318 = vmatpush.bf16.msra.mxu0 %v325
      %1319 = vmatpush.bf16.msra.mxu0 %v324
      %1320 = vmatpush.bf16.msra.mxu0 %v323
      %1321 = vmatpush.bf16.msra.mxu0 %v322
      %1322 = vmatpush.bf16.msra.mxu0 %v321
      %1323 = vmatmul.bf16.gmra.mxu0 %v1303
      %v1324 = vpop.f32.mrf.mxu0
      %v1325 = vadd.f32 0.0, %v1324
      %v1326 = vpop.f32.mrf.mxu0
      %1327 = vdwg.mxu0
      %1328 = vmatpush.bf16.msra.mxu0 0
      %1329 = vmatpush.bf16.msra.mxu0 0
      %1330 = vmatpush.bf16.msra.mxu0 0
      %1331 = vmatpush.bf16.msra.mxu0 0
      %1332 = vmatpush.bf16.msra.mxu0 0
      %1333 = vmatpush.bf16.msra.mxu0 %v348
      %1334 = vmatpush.bf16.msra.mxu0 %v330
      %1335 = vmatpush.bf16.msra.mxu0 %v329
      %1336 = vmatmul.bf16.gmra.mxu0 %v1313
      %v1337 = vpop.f32.mrf.mxu0
      %v1338 = vadd.f32 %v1325, %v1337
      %v1339 = vpop.f32.mrf.mxu0
      %1340 = vdwg.mxu0
      %v1341 = vpack.c.b16 %v1291, %v1291
      %v1342 = vpack.c.b16 %v1292, %v1292
      %v1345 = vsel %vm342, %v1342, 0
      %1347 = vmatpush.bf16.msra.mxu0 %v428
      %1348 = vmatpush.bf16.msra.mxu0 %v427
      %1349 = vmatpush.bf16.msra.mxu0 %v426
      %1350 = vmatpush.bf16.msra.mxu0 %v425
      %1351 = vmatpush.bf16.msra.mxu0 %v424
      %1352 = vmatpush.bf16.msra.mxu0 %v423
      %1353 = vmatpush.bf16.msra.mxu0 %v422
      %1354 = vmatpush.bf16.msra.mxu0 %v421
      %1355 = vmatmul.bf16.gmra.mxu0 %v1341
      %v1356 = vpop.f32.mrf.mxu0
      %v1357 = vadd.f32 %v1338, %v1356
      %v1358 = vpop.f32.mrf.mxu0
      %1359 = vdwg.mxu0
      %1360 = vmatpush.bf16.msra.mxu0 0
      %1361 = vmatpush.bf16.msra.mxu0 0
      %1362 = vmatpush.bf16.msra.mxu0 0
      %1363 = vmatpush.bf16.msra.mxu0 0
      %1364 = vmatpush.bf16.msra.mxu0 0
      %1365 = vmatpush.bf16.msra.mxu0 %v446
      %1366 = vmatpush.bf16.msra.mxu0 %v430
      %1367 = vmatpush.bf16.msra.mxu0 %v429
      %1368 = vmatmul.bf16.gmra.mxu0 %v1345
      %v1369 = vpop.f32.mrf.mxu0
      %v1370 = vadd.f32 %v1357, %v1369
      %v1371 = vpop.f32.mrf.mxu0
      %1372 = vdwg.mxu0
      %v1373 = vrot.slane %v1295, 1
      %v1374 = vrot.slane %v1296, 1
      %v1377 = vsel %vm342, %v1374, 0
      %1379 = vmatpush.bf16.msra.mxu0 %v526
      %1380 = vmatpush.bf16.msra.mxu0 %v525
      %1381 = vmatpush.bf16.msra.mxu0 %v524
      %1382 = vmatpush.bf16.msra.mxu0 %v523
      %1383 = vmatpush.bf16.msra.mxu0 %v522
      %1384 = vmatpush.bf16.msra.mxu0 %v521
      %1385 = vmatpush.bf16.msra.mxu0 %v520
      %1386 = vmatpush.bf16.msra.mxu0 %v519
      %1387 = vmatmul.bf16.gmra.mxu0 %v1373
      %v1388 = vpop.f32.mrf.mxu0
      %v1389 = vadd.f32 0.0, %v1388
      %v1390 = vpop.f32.mrf.mxu0
      %1391 = vdwg.mxu0
      %1392 = vmatpush.bf16.msra.mxu0 0
      %1393 = vmatpush.bf16.msra.mxu0 0
      %1394 = vmatpush.bf16.msra.mxu0 0
      %1395 = vmatpush.bf16.msra.mxu0 0
      %1396 = vmatpush.bf16.msra.mxu0 0
      %1397 = vmatpush.bf16.msra.mxu0 %v544
      %1398 = vmatpush.bf16.msra.mxu0 %v528
      %1399 = vmatpush.bf16.msra.mxu0 %v527
      %1400 = vmatmul.bf16.gmra.mxu0 %v1377
      %v1401 = vpop.f32.mrf.mxu0
      %v1402 = vadd.f32 %v1389, %v1401
      %v1403 = vpop.f32.mrf.mxu0
      %1404 = vdwg.mxu0
      %v1405 = vadd.f32 %v1370, %v1402
      %s1406 = scalar_lea.vmem %s182, 48
      %1407 = vst.msk [vmem:[%s1406] sm:$0xff] %vm342, %v1405
      %v1408 = vsel %vm342, %v1405, 0.0
      %v1409 = vrot.slane %v1408, 4
      %v1410 = vadd.f32 %v1408, %v1409
      %v1411 = vrot.slane %v1410, 2
      %v1412 = vadd.f32 %v1410, %v1411
      %v1413 = vrot.slane %v1412, 1
      %v1414 = vadd.f32 %v1412, %v1413
      %v1415 = vadd.f32 %v1276, %v1414
      %v1416 = vmul.f32 %v1405, %v1405
      %v1417 = vsel %vm342, %v1416, 0.0
      %v1418 = vrot.slane %v1417, 4
      %v1419 = vadd.f32 %v1417, %v1418
      %v1420 = vrot.slane %v1419, 2
      %v1421 = vadd.f32 %v1419, %v1420
      %v1422 = vrot.slane %v1421, 1
      %v1423 = vadd.f32 %v1421, %v1422
      %v1424 = vadd.f32 %v1285, %v1423
      %s1425 = scalar_lea.vmem %s176, 112
      %v1426 = vld [vmem:[%s1425] sm:$0xff]
      %v1427 = vld [vmem:[%s1425 + $0x8] sm:$0x11]
      %v1430 = vunpack.c.l.b16 %v1426
      %v1431 = vunpack.c.h.b16 %v1426
      %v1432 = vunpack.c.l.b16 %v1427
      %v1433 = vunpack.c.h.b16 %v1427
      %v1434 = vpack.c.b16 %v1432, %v1430
      %v1435 = vpack.c.b16 %v1433, %v1431
      %v1437 = vshrl.u32 %v1434, 16
      %v1439 = vshll.u32 %v1434, 16
      %v1441 = vrot.slane %v1439, 1
      %v1442 = vor.u32 %v1437, %v1441
      %v1444 = vshrl.u32 %v1435, 16
      %v1446 = vshll.u32 %v1435, 16
      %v1448 = vrot.slane %v1446, 1
      %v1449 = vor.u32 %v1444, %v1448
      %v1452 = vsel %vm342, %v1449, 0
      %1454 = vmatpush.bf16.msra.mxu0 %v328
      %1455 = vmatpush.bf16.msra.mxu0 %v327
      %1456 = vmatpush.bf16.msra.mxu0 %v326
      %1457 = vmatpush.bf16.msra.mxu0 %v325
      %1458 = vmatpush.bf16.msra.mxu0 %v324
      %1459 = vmatpush.bf16.msra.mxu0 %v323
      %1460 = vmatpush.bf16.msra.mxu0 %v322
      %1461 = vmatpush.bf16.msra.mxu0 %v321
      %1462 = vmatmul.bf16.gmra.mxu0 %v1442
      %v1463 = vpop.f32.mrf.mxu0
      %v1464 = vadd.f32 0.0, %v1463
      %v1465 = vpop.f32.mrf.mxu0
      %1466 = vdwg.mxu0
      %1467 = vmatpush.bf16.msra.mxu0 0
      %1468 = vmatpush.bf16.msra.mxu0 0
      %1469 = vmatpush.bf16.msra.mxu0 0
      %1470 = vmatpush.bf16.msra.mxu0 0
      %1471 = vmatpush.bf16.msra.mxu0 0
      %1472 = vmatpush.bf16.msra.mxu0 %v348
      %1473 = vmatpush.bf16.msra.mxu0 %v330
      %1474 = vmatpush.bf16.msra.mxu0 %v329
      %1475 = vmatmul.bf16.gmra.mxu0 %v1452
      %v1476 = vpop.f32.mrf.mxu0
      %v1477 = vadd.f32 %v1464, %v1476
      %v1478 = vpop.f32.mrf.mxu0
      %1479 = vdwg.mxu0
      %v1480 = vpack.c.b16 %v1430, %v1430
      %v1481 = vpack.c.b16 %v1431, %v1431
      %v1484 = vsel %vm342, %v1481, 0
      %1486 = vmatpush.bf16.msra.mxu0 %v428
      %1487 = vmatpush.bf16.msra.mxu0 %v427
      %1488 = vmatpush.bf16.msra.mxu0 %v426
      %1489 = vmatpush.bf16.msra.mxu0 %v425
      %1490 = vmatpush.bf16.msra.mxu0 %v424
      %1491 = vmatpush.bf16.msra.mxu0 %v423
      %1492 = vmatpush.bf16.msra.mxu0 %v422
      %1493 = vmatpush.bf16.msra.mxu0 %v421
      %1494 = vmatmul.bf16.gmra.mxu0 %v1480
      %v1495 = vpop.f32.mrf.mxu0
      %v1496 = vadd.f32 %v1477, %v1495
      %v1497 = vpop.f32.mrf.mxu0
      %1498 = vdwg.mxu0
      %1499 = vmatpush.bf16.msra.mxu0 0
      %1500 = vmatpush.bf16.msra.mxu0 0
      %1501 = vmatpush.bf16.msra.mxu0 0
      %1502 = vmatpush.bf16.msra.mxu0 0
      %1503 = vmatpush.bf16.msra.mxu0 0
      %1504 = vmatpush.bf16.msra.mxu0 %v446
      %1505 = vmatpush.bf16.msra.mxu0 %v430
      %1506 = vmatpush.bf16.msra.mxu0 %v429
      %1507 = vmatmul.bf16.gmra.mxu0 %v1484
      %v1508 = vpop.f32.mrf.mxu0
      %v1509 = vadd.f32 %v1496, %v1508
      %v1510 = vpop.f32.mrf.mxu0
      %1511 = vdwg.mxu0
      %v1512 = vrot.slane %v1434, 1
      %v1513 = vrot.slane %v1435, 1
      %v1516 = vsel %vm342, %v1513, 0
      %1518 = vmatpush.bf16.msra.mxu0 %v526
      %1519 = vmatpush.bf16.msra.mxu0 %v525
      %1520 = vmatpush.bf16.msra.mxu0 %v524
      %1521 = vmatpush.bf16.msra.mxu0 %v523
      %1522 = vmatpush.bf16.msra.mxu0 %v522
      %1523 = vmatpush.bf16.msra.mxu0 %v521
      %1524 = vmatpush.bf16.msra.mxu0 %v520
      %1525 = vmatpush.bf16.msra.mxu0 %v519
      %1526 = vmatmul.bf16.gmra.mxu0 %v1512
      %v1527 = vpop.f32.mrf.mxu0
      %v1528 = vadd.f32 0.0, %v1527
      %v1529 = vpop.f32.mrf.mxu0
      %1530 = vdwg.mxu0
      %1531 = vmatpush.bf16.msra.mxu0 0
      %1532 = vmatpush.bf16.msra.mxu0 0
      %1533 = vmatpush.bf16.msra.mxu0 0
      %1534 = vmatpush.bf16.msra.mxu0 0
      %1535 = vmatpush.bf16.msra.mxu0 0
      %1536 = vmatpush.bf16.msra.mxu0 %v544
      %1537 = vmatpush.bf16.msra.mxu0 %v528
      %1538 = vmatpush.bf16.msra.mxu0 %v527
      %1539 = vmatmul.bf16.gmra.mxu0 %v1516
      %v1540 = vpop.f32.mrf.mxu0
      %v1541 = vadd.f32 %v1528, %v1540
      %v1542 = vpop.f32.mrf.mxu0
      %1543 = vdwg.mxu0
      %v1544 = vadd.f32 %v1509, %v1541
      %s1545 = scalar_lea.vmem %s182, 56
      %1546 = vst.msk [vmem:[%s1545] sm:$0xff] %vm342, %v1544
      %v1547 = vsel %vm342, %v1544, 0.0
      %v1548 = vrot.slane %v1547, 4
      %v1549 = vadd.f32 %v1547, %v1548
      %v1550 = vrot.slane %v1549, 2
      %v1551 = vadd.f32 %v1549, %v1550
      %v1552 = vrot.slane %v1551, 1
      %v1553 = vadd.f32 %v1551, %v1552
      %v1554 = vadd.f32 %v1415, %v1553
      %v1555 = vmul.f32 %v1544, %v1544
      %v1556 = vsel %vm342, %v1555, 0.0
      %v1557 = vrot.slane %v1556, 4
      %v1558 = vadd.f32 %v1556, %v1557
      %v1559 = vrot.slane %v1558, 2
      %v1560 = vadd.f32 %v1558, %v1559
      %v1561 = vrot.slane %v1560, 1
      %v1562 = vadd.f32 %v1560, %v1561
      %v1563 = vadd.f32 %v1424, %v1562
      %vm1564 = vcmask 1040384
      %v1565 = vsel %vm1564, %v1554, %v1563
      %vm1566 = vcmask 320512
      %1567 = vst.msk [vmem:[%s187] sm:$0x3] %vm1566, %v1565
      %s1568 = smul.u32 8, %s15
      %p1569 = scmp.lt.s32.totalorder %s1568, 15
      %s1570 = scalar_select %p1569, %s1568, 15
      %s1571 = smul.addr %s1570, 8
      %s1572 = scalar_lea.vmem %s2, %s1571
      %p1573 = scmp.lt.s32.totalorder %s15, 1
      %s1574 = scalar_select %p1573, %s15, 1
      %s1575 = smul.addr %s1574, 2
      %s1576 = scalar_lea.vmem %s3, %s1575
      // Predicated region
      $region29: #{match_predictor_forward.12} parent=27 // pred_check
        %p1577 = pneg %p80
      $region30: #{match_predictor_forward.12} parent=27 // pred_check_branch
        %1579 = sbr.rel (%p1577) target = $region32
      $region31: #{match_predictor_forward.12} parent=27 // pred_region
        %s1580 = smul.u32 8, %s15
      $region32: #{match_predictor_forward.12} parent=27 // pred_fallthru
        _
      // Predicated region
      $region33: #{match_predictor_forward.12} parent=27 // pred_check
        %p1581 = pneg %p106
      $region34: #{match_predictor_forward.12} parent=27 // pred_check_branch
        %1583 = sbr.rel (%p1581) target = $region36
      $region35: #{match_predictor_forward.12} parent=27 // pred_region
        _
      $region36: #{match_predictor_forward.12} parent=27 // pred_fallthru
        _
    $region28: #{match_predictor_forward.12} parent=5 // pred_fallthru
      _
    %p1584 = scmp.le.s32.totalorder 2, %s10
    // Predicated region
    $region37: #{match_predictor_forward.12} parent=5 // pred_check
      %p1585 = pneg %p1584
    $region38: #{match_predictor_forward.12} parent=5 // pred_check_branch
      %1587 = sbr.rel (%p1585) target = $region40
    $region39: #{match_predictor_forward.12} parent=5 // pred_region
      %s1588 = ssub.s32 %s10, 2
      // Predicated region
      $region41: #{match_predictor_forward.12} parent=39 // pred_check
        %p1589 = pneg %p86
      $region42: #{match_predictor_forward.12} parent=39 // pred_check_branch
        %1591 = sbr.rel (%p1589) target = $region44
      $region43: #{match_predictor_forward.12} parent=39 // pred_region
        %s1592 = smul.u32 8, %s16
        %p1593 = scmp.lt.s32.totalorder %s1592, 15
        %s1594 = scalar_select %p1593, %s1592, 15
        %s1595 = smul.addr %s1594, 8
        %s1596 = scalar_lea.vmem %s2, %s1595
      $region44: #{match_predictor_forward.12} parent=39 // pred_fallthru
        _
      // Predicated region
      $region45: #{match_predictor_forward.12} parent=39 // pred_check
        %p1597 = pneg %p112
      $region46: #{match_predictor_forward.12} parent=39 // pred_check_branch
        %1599 = sbr.rel (%p1597) target = $region48
      $region47: #{match_predictor_forward.12} parent=39 // pred_region
        %p1600 = scmp.lt.s32.totalorder %s16, 1
        %s1601 = scalar_select %p1600, %s16, 1
        %s1602 = smul.addr %s1601, 2
        %s1603 = scalar_lea.vmem %s3, %s1602
      $region48: #{match_predictor_forward.12} parent=39 // pred_fallthru
        _
    $region40: #{match_predictor_forward.12} parent=5 // pred_fallthru
      _
  $region6: #{match_predictor_forward.12} parent=0 // loop_footer
    %s14 = sadd.s32 1, %s10
  $region7: #{match_predictor_forward.12} parent=0 // loop_footer_branch
    %9 = sbr.rel target = $region3
  $region8: #{match_predictor_forward.12} parent=0 // loop_exit
    _

</llo_original>
